<compile_context>
chip_gen: v6e
topology: v6e:2x2x1
jax: 0.10.0
libtpu: 0.0.40
codegen_flags: <defaults>
</compile_context>

<pallas_src>
import jax
import jax.numpy as jnp
from jax import lax
from jax.experimental import pallas as pl
from jax.experimental.pallas import tpu as pltpu


def _round_up(x, m):
    return (x + m - 1) // m * m


def _conv3x1_accumulate(x2d, w_ref, acc_ref, row_shift):
    """acc[h*TW+w, :] = sum_k x[(h+k-1)*TW+w, :] @ w_ref[k]   (zero pad along h).

    x2d:       (H*TW, C)  bf16 value, flattened rows (W-major within an H row)
    w_ref:     (3, C, Co) bf16 ref (BN scale already folded in)
    acc_ref:   (H*TW, Co) f32 VMEM scratch
    row_shift: TW (one H row == TW flattened rows); static, multiple of 16, so
               every shift slice below is sublane-aligned (unmasked vst).

    Shift-after-matmul: all three dots use the full, aligned x2d operand; the
    +/-1-row shift is applied to the f32 results with static, tile-aligned
    slices accumulated into the scratch ref (no concatenates, no shifted
    activation copies).
    """
    acc_ref[...] = jnp.dot(x2d, w_ref[1], preferred_element_type=jnp.float32)
    # out[h] += x[h-1] @ w[0]   (h >= 1; h == 0 sees the conv zero-pad)
    t0 = jnp.dot(x2d, w_ref[0], preferred_element_type=jnp.float32)
    acc_ref[row_shift:, :] = acc_ref[row_shift:, :] + t0[:-row_shift]
    # out[h] += x[h+1] @ w[2]   (h <= H-2)
    t2 = jnp.dot(x2d, w_ref[2], preferred_element_type=jnp.float32)
    acc_ref[:-row_shift, :] = acc_ref[:-row_shift, :] + t2[row_shift:]


def basic_block_kernel(x_ref, w1_ref, w2_ref, b1_ref, b2_ref, o_ref, acc_ref):
    Nb, H, TW, C = x_ref.shape                 # bf16 block, TW%16==0, C%128==0
    # Unrolled loop over the batch sub-block: amortizes per-grid-step overhead
    # on small spatial stages.  The H-shift is applied per image (no bleed).
    for i in range(Nb):
        # Free relayout: TW % 16 == 0 and C % 128 == 0, so the bf16 (16,128)
        # tile order of (H,TW,C) is identical to (H*TW,C).
        x2d = x_ref[i].reshape(H * TW, C)

        # conv1 (BN1 scale folded into w1) -> + bias -> ReLU
        _conv3x1_accumulate(x2d, w1_ref, acc_ref, TW)
        y1 = jnp.maximum(acc_ref[...] + b1_ref[...], 0.0).astype(jnp.bfloat16)

        # conv2 (BN2 scale folded into w2) -> + bias -> + identity residual
        # -> ReLU -> single bf16 store (memory-bound: halves writeback bytes).
        _conv3x1_accumulate(y1, w2_ref, acc_ref, TW)
        out = acc_ref[...] + b2_ref[...] + x2d.astype(jnp.float32)
        o_ref[i] = jnp.maximum(out, 0.0).astype(jnp.bfloat16).reshape(H, TW, C)


def basic_block_pallas_nhwc(x_nhwc, w1, w2, s1, b1, s2, b2, *, stride=1,
                            tile_w=None, batch_block=None, unpad=True):
    """NHWC core.

    x_nhwc: [N,H,W,C]; w*: [kh=3, Cin, Cout]; s*/b*: [C] folded eval-mode
    BatchNorm scale/bias.  Returns bf16 [N,H,W,C] (or the padded
    [N,H,Wp,Cp] slab when unpad=False, for padding-free chaining of NHWC
    layers — the recommended production path).
    """
    assert stride == 1, "stride>1 / downsample projection path not implemented"
    N, H, W, C = x_nhwc.shape
    assert w1.shape == (3, C, C) and w2.shape == (3, C, C), \
        "identity residual needs Cin == Cout"

    # Fold BN scales into the conv output channels (one-time tiny XLA op).
    w1f = w1 * s1.reshape(1, 1, -1)
    w2f = w2 * s2.reshape(1, 1, -1)

    # Pad channels to a lane-dense multiple of 128 and W to a multiple of 16
    # (bf16 sublane packing).  Zero W columns are inert for a (3,1) conv
    # (kernel width 1 -> columns never mix); zero-padded weight/bias channels
    # keep padded output channels exactly 0 through the whole block.
    Cp = _round_up(C, 128)
    Wp = _round_up(W, 16)
    pc, pw = Cp - C, Wp - W

    xp = jnp.pad(x_nhwc, ((0, 0), (0, 0), (0, pw), (0, pc))).astype(jnp.bfloat16)
    w1p = jnp.pad(w1f, ((0, 0), (0, pc), (0, pc))).astype(jnp.bfloat16)
    w2p = jnp.pad(w2f, ((0, 0), (0, pc), (0, pc))).astype(jnp.bfloat16)
    b1p = jnp.pad(b1.reshape(1, -1), ((0, 0), (0, pc))).astype(jnp.float32)
    b2p = jnp.pad(b2.reshape(1, -1), ((0, 0), (0, pc))).astype(jnp.float32)

    # --- tiling / grid choices ---
    if batch_block is None:
        # Deep stages (7x7, 14x14): several images per grid step so a step is
        # well above the ~0.35us pipeline overhead and the MXU M dim is fed.
        batch_block = 1
        if H * Wp <= 512:
            for nb in (8, 4, 2):
                if N % nb == 0:
                    batch_block = nb
                    break
    assert N % batch_block == 0

    if tile_w is None:
        tile_w = Wp
        # Give megacore (v7x: 2 TCs) a second axis when the batch axis alone
        # cannot provide >= 2 program instances.
        if (N // batch_block) < 2 and Wp % 32 == 0:
            tile_w = Wp // 2
    assert Wp % tile_w == 0 and tile_w % 16 == 0, \
        "tile_w must be a multiple of 16 (bf16 sublane packing) dividing padded W"
    num_w_tiles = Wp // tile_w

    out_p = pl.pallas_call(
        basic_block_kernel,
        out_shape=jax.ShapeDtypeStruct((N, H, Wp, Cp), jnp.bfloat16),
        grid_spec=pltpu.PrefetchScalarGridSpec(
            num_scalar_prefetch=0,
            grid=(N // batch_block, num_w_tiles),
            in_specs=[
                pl.BlockSpec((batch_block, H, tile_w, Cp),
                             lambda n, wi: (n, 0, wi, 0)),
                pl.BlockSpec((3, Cp, Cp), lambda n, wi: (0, 0, 0)),
                pl.BlockSpec((3, Cp, Cp), lambda n, wi: (0, 0, 0)),
                pl.BlockSpec((1, Cp), lambda n, wi: (0, 0)),
                pl.BlockSpec((1, Cp), lambda n, wi: (0, 0)),
            ],
            out_specs=pl.BlockSpec((batch_block, H, tile_w, Cp),
                                   lambda n, wi: (n, 0, wi, 0)),
            scratch_shapes=[pltpu.VMEM((H * tile_w, Cp), jnp.float32)],
        ),
        compiler_params=pltpu.CompilerParams(
            # Both axes are independent -> megacore may shard either one.
            dimension_semantics=("parallel", "parallel"),
        ),
        cost_estimate=pl.CostEstimate(
            flops=12 * N * H * Wp * Cp * Cp,          # 2 convs, 3 taps each
            transcendentals=0,
            bytes_accessed=(2 * N * H * Wp * Cp * 2   # x in + out, bf16
                            + 2 * 3 * Cp * Cp * 2     # folded weights, bf16
                            + 2 * Cp * 4),            # biases, f32
        ),
    )(xp, w1p, w2p, b1p, b2p)

    if unpad and (pc or pw):
        # Extra HBM pass — NHWC pipelines should pass unpad=False and keep the
        # padded slab for the next layer instead.
        return out_p[:, :, :W, :C]
    return out_p


def basic_block_pallas_nchw(x_nchw, w1, w2, s1, b1, s2, b2, **kw):
    """PyTorch-layout (NCHW) parity adapter.  The padding slice + NHWC->NCHW
    transpose + f32 cast fuse into the single unavoidable layout copy.  In an
    NHWC end-to-end model call basic_block_pallas_nhwc(unpad=False) directly
    and drop both transposes."""
    _, C, _, W = x_nchw.shape
    x = jnp.transpose(x_nchw, (0, 2, 3, 1)).astype(jnp.float32)
    y = basic_block_pallas_nhwc(x, w1, w2, s1, b1, s2, b2, unpad=False, **kw)
    return jnp.transpose(y[:, :, :W, :C].astype(jnp.float32), (0, 3, 1, 2))


def reference_basic_block(x_nchw, w1, w2, s1, b1, s2, b2):
    """Pure-JAX reference (lax.conv, f32 HIGHEST) for validation."""
    def conv(x, w):   # w: [3, Cin, Cout] -> OIHW [Cout, Cin, 3, 1]
        w_oihw = jnp.transpose(w, (2, 1, 0))[..., None]
        return lax.conv_general_dilated(
            x, w_oihw, window_strides=(1, 1), padding=((1, 1), (0, 0)),
            dimension_numbers=("NCHW", "OIHW", "NCHW"),
            precision=lax.Precision.HIGHEST)

    def bn(x, s, b):
        return x * s.reshape(1, -1, 1, 1) + b.reshape(1, -1, 1, 1)

    out = jnp.maximum(bn(conv(x_nchw, w1), s1, b1), 0.0)
    out = bn(conv(out, w2), s2, b2)
    return jnp.maximum(out + x_nchw, 0.0)


if __name__ == "__main__":
    key = jax.random.PRNGKey(0)
    kx, k1, k2, kx2 = jax.random.split(key, 4)

    # Small shapes: batch=2, inplanes=planes=4, spatial 16x16 (stride=1).
    N, C, H, W = 2, 4, 16, 16
    x = jax.random.normal(kx, (N, C, H, W), dtype=jnp.float32)

    # Conv weights stored as [kh=3, Cin, Cout] (from PyTorch [Cout, Cin, 3, 1]).
    w1 = 0.1 * jax.random.normal(k1, (3, C, C), dtype=jnp.float32)
    w2 = 0.1 * jax.random.normal(k2, (3, C, C), dtype=jnp.float32)

    # Deterministic BatchNorm params (eval mode), folded to scale/bias.
    eps = 1e-5
    ar = jnp.arange(C, dtype=jnp.float32)
    gamma1, beta1 = 1.0 + 0.1 * ar, 0.05 * ar
    mean1, var1 = 0.02 * ar, 1.0 + 0.1 * ar
    gamma2, beta2 = 1.0 - 0.05 * ar, -0.03 * ar
    mean2, var2 = -0.01 * ar, 1.0 + 0.2 * ar
    s1 = gamma1 / jnp.sqrt(var1 + eps)
    b1 = beta1 - mean1 * s1
    s2 = gamma2 / jnp.sqrt(var2 + eps)
    b2 = beta2 - mean2 * s2

    ref = reference_basic_block(x, w1, w2, s1, b1, s2, b2)
    TOL = 5e-2   # bf16 activations / bf16 store

    # Config A: batch-blocked (Nb=2), single W tile -> grid (1, 1).
    outA = jax.block_until_ready(
        basic_block_pallas_nchw(x, w1, w2, s1, b1, s2, b2,
                                batch_block=2, tile_w=16))
    assert outA.shape == (N, C, H, W)
    errA = float(jnp.max(jnp.abs(outA - ref)))
    assert errA < TOL, f"config A max abs err {errA}"

    # Config B: per-image grid -> grid (2, 1), exercises the batch grid axis.
    outB = jax.block_until_ready(
        basic_block_pallas_nchw(x, w1, w2, s1, b1, s2, b2, batch_block=1))
    errB = float(jnp.max(jnp.abs(outB - ref)))
    assert errB < TOL, f"config B max abs err {errB}"

    # Config C: non-16-aligned spatial (deep-stage-like 14x14) -> W zero-padded
    # to 16 in the wrapper; exercises the W-pad path and default tiling.
    H2 = W2 = 14
    x2 = jax.random.normal(kx2, (N, C, H2, W2), dtype=jnp.float32)
    ref2 = reference_basic_block(x2, w1, w2, s1, b1, s2, b2)
    out2 = jax.block_until_ready(
        basic_block_pallas_nchw(x2, w1, w2, s1, b1, s2, b2))
    assert out2.shape == (N, C, H2, W2)
    err2 = float(jnp.max(jnp.abs(out2 - ref2)))
    assert err2 < TOL, f"config C max abs err {err2}"

    print("KERNEL_OK")
</pallas_src>

<mosaic_0001>
module attributes {stable_mosaic.version = 11 : i64} {
  func.func @basic_block_kernel(%arg0: i32, %arg1: i32, %arg2: memref<2x16x16x128xbf16, #tpu.memory_space<vmem>>, %arg3: memref<3x128x128xbf16, #tpu.memory_space<vmem>>, %arg4: memref<3x128x128xbf16, #tpu.memory_space<vmem>>, %arg5: memref<1x128xf32, #tpu.memory_space<vmem>>, %arg6: memref<1x128xf32, #tpu.memory_space<vmem>>, %arg7: memref<2x16x16x128xbf16, #tpu.memory_space<vmem>>, %arg8: memref<256x128xf32, #tpu.memory_space<vmem>>) attributes {dimension_semantics = [#tpu.dimension_semantics<parallel>, #tpu.dimension_semantics<parallel>], iteration_bounds = array<i64: 1, 1>, scalar_prefetch = 0 : i64, scratch_operands = 1 : i64, tpu.core_type = #tpu.core_type<tc>, window_params = [{transform_indices = @transform_0, window_bounds = array<i64: 2, 16, 16, 128>}, {pipeline_mode = #tpu.pipeline_mode<synchronous>, transform_indices = @transform_1, window_bounds = array<i64: 3, 128, 128>}, {pipeline_mode = #tpu.pipeline_mode<synchronous>, transform_indices = @transform_2, window_bounds = array<i64: 3, 128, 128>}, {pipeline_mode = #tpu.pipeline_mode<synchronous>, transform_indices = @transform_3, window_bounds = array<i64: 1, 128>}, {pipeline_mode = #tpu.pipeline_mode<synchronous>, transform_indices = @transform_4, window_bounds = array<i64: 1, 128>}, {transform_indices = @transform_5, window_bounds = array<i64: 2, 16, 16, 128>}]} {
    %c0 = arith.constant 0 : index
    %c0_0 = arith.constant 0 : index
    %c0_1 = arith.constant 0 : index
    %c0_2 = arith.constant 0 : index
    %0 = vector.load %arg2[%c0, %c0_0, %c0_1, %c0_2] : memref<2x16x16x128xbf16, #tpu.memory_space<vmem>>, vector<1x16x16x128xbf16>
    %1 = vector.shape_cast %0 : vector<1x16x16x128xbf16> to vector<16x16x128xbf16>
    %2 = vector.shape_cast %1 : vector<16x16x128xbf16> to vector<256x128xbf16>
    %c1 = arith.constant 1 : index
    %c0_3 = arith.constant 0 : index
    %c0_4 = arith.constant 0 : index
    %3 = vector.load %arg3[%c1, %c0_3, %c0_4] : memref<3x128x128xbf16, #tpu.memory_space<vmem>>, vector<1x128x128xbf16>
    %4 = vector.shape_cast %3 : vector<1x128x128xbf16> to vector<128x128xbf16>
    %cst = arith.constant dense<0.000000e+00> : vector<256x128xf32>
    %5 = tpu.matmul %2, %4, %cst {dimension_numbers = #tpu.dot_dimension_numbers<[1], [0], [0], [1], [0, 0, 1, 1], [], []>} : vector<256x128xbf16>, vector<128x128xbf16>, vector<256x128xf32> -> vector<256x128xf32>
    %c0_5 = arith.constant 0 : index
    %c0_6 = arith.constant 0 : index
    %6 = vector.load %arg8[%c0_5, %c0_6] : memref<256x128xf32, #tpu.memory_space<vmem>>, vector<256x128xf32>
    tpu.vector_store %arg8[%c0_5, %c0_6], %5 {strides = array<i32>} : memref<256x128xf32, #tpu.memory_space<vmem>>, vector<256x128xf32>,
    %c0_7 = arith.constant 0 : index
    %c0_8 = arith.constant 0 : index
    %c0_9 = arith.constant 0 : index
    %7 = vector.load %arg3[%c0_7, %c0_8, %c0_9] : memref<3x128x128xbf16, #tpu.memory_space<vmem>>, vector<1x128x128xbf16>
    %8 = vector.shape_cast %7 : vector<1x128x128xbf16> to vector<128x128xbf16>
    %cst_10 = arith.constant dense<0.000000e+00> : vector<256x128xf32>
    %9 = tpu.matmul %2, %8, %cst_10 {dimension_numbers = #tpu.dot_dimension_numbers<[1], [0], [0], [1], [0, 0, 1, 1], [], []>} : vector<256x128xbf16>, vector<128x128xbf16>, vector<256x128xf32> -> vector<256x128xf32>
    %c16 = arith.constant 16 : index
    %c0_11 = arith.constant 0 : index
    %10 = vector.load %arg8[%c16, %c0_11] : memref<256x128xf32, #tpu.memory_space<vmem>>, vector<240x128xf32>
    %11 = vector.extract_strided_slice %9 {offsets = [0, 0], sizes = [240, 128], strides = [1, 1]} : vector<256x128xf32> to vector<240x128xf32>
    %12 = arith.addf %10, %11 : vector<240x128xf32>
    %c16_12 = arith.constant 16 : index
    %c0_13 = arith.constant 0 : index
    %13 = vector.load %arg8[%c16_12, %c0_13] : memref<256x128xf32, #tpu.memory_space<vmem>>, vector<240x128xf32>
    tpu.vector_store %arg8[%c16_12, %c0_13], %12 {strides = array<i32>} : memref<256x128xf32, #tpu.memory_space<vmem>>, vector<240x128xf32>,
    %c2 = arith.constant 2 : index
    %c0_14 = arith.constant 0 : index
    %c0_15 = arith.constant 0 : index
    %14 = vector.load %arg3[%c2, %c0_14, %c0_15] : memref<3x128x128xbf16, #tpu.memory_space<vmem>>, vector<1x128x128xbf16>
    %15 = vector.shape_cast %14 : vector<1x128x128xbf16> to vector<128x128xbf16>
    %cst_16 = arith.constant dense<0.000000e+00> : vector<256x128xf32>
    %16 = tpu.matmul %2, %15, %cst_16 {dimension_numbers = #tpu.dot_dimension_numbers<[1], [0], [0], [1], [0, 0, 1, 1], [], []>} : vector<256x128xbf16>, vector<128x128xbf16>, vector<256x128xf32> -> vector<256x128xf32>
    %c0_17 = arith.constant 0 : index
    %c0_18 = arith.constant 0 : index
    %17 = vector.load %arg8[%c0_17, %c0_18] : memref<256x128xf32, #tpu.memory_space<vmem>>, vector<240x128xf32>
    %18 = vector.extract_strided_slice %16 {offsets = [16, 0], sizes = [240, 128], strides = [1, 1]} : vector<256x128xf32> to vector<240x128xf32>
    %19 = arith.addf %17, %18 : vector<240x128xf32>
    %c0_19 = arith.constant 0 : index
    %c0_20 = arith.constant 0 : index
    %20 = vector.load %arg8[%c0_19, %c0_20] : memref<256x128xf32, #tpu.memory_space<vmem>>, vector<240x128xf32>
    tpu.vector_store %arg8[%c0_19, %c0_20], %19 {strides = array<i32>} : memref<256x128xf32, #tpu.memory_space<vmem>>, vector<240x128xf32>,
    %c0_21 = arith.constant 0 : index
    %c0_22 = arith.constant 0 : index
    %21 = vector.load %arg8[%c0_21, %c0_22] : memref<256x128xf32, #tpu.memory_space<vmem>>, vector<256x128xf32>
    %c0_23 = arith.constant 0 : index
    %c0_24 = arith.constant 0 : index
    %22 = vector.load %arg5[%c0_23, %c0_24] : memref<1x128xf32, #tpu.memory_space<vmem>>, vector<1x128xf32>
    %23 = vector.broadcast %22 : vector<1x128xf32> to vector<256x128xf32>
    %24 = arith.addf %21, %23 : vector<256x128xf32>
    %cst_25 = arith.constant 0.000000e+00 : f32
    %25 = vector.broadcast %cst_25 : f32 to vector<256x128xf32>
    %26 = arith.maximumf %24, %25 : vector<256x128xf32>
    %27 = arith.truncf %26 : vector<256x128xf32> to vector<256x128xbf16>
    %c1_26 = arith.constant 1 : index
    %c0_27 = arith.constant 0 : index
    %c0_28 = arith.constant 0 : index
    %28 = vector.load %arg4[%c1_26, %c0_27, %c0_28] : memref<3x128x128xbf16, #tpu.memory_space<vmem>>, vector<1x128x128xbf16>
    %29 = vector.shape_cast %28 : vector<1x128x128xbf16> to vector<128x128xbf16>
    %cst_29 = arith.constant dense<0.000000e+00> : vector<256x128xf32>
    %30 = tpu.matmul %27, %29, %cst_29 {dimension_numbers = #tpu.dot_dimension_numbers<[1], [0], [0], [1], [0, 0, 1, 1], [], []>} : vector<256x128xbf16>, vector<128x128xbf16>, vector<256x128xf32> -> vector<256x128xf32>
    %c0_30 = arith.constant 0 : index
    %c0_31 = arith.constant 0 : index
    %31 = vector.load %arg8[%c0_30, %c0_31] : memref<256x128xf32, #tpu.memory_space<vmem>>, vector<256x128xf32>
    tpu.vector_store %arg8[%c0_30, %c0_31], %30 {strides = array<i32>} : memref<256x128xf32, #tpu.memory_space<vmem>>, vector<256x128xf32>,
    %c0_32 = arith.constant 0 : index
    %c0_33 = arith.constant 0 : index
    %c0_34 = arith.constant 0 : index
    %32 = vector.load %arg4[%c0_32, %c0_33, %c0_34] : memref<3x128x128xbf16, #tpu.memory_space<vmem>>, vector<1x128x128xbf16>
    %33 = vector.shape_cast %32 : vector<1x128x128xbf16> to vector<128x128xbf16>
    %cst_35 = arith.constant dense<0.000000e+00> : vector<256x128xf32>
    %34 = tpu.matmul %27, %33, %cst_35 {dimension_numbers = #tpu.dot_dimension_numbers<[1], [0], [0], [1], [0, 0, 1, 1], [], []>} : vector<256x128xbf16>, vector<128x128xbf16>, vector<256x128xf32> -> vector<256x128xf32>
    %c16_36 = arith.constant 16 : index
    %c0_37 = arith.constant 0 : index
    %35 = vector.load %arg8[%c16_36, %c0_37] : memref<256x128xf32, #tpu.memory_space<vmem>>, vector<240x128xf32>
    %36 = vector.extract_strided_slice %34 {offsets = [0, 0], sizes = [240, 128], strides = [1, 1]} : vector<256x128xf32> to vector<240x128xf32>
    %37 = arith.addf %35, %36 : vector<240x128xf32>
    %c16_38 = arith.constant 16 : index
    %c0_39 = arith.constant 0 : index
    %38 = vector.load %arg8[%c16_38, %c0_39] : memref<256x128xf32, #tpu.memory_space<vmem>>, vector<240x128xf32>
    tpu.vector_store %arg8[%c16_38, %c0_39], %37 {strides = array<i32>} : memref<256x128xf32, #tpu.memory_space<vmem>>, vector<240x128xf32>,
    %c2_40 = arith.constant 2 : index
    %c0_41 = arith.constant 0 : index
    %c0_42 = arith.constant 0 : index
    %39 = vector.load %arg4[%c2_40, %c0_41, %c0_42] : memref<3x128x128xbf16, #tpu.memory_space<vmem>>, vector<1x128x128xbf16>
    %40 = vector.shape_cast %39 : vector<1x128x128xbf16> to vector<128x128xbf16>
    %cst_43 = arith.constant dense<0.000000e+00> : vector<256x128xf32>
    %41 = tpu.matmul %27, %40, %cst_43 {dimension_numbers = #tpu.dot_dimension_numbers<[1], [0], [0], [1], [0, 0, 1, 1], [], []>} : vector<256x128xbf16>, vector<128x128xbf16>, vector<256x128xf32> -> vector<256x128xf32>
    %c0_44 = arith.constant 0 : index
    %c0_45 = arith.constant 0 : index
    %42 = vector.load %arg8[%c0_44, %c0_45] : memref<256x128xf32, #tpu.memory_space<vmem>>, vector<240x128xf32>
    %43 = vector.extract_strided_slice %41 {offsets = [16, 0], sizes = [240, 128], strides = [1, 1]} : vector<256x128xf32> to vector<240x128xf32>
    %44 = arith.addf %42, %43 : vector<240x128xf32>
    %c0_46 = arith.constant 0 : index
    %c0_47 = arith.constant 0 : index
    %45 = vector.load %arg8[%c0_46, %c0_47] : memref<256x128xf32, #tpu.memory_space<vmem>>, vector<240x128xf32>
    tpu.vector_store %arg8[%c0_46, %c0_47], %44 {strides = array<i32>} : memref<256x128xf32, #tpu.memory_space<vmem>>, vector<240x128xf32>,
    %c0_48 = arith.constant 0 : index
    %c0_49 = arith.constant 0 : index
    %46 = vector.load %arg8[%c0_48, %c0_49] : memref<256x128xf32, #tpu.memory_space<vmem>>, vector<256x128xf32>
    %c0_50 = arith.constant 0 : index
    %c0_51 = arith.constant 0 : index
    %47 = vector.load %arg6[%c0_50, %c0_51] : memref<1x128xf32, #tpu.memory_space<vmem>>, vector<1x128xf32>
    %48 = vector.broadcast %47 : vector<1x128xf32> to vector<256x128xf32>
    %49 = arith.addf %46, %48 : vector<256x128xf32>
    %50 = arith.extf %2 : vector<256x128xbf16> to vector<256x128xf32>
    %51 = arith.addf %49, %50 : vector<256x128xf32>
    %cst_52 = arith.constant 0.000000e+00 : f32
    %52 = vector.broadcast %cst_52 : f32 to vector<256x128xf32>
    %53 = arith.maximumf %51, %52 : vector<256x128xf32>
    %54 = arith.truncf %53 : vector<256x128xf32> to vector<256x128xbf16>
    %55 = vector.shape_cast %54 : vector<256x128xbf16> to vector<16x16x128xbf16>
    %c0_53 = arith.constant 0 : index
    %c0_54 = arith.constant 0 : index
    %c0_55 = arith.constant 0 : index
    %c0_56 = arith.constant 0 : index
    %56 = vector.load %arg7[%c0_53, %c0_54, %c0_55, %c0_56] : memref<2x16x16x128xbf16, #tpu.memory_space<vmem>>, vector<1x16x16x128xbf16>
    %57 = vector.shape_cast %56 : vector<1x16x16x128xbf16> to vector<16x16x128xbf16>
    %58 = vector.shape_cast %55 : vector<16x16x128xbf16> to vector<1x16x16x128xbf16>
    tpu.vector_store %arg7[%c0_53, %c0_54, %c0_55, %c0_56], %58 {strides = array<i32>} : memref<2x16x16x128xbf16, #tpu.memory_space<vmem>>, vector<1x16x16x128xbf16>,
    %c1_57 = arith.constant 1 : index
    %c0_58 = arith.constant 0 : index
    %c0_59 = arith.constant 0 : index
    %c0_60 = arith.constant 0 : index
    %59 = vector.load %arg2[%c1_57, %c0_58, %c0_59, %c0_60] : memref<2x16x16x128xbf16, #tpu.memory_space<vmem>>, vector<1x16x16x128xbf16>
    %60 = vector.shape_cast %59 : vector<1x16x16x128xbf16> to vector<16x16x128xbf16>
    %61 = vector.shape_cast %60 : vector<16x16x128xbf16> to vector<256x128xbf16>
    %c1_61 = arith.constant 1 : index
    %c0_62 = arith.constant 0 : index
    %c0_63 = arith.constant 0 : index
    %62 = vector.load %arg3[%c1_61, %c0_62, %c0_63] : memref<3x128x128xbf16, #tpu.memory_space<vmem>>, vector<1x128x128xbf16>
    %63 = vector.shape_cast %62 : vector<1x128x128xbf16> to vector<128x128xbf16>
    %cst_64 = arith.constant dense<0.000000e+00> : vector<256x128xf32>
    %64 = tpu.matmul %61, %63, %cst_64 {dimension_numbers = #tpu.dot_dimension_numbers<[1], [0], [0], [1], [0, 0, 1, 1], [], []>} : vector<256x128xbf16>, vector<128x128xbf16>, vector<256x128xf32> -> vector<256x128xf32>
    %c0_65 = arith.constant 0 : index
    %c0_66 = arith.constant 0 : index
    %65 = vector.load %arg8[%c0_65, %c0_66] : memref<256x128xf32, #tpu.memory_space<vmem>>, vector<256x128xf32>
    tpu.vector_store %arg8[%c0_65, %c0_66], %64 {strides = array<i32>} : memref<256x128xf32, #tpu.memory_space<vmem>>, vector<256x128xf32>,
    %c0_67 = arith.constant 0 : index
    %c0_68 = arith.constant 0 : index
    %c0_69 = arith.constant 0 : index
    %66 = vector.load %arg3[%c0_67, %c0_68, %c0_69] : memref<3x128x128xbf16, #tpu.memory_space<vmem>>, vector<1x128x128xbf16>
    %67 = vector.shape_cast %66 : vector<1x128x128xbf16> to vector<128x128xbf16>
    %cst_70 = arith.constant dense<0.000000e+00> : vector<256x128xf32>
    %68 = tpu.matmul %61, %67, %cst_70 {dimension_numbers = #tpu.dot_dimension_numbers<[1], [0], [0], [1], [0, 0, 1, 1], [], []>} : vector<256x128xbf16>, vector<128x128xbf16>, vector<256x128xf32> -> vector<256x128xf32>
    %c16_71 = arith.constant 16 : index
    %c0_72 = arith.constant 0 : index
    %69 = vector.load %arg8[%c16_71, %c0_72] : memref<256x128xf32, #tpu.memory_space<vmem>>, vector<240x128xf32>
    %70 = vector.extract_strided_slice %68 {offsets = [0, 0], sizes = [240, 128], strides = [1, 1]} : vector<256x128xf32> to vector<240x128xf32>
    %71 = arith.addf %69, %70 : vector<240x128xf32>
    %c16_73 = arith.constant 16 : index
    %c0_74 = arith.constant 0 : index
    %72 = vector.load %arg8[%c16_73, %c0_74] : memref<256x128xf32, #tpu.memory_space<vmem>>, vector<240x128xf32>
    tpu.vector_store %arg8[%c16_73, %c0_74], %71 {strides = array<i32>} : memref<256x128xf32, #tpu.memory_space<vmem>>, vector<240x128xf32>,
    %c2_75 = arith.constant 2 : index
    %c0_76 = arith.constant 0 : index
    %c0_77 = arith.constant 0 : index
    %73 = vector.load %arg3[%c2_75, %c0_76, %c0_77] : memref<3x128x128xbf16, #tpu.memory_space<vmem>>, vector<1x128x128xbf16>
    %74 = vector.shape_cast %73 : vector<1x128x128xbf16> to vector<128x128xbf16>
    %cst_78 = arith.constant dense<0.000000e+00> : vector<256x128xf32>
    %75 = tpu.matmul %61, %74, %cst_78 {dimension_numbers = #tpu.dot_dimension_numbers<[1], [0], [0], [1], [0, 0, 1, 1], [], []>} : vector<256x128xbf16>, vector<128x128xbf16>, vector<256x128xf32> -> vector<256x128xf32>
    %c0_79 = arith.constant 0 : index
    %c0_80 = arith.constant 0 : index
    %76 = vector.load %arg8[%c0_79, %c0_80] : memref<256x128xf32, #tpu.memory_space<vmem>>, vector<240x128xf32>
    %77 = vector.extract_strided_slice %75 {offsets = [16, 0], sizes = [240, 128], strides = [1, 1]} : vector<256x128xf32> to vector<240x128xf32>
    %78 = arith.addf %76, %77 : vector<240x128xf32>
    %c0_81 = arith.constant 0 : index
    %c0_82 = arith.constant 0 : index
    %79 = vector.load %arg8[%c0_81, %c0_82] : memref<256x128xf32, #tpu.memory_space<vmem>>, vector<240x128xf32>
    tpu.vector_store %arg8[%c0_81, %c0_82], %78 {strides = array<i32>} : memref<256x128xf32, #tpu.memory_space<vmem>>, vector<240x128xf32>,
    %c0_83 = arith.constant 0 : index
    %c0_84 = arith.constant 0 : index
    %80 = vector.load %arg8[%c0_83, %c0_84] : memref<256x128xf32, #tpu.memory_space<vmem>>, vector<256x128xf32>
    %c0_85 = arith.constant 0 : index
    %c0_86 = arith.constant 0 : index
    %81 = vector.load %arg5[%c0_85, %c0_86] : memref<1x128xf32, #tpu.memory_space<vmem>>, vector<1x128xf32>
    %82 = vector.broadcast %81 : vector<1x128xf32> to vector<256x128xf32>
    %83 = arith.addf %80, %82 : vector<256x128xf32>
    %cst_87 = arith.constant 0.000000e+00 : f32
    %84 = vector.broadcast %cst_87 : f32 to vector<256x128xf32>
    %85 = arith.maximumf %83, %84 : vector<256x128xf32>
    %86 = arith.truncf %85 : vector<256x128xf32> to vector<256x128xbf16>
    %c1_88 = arith.constant 1 : index
    %c0_89 = arith.constant 0 : index
    %c0_90 = arith.constant 0 : index
    %87 = vector.load %arg4[%c1_88, %c0_89, %c0_90] : memref<3x128x128xbf16, #tpu.memory_space<vmem>>, vector<1x128x128xbf16>
    %88 = vector.shape_cast %87 : vector<1x128x128xbf16> to vector<128x128xbf16>
    %cst_91 = arith.constant dense<0.000000e+00> : vector<256x128xf32>
    %89 = tpu.matmul %86, %88, %cst_91 {dimension_numbers = #tpu.dot_dimension_numbers<[1], [0], [0], [1], [0, 0, 1, 1], [], []>} : vector<256x128xbf16>, vector<128x128xbf16>, vector<256x128xf32> -> vector<256x128xf32>
    %c0_92 = arith.constant 0 : index
    %c0_93 = arith.constant 0 : index
    %90 = vector.load %arg8[%c0_92, %c0_93] : memref<256x128xf32, #tpu.memory_space<vmem>>, vector<256x128xf32>
    tpu.vector_store %arg8[%c0_92, %c0_93], %89 {strides = array<i32>} : memref<256x128xf32, #tpu.memory_space<vmem>>, vector<256x128xf32>,
    %c0_94 = arith.constant 0 : index
    %c0_95 = arith.constant 0 : index
    %c0_96 = arith.constant 0 : index
    %91 = vector.load %arg4[%c0_94, %c0_95, %c0_96] : memref<3x128x128xbf16, #tpu.memory_space<vmem>>, vector<1x128x128xbf16>
    %92 = vector.shape_cast %91 : vector<1x128x128xbf16> to vector<128x128xbf16>
    %cst_97 = arith.constant dense<0.000000e+00> : vector<256x128xf32>
    %93 = tpu.matmul %86, %92, %cst_97 {dimension_numbers = #tpu.dot_dimension_numbers<[1], [0], [0], [1], [0, 0, 1, 1], [], []>} : vector<256x128xbf16>, vector<128x128xbf16>, vector<256x128xf32> -> vector<256x128xf32>
    %c16_98 = arith.constant 16 : index
    %c0_99 = arith.constant 0 : index
    %94 = vector.load %arg8[%c16_98, %c0_99] : memref<256x128xf32, #tpu.memory_space<vmem>>, vector<240x128xf32>
    %95 = vector.extract_strided_slice %93 {offsets = [0, 0], sizes = [240, 128], strides = [1, 1]} : vector<256x128xf32> to vector<240x128xf32>
    %96 = arith.addf %94, %95 : vector<240x128xf32>
    %c16_100 = arith.constant 16 : index
    %c0_101 = arith.constant 0 : index
    %97 = vector.load %arg8[%c16_100, %c0_101] : memref<256x128xf32, #tpu.memory_space<vmem>>, vector<240x128xf32>
    tpu.vector_store %arg8[%c16_100, %c0_101], %96 {strides = array<i32>} : memref<256x128xf32, #tpu.memory_space<vmem>>, vector<240x128xf32>,
    %c2_102 = arith.constant 2 : index
    %c0_103 = arith.constant 0 : index
    %c0_104 = arith.constant 0 : index
    %98 = vector.load %arg4[%c2_102, %c0_103, %c0_104] : memref<3x128x128xbf16, #tpu.memory_space<vmem>>, vector<1x128x128xbf16>
    %99 = vector.shape_cast %98 : vector<1x128x128xbf16> to vector<128x128xbf16>
    %cst_105 = arith.constant dense<0.000000e+00> : vector<256x128xf32>
    %100 = tpu.matmul %86, %99, %cst_105 {dimension_numbers = #tpu.dot_dimension_numbers<[1], [0], [0], [1], [0, 0, 1, 1], [], []>} : vector<256x128xbf16>, vector<128x128xbf16>, vector<256x128xf32> -> vector<256x128xf32>
    %c0_106 = arith.constant 0 : index
    %c0_107 = arith.constant 0 : index
    %101 = vector.load %arg8[%c0_106, %c0_107] : memref<256x128xf32, #tpu.memory_space<vmem>>, vector<240x128xf32>
    %102 = vector.extract_strided_slice %100 {offsets = [16, 0], sizes = [240, 128], strides = [1, 1]} : vector<256x128xf32> to vector<240x128xf32>
    %103 = arith.addf %101, %102 : vector<240x128xf32>
    %c0_108 = arith.constant 0 : index
    %c0_109 = arith.constant 0 : index
    %104 = vector.load %arg8[%c0_108, %c0_109] : memref<256x128xf32, #tpu.memory_space<vmem>>, vector<240x128xf32>
    tpu.vector_store %arg8[%c0_108, %c0_109], %103 {strides = array<i32>} : memref<256x128xf32, #tpu.memory_space<vmem>>, vector<240x128xf32>,
    %c0_110 = arith.constant 0 : index
    %c0_111 = arith.constant 0 : index
    %105 = vector.load %arg8[%c0_110, %c0_111] : memref<256x128xf32, #tpu.memory_space<vmem>>, vector<256x128xf32>
    %c0_112 = arith.constant 0 : index
    %c0_113 = arith.constant 0 : index
    %106 = vector.load %arg6[%c0_112, %c0_113] : memref<1x128xf32, #tpu.memory_space<vmem>>, vector<1x128xf32>
    %107 = vector.broadcast %106 : vector<1x128xf32> to vector<256x128xf32>
    %108 = arith.addf %105, %107 : vector<256x128xf32>
    %109 = arith.extf %61 : vector<256x128xbf16> to vector<256x128xf32>
    %110 = arith.addf %108, %109 : vector<256x128xf32>
    %cst_114 = arith.constant 0.000000e+00 : f32
    %111 = vector.broadcast %cst_114 : f32 to vector<256x128xf32>
    %112 = arith.maximumf %110, %111 : vector<256x128xf32>
    %113 = arith.truncf %112 : vector<256x128xf32> to vector<256x128xbf16>
    %114 = vector.shape_cast %113 : vector<256x128xbf16> to vector<16x16x128xbf16>
    %c1_115 = arith.constant 1 : index
    %c0_116 = arith.constant 0 : index
    %c0_117 = arith.constant 0 : index
    %c0_118 = arith.constant 0 : index
    %115 = vector.load %arg7[%c1_115, %c0_116, %c0_117, %c0_118] : memref<2x16x16x128xbf16, #tpu.memory_space<vmem>>, vector<1x16x16x128xbf16>
    %116 = vector.shape_cast %115 : vector<1x16x16x128xbf16> to vector<16x16x128xbf16>
    %117 = vector.shape_cast %114 : vector<16x16x128xbf16> to vector<1x16x16x128xbf16>
    tpu.vector_store %arg7[%c1_115, %c0_116, %c0_117, %c0_118], %117 {strides = array<i32>} : memref<2x16x16x128xbf16, #tpu.memory_space<vmem>>, vector<1x16x16x128xbf16>,
    return
  }
  func.func @transform_0(%arg0: i32, %arg1: i32) -> (i32, i32, i32, i32) {
    %c0_i32 = arith.constant 0 : i32
    %c0_i32_0 = arith.constant 0 : i32
    %c0_i32_1 = arith.constant 0 : i32
    return %arg0, %c0_i32, %arg1, %c0_i32_0 : i32, i32, i32, i32
  }
  func.func @transform_1(%arg0: i32, %arg1: i32) -> (i32, i32, i32) {
    %c0_i32 = arith.constant 0 : i32
    %c0_i32_0 = arith.constant 0 : i32
    %c0_i32_1 = arith.constant 0 : i32
    %c0_i32_2 = arith.constant 0 : i32
    return %c0_i32, %c0_i32_0, %c0_i32_1 : i32, i32, i32
  }
  func.func @transform_2(%arg0: i32, %arg1: i32) -> (i32, i32, i32) {
    %c0_i32 = arith.constant 0 : i32
    %c0_i32_0 = arith.constant 0 : i32
    %c0_i32_1 = arith.constant 0 : i32
    %c0_i32_2 = arith.constant 0 : i32
    return %c0_i32, %c0_i32_0, %c0_i32_1 : i32, i32, i32
  }
  func.func @transform_3(%arg0: i32, %arg1: i32) -> (i32, i32) {
    %c0_i32 = arith.constant 0 : i32
    %c0_i32_0 = arith.constant 0 : i32
    %c0_i32_1 = arith.constant 0 : i32
    return %c0_i32, %c0_i32_0 : i32, i32
  }
  func.func @transform_4(%arg0: i32, %arg1: i32) -> (i32, i32) {
    %c0_i32 = arith.constant 0 : i32
    %c0_i32_0 = arith.constant 0 : i32
    %c0_i32_1 = arith.constant 0 : i32
    return %c0_i32, %c0_i32_0 : i32, i32
  }
  func.func @transform_5(%arg0: i32, %arg1: i32) -> (i32, i32, i32, i32) {
    %c0_i32 = arith.constant 0 : i32
    %c0_i32_0 = arith.constant 0 : i32
    %c0_i32_1 = arith.constant 0 : i32
    return %arg0, %c0_i32, %arg1, %c0_i32_0 : i32, i32, i32, i32
  }
}

</mosaic_0001>

<llo_original>
// kernel: tpu_custom_call.1
$region0: #{tpu_custom_call.1}
  #allocation0 [shape = 'u32[]', space=smem, size = 0x4, offset = 0x4, fixed_abs, tag = 'smem constant byte address 0x4 - core index']
  #allocation1 [shape = 'u32[144,128]{1,0:T(1,128)}', space=vmem, size = 0x12000, scoped, tag = 'internal scratch']
  #allocation2 [shape = 'f32[256,128]{1,0:T(8,128)}', space=vmem, size = 0x20000, scoped, tag = 'scratch operand']
  %s0 = inlined_call_operand.hbm [shape: bf16[2,16,16,128], index: 0, kind: input, shape index: {}]
  %s1 = inlined_call_operand.hbm [shape: bf16[3,128,128], index: 1, kind: input, shape index: {}]
  %s2 = inlined_call_operand.hbm [shape: bf16[3,128,128], index: 2, kind: input, shape index: {}]
  %s3 = inlined_call_operand.vmem [shape: f32[1,128], index: 3, kind: input, shape index: {}]
  %s4 = inlined_call_operand.vmem [shape: f32[1,128], index: 4, kind: input, shape index: {}]
  %s5 = inlined_call_operand.hbm [shape: bf16[2,16,16,128], index: 5, kind: output, shape index: {}]
  %s6 = sld [smem:[#allocation0]]
  $region42: #{tpu_custom_call.1} parent=0
    _
  %s8 = ssub.s32 1, %s6
  %s9 = scalar_select 0, %s8, %s6
  $region1: #{tpu_custom_call.1} parent=0
    #allocation3 [shape = 'u8[131072]{0}', space=vmem, size = 0x20000, scoped, tag = 'input window, operand 0, single buffered']
    #allocation4 [shape = 's32[1]{0}', space=sflag, size = 0x4, scoped, tag = 'scoped memory for tpu_custom_call.1']
    #allocation5 [shape = 's32[1]{0}', space=sflag, size = 0x4, scoped, tag = 'scoped memory for tpu_custom_call.1']
    #allocation6 [shape = 'u8[98304]{0}', space=vmem, size = 0x18000, scoped, tag = 'input window, operand 1, single buffered']
    #allocation7 [shape = 's32[1]{0}', space=sflag, size = 0x4, scoped, tag = 'scoped memory for tpu_custom_call.1']
    #allocation8 [shape = 'u8[98304]{0}', space=vmem, size = 0x18000, scoped, tag = 'input window, operand 2, single buffered']
    #allocation9 [shape = 'u8[131072]{0}', space=vmem, size = 0x20000, scoped, tag = 'output window, operand 0, single buffered']
    %10 = vsyncpa [#allocation4], 0
    %11 = vsyncpa [#allocation7], 0
    %12 = vsyncpa [#allocation5], 0
    // Predicated region
    $region2: #{tpu_custom_call.1} parent=1 // pred_check
      _
    $region3: #{tpu_custom_call.1} parent=1 // pred_check_branch
      %14 = sbr.rel (0) target = $region5
    $region4: #{tpu_custom_call.1} parent=1 // pred_region
      %s16 = ssub.s32 4096, 4096
      %17 = vsyncadd [#allocation4], %s16
      %s18 = sshll.u32 [#allocation3], 4
      %s19 = int_to_ptr.vmem [resolvable:$true] %s18
      %24 = dma.hbm_to_vmem [thread:$0]  %s0, 4096, %s19, [#allocation4], 64, 64, 4
    $region5: #{tpu_custom_call.1} parent=1 // pred_fallthru
      _
    // Predicated region
    $region6: #{tpu_custom_call.1} parent=1 // pred_check
      _
    $region7: #{tpu_custom_call.1} parent=1 // pred_check_branch
      %26 = sbr.rel (0) target = $region9
    $region8: #{tpu_custom_call.1} parent=1 // pred_region
      %s28 = ssub.s32 3072, 3072
      %29 = vsyncadd [#allocation7], %s28
      %s30 = sshll.u32 [#allocation6], 4
      %s31 = int_to_ptr.vmem [resolvable:$true] %s30
      %36 = dma.hbm_to_vmem [thread:$0]  %s1, 3072, %s31, [#allocation7], 64, 64, 4
    $region9: #{tpu_custom_call.1} parent=1 // pred_fallthru
      _
    // Predicated region
    $region10: #{tpu_custom_call.1} parent=1 // pred_check
      _
    $region11: #{tpu_custom_call.1} parent=1 // pred_check_branch
      %38 = sbr.rel (0) target = $region13
    $region12: #{tpu_custom_call.1} parent=1 // pred_region
      %s40 = ssub.s32 3072, 3072
      %41 = vsyncadd [#allocation7], %s40
      %s42 = sshll.u32 [#allocation8], 4
      %s43 = int_to_ptr.vmem [resolvable:$true] %s42
      %48 = dma.hbm_to_vmem [thread:$0]  %s2, 3072, %s43, [#allocation7], 64, 64, 4
    $region13: #{tpu_custom_call.1} parent=1 // pred_fallthru
      _
    // Predicated region
    $region14: #{tpu_custom_call.1} parent=1 // pred_check
      _
    $region15: #{tpu_custom_call.1} parent=1 // pred_check_branch
      %50 = sbr.rel (0) target = $region17
    $region16: #{tpu_custom_call.1} parent=1 // pred_region
      _
    $region17: #{tpu_custom_call.1} parent=1 // pred_fallthru
      _
    // Predicated region
    $region18: #{tpu_custom_call.1} parent=1 // pred_check
      _
    $region19: #{tpu_custom_call.1} parent=1 // pred_check_branch
      %52 = sbr.rel (0) target = $region21
    $region20: #{tpu_custom_call.1} parent=1 // pred_region
      _
    $region21: #{tpu_custom_call.1} parent=1 // pred_fallthru
      _
    // Predicated region
    $region22: #{tpu_custom_call.1} parent=1 // pred_check
      _
    $region23: #{tpu_custom_call.1} parent=1 // pred_check_branch
      %54 = sbr.rel (0) target = $region25
    $region24: #{tpu_custom_call.1} parent=1 // pred_region
      %55 = dma.done [#allocation4], 4096
    $region25: #{tpu_custom_call.1} parent=1 // pred_fallthru
      _
    // Predicated region
    $region26: #{tpu_custom_call.1} parent=1 // pred_check
      _
    $region27: #{tpu_custom_call.1} parent=1 // pred_check_branch
      %57 = sbr.rel (0) target = $region29
    $region28: #{tpu_custom_call.1} parent=1 // pred_region
      %58 = dma.done [#allocation7], 3072
    $region29: #{tpu_custom_call.1} parent=1 // pred_fallthru
      _
    // Predicated region
    $region30: #{tpu_custom_call.1} parent=1 // pred_check
      _
    $region31: #{tpu_custom_call.1} parent=1 // pred_check_branch
      %60 = sbr.rel (0) target = $region33
    $region32: #{tpu_custom_call.1} parent=1 // pred_region
      %61 = dma.done [#allocation7], 3072
    $region33: #{tpu_custom_call.1} parent=1 // pred_fallthru
      _
    %v63 = vld [vmem:[#allocation3] sm:$0xf]
    %v64 = vld [vmem:[#allocation3 + $0x4] sm:$0xf]
    %v65 = vld [vmem:[#allocation3 + $0x8] sm:$0xf]
    %v66 = vld [vmem:[#allocation3 + $0xc] sm:$0xf]
    %v67 = vld [vmem:[#allocation3 + $0x10] sm:$0xf]
    %v68 = vld [vmem:[#allocation3 + $0x14] sm:$0xf]
    %v69 = vld [vmem:[#allocation3 + $0x18] sm:$0xf]
    %v70 = vld [vmem:[#allocation3 + $0x1c] sm:$0xf]
    %v71 = vld [vmem:[#allocation3 + $0x20] sm:$0xf]
    %v72 = vld [vmem:[#allocation3 + $0x24] sm:$0xf]
    %v73 = vld [vmem:[#allocation3 + $0x28] sm:$0xf]
    %v74 = vld [vmem:[#allocation3 + $0x2c] sm:$0xf]
    %v75 = vld [vmem:[#allocation3 + $0x30] sm:$0xf]
    %v76 = vld [vmem:[#allocation3 + $0x34] sm:$0xf]
    %v77 = vld [vmem:[#allocation3 + $0x38] sm:$0xf]
    %v78 = vld [vmem:[#allocation3 + $0x3c] sm:$0xf]
    %v79 = vld [vmem:[#allocation3 + $0x40] sm:$0xf]
    %v80 = vld [vmem:[#allocation3 + $0x44] sm:$0xf]
    %v81 = vld [vmem:[#allocation3 + $0x48] sm:$0xf]
    %v82 = vld [vmem:[#allocation3 + $0x4c] sm:$0xf]
    %v83 = vld [vmem:[#allocation3 + $0x50] sm:$0xf]
    %v84 = vld [vmem:[#allocation3 + $0x54] sm:$0xf]
    %v85 = vld [vmem:[#allocation3 + $0x58] sm:$0xf]
    %v86 = vld [vmem:[#allocation3 + $0x5c] sm:$0xf]
    %v87 = vld [vmem:[#allocation3 + $0x60] sm:$0xf]
    %v88 = vld [vmem:[#allocation3 + $0x64] sm:$0xf]
    %v89 = vld [vmem:[#allocation3 + $0x68] sm:$0xf]
    %v90 = vld [vmem:[#allocation3 + $0x6c] sm:$0xf]
    %v91 = vld [vmem:[#allocation3 + $0x70] sm:$0xf]
    %v92 = vld [vmem:[#allocation3 + $0x74] sm:$0xf]
    %v93 = vld [vmem:[#allocation3 + $0x78] sm:$0xf]
    %v94 = vld [vmem:[#allocation3 + $0x7c] sm:$0xf]
    %s95 = scalar_lea.vmem [#allocation6], 64
    %v96 = vld [vmem:[%s95] sm:$0xf]
    %v97 = vld [vmem:[%s95 + $0x4] sm:$0xf]
    %v98 = vld [vmem:[%s95 + $0x8] sm:$0xf]
    %v99 = vld [vmem:[%s95 + $0xc] sm:$0xf]
    %v100 = vld [vmem:[%s95 + $0x10] sm:$0xf]
    %v101 = vld [vmem:[%s95 + $0x14] sm:$0xf]
    %v102 = vld [vmem:[%s95 + $0x18] sm:$0xf]
    %v103 = vld [vmem:[%s95 + $0x1c] sm:$0xf]
    %v104 = vld [vmem:[%s95 + $0x20] sm:$0xf]
    %v105 = vld [vmem:[%s95 + $0x24] sm:$0xf]
    %v106 = vld [vmem:[%s95 + $0x28] sm:$0xf]
    %v107 = vld [vmem:[%s95 + $0x2c] sm:$0xf]
    %v108 = vld [vmem:[%s95 + $0x30] sm:$0xf]
    %v109 = vld [vmem:[%s95 + $0x34] sm:$0xf]
    %v110 = vld [vmem:[%s95 + $0x38] sm:$0xf]
    %v111 = vld [vmem:[%s95 + $0x3c] sm:$0xf]
    %v144 = vunpack.c.l.b16 %v63
    %v145 = vunpack.c.l.b16 %v64
    %v146 = vunpack.c.l.b16 %v65
    %v147 = vunpack.c.l.b16 %v66
    %v148 = vunpack.c.l.b16 %v67
    %v149 = vunpack.c.l.b16 %v68
    %v150 = vunpack.c.l.b16 %v69
    %v151 = vunpack.c.l.b16 %v70
    %v152 = vunpack.c.l.b16 %v71
    %v153 = vunpack.c.l.b16 %v72
    %v154 = vunpack.c.l.b16 %v73
    %v155 = vunpack.c.l.b16 %v74
    %v156 = vunpack.c.l.b16 %v75
    %v157 = vunpack.c.l.b16 %v76
    %v158 = vunpack.c.l.b16 %v77
    %v159 = vunpack.c.l.b16 %v78
    %v160 = vunpack.c.l.b16 %v79
    %v161 = vunpack.c.l.b16 %v80
    %v162 = vunpack.c.l.b16 %v81
    %v163 = vunpack.c.l.b16 %v82
    %v164 = vunpack.c.l.b16 %v83
    %v165 = vunpack.c.l.b16 %v84
    %v166 = vunpack.c.l.b16 %v85
    %v167 = vunpack.c.l.b16 %v86
    %v168 = vunpack.c.l.b16 %v87
    %v169 = vunpack.c.l.b16 %v88
    %v170 = vunpack.c.l.b16 %v89
    %v171 = vunpack.c.l.b16 %v90
    %v172 = vunpack.c.l.b16 %v91
    %v173 = vunpack.c.l.b16 %v92
    %v174 = vunpack.c.l.b16 %v93
    %v175 = vunpack.c.l.b16 %v94
    %v176 = vpack.c.b16 %v145, %v144
    %v177 = vpack.c.b16 %v147, %v146
    %v178 = vpack.c.b16 %v149, %v148
    %v179 = vpack.c.b16 %v151, %v150
    %v180 = vpack.c.b16 %v153, %v152
    %v181 = vpack.c.b16 %v155, %v154
    %v182 = vpack.c.b16 %v157, %v156
    %v183 = vpack.c.b16 %v159, %v158
    %v184 = vpack.c.b16 %v161, %v160
    %v185 = vpack.c.b16 %v163, %v162
    %v186 = vpack.c.b16 %v165, %v164
    %v187 = vpack.c.b16 %v167, %v166
    %v188 = vpack.c.b16 %v169, %v168
    %v189 = vpack.c.b16 %v171, %v170
    %v190 = vpack.c.b16 %v173, %v172
    %v191 = vpack.c.b16 %v175, %v174
    %v224 = vunpack.c.l.b16 %v96
    %v225 = vunpack.c.l.b16 %v97
    %v226 = vunpack.c.l.b16 %v98
    %v227 = vunpack.c.l.b16 %v99
    %v228 = vunpack.c.l.b16 %v100
    %v229 = vunpack.c.l.b16 %v101
    %v230 = vunpack.c.l.b16 %v102
    %v231 = vunpack.c.l.b16 %v103
    %v232 = vunpack.c.l.b16 %v104
    %v233 = vunpack.c.l.b16 %v105
    %v234 = vunpack.c.l.b16 %v106
    %v235 = vunpack.c.l.b16 %v107
    %v236 = vunpack.c.l.b16 %v108
    %v237 = vunpack.c.l.b16 %v109
    %v238 = vunpack.c.l.b16 %v110
    %v239 = vunpack.c.l.b16 %v111
    %v240 = vpack.c.b16 %v225, %v224
    %v241 = vpack.c.b16 %v227, %v226
    %v242 = vpack.c.b16 %v229, %v228
    %v243 = vpack.c.b16 %v231, %v230
    %v244 = vpack.c.b16 %v233, %v232
    %v245 = vpack.c.b16 %v235, %v234
    %v246 = vpack.c.b16 %v237, %v236
    %v247 = vpack.c.b16 %v239, %v238
    %256 = vmatprep.subr.bf16.mxu0 0
    %257 = vmatpush1.bf16.msra.mxu0 %v247
    %258 = vmatprep.subr.bf16.mxu0 0
    %259 = vmatpush1.bf16.msra.mxu0 %v246
    %260 = vmatprep.subr.bf16.mxu0 0
    %261 = vmatpush1.bf16.msra.mxu0 %v245
    %262 = vmatprep.subr.bf16.mxu0 0
    %263 = vmatpush1.bf16.msra.mxu0 %v244
    %264 = vmatprep.subr.bf16.mxu0 0
    %265 = vmatpush1.bf16.msra.mxu0 %v243
    %266 = vmatprep.subr.bf16.mxu0 0
    %267 = vmatpush1.bf16.msra.mxu0 %v242
    %268 = vmatprep.subr.bf16.mxu0 0
    %269 = vmatpush1.bf16.msra.mxu0 %v241
    %270 = vmatprep.subr.bf16.mxu0 0
    %271 = vmatpush1.bf16.msra.mxu0 %v240
    %272 = vmatprep.subr.bf16.mxu0 0
    %273 = vmatpush2.bf16.msra.mxu0 0
    %274 = vmatprep.subr.bf16.mxu0 0
    %275 = vmatpush2.bf16.msra.mxu0 0
    %276 = vmatprep.subr.bf16.mxu0 0
    %277 = vmatpush2.bf16.msra.mxu0 0
    %278 = vmatprep.subr.bf16.mxu0 0
    %279 = vmatpush2.bf16.msra.mxu0 0
    %280 = vmatprep.subr.bf16.mxu0 0
    %281 = vmatpush2.bf16.msra.mxu0 0
    %282 = vmatprep.subr.bf16.mxu0 0
    %283 = vmatpush2.bf16.msra.mxu0 0
    %284 = vmatprep.subr.bf16.mxu0 0
    %285 = vmatpush2.bf16.msra.mxu0 0
    %286 = vmatprep.subr.bf16.mxu0 0
    %287 = vmatpush2.bf16.msra.mxu0 0
    %288 = vmatprep.mubr.bf16.mxu0 0
    %289 = vmatmul.mubr.bf16.gmra.mxu0 %v176
    %v290 = vpop.f32.mrf.mxu0
    %v291 = vadd.f32 0.0, %v290
    %v292 = vpop.f32.mrf.mxu0
    %v293 = vpop.f32.mrf.mxu0
    %v294 = vadd.f32 0.0, %v293
    %v295 = vpop.f32.mrf.mxu0
    %296 = vmatprep.mubr.bf16.mxu0 0
    %297 = vmatmul.mubr.bf16.gmra.mxu0 %v177
    %v298 = vpop.f32.mrf.mxu0
    %v299 = vadd.f32 0.0, %v298
    %v300 = vpop.f32.mrf.mxu0
    %v301 = vpop.f32.mrf.mxu0
    %v302 = vadd.f32 0.0, %v301
    %v303 = vpop.f32.mrf.mxu0
    %304 = vmatprep.mubr.bf16.mxu0 0
    %305 = vmatmul.mubr.bf16.gmra.mxu0 %v178
    %v306 = vpop.f32.mrf.mxu0
    %v307 = vadd.f32 0.0, %v306
    %v308 = vpop.f32.mrf.mxu0
    %v309 = vpop.f32.mrf.mxu0
    %v310 = vadd.f32 0.0, %v309
    %v311 = vpop.f32.mrf.mxu0
    %312 = vmatprep.mubr.bf16.mxu0 0
    %313 = vmatmul.mubr.bf16.gmra.mxu0 %v179
    %v314 = vpop.f32.mrf.mxu0
    %v315 = vadd.f32 0.0, %v314
    %v316 = vpop.f32.mrf.mxu0
    %v317 = vpop.f32.mrf.mxu0
    %v318 = vadd.f32 0.0, %v317
    %v319 = vpop.f32.mrf.mxu0
    %320 = vmatprep.mubr.bf16.mxu0 0
    %321 = vmatmul.mubr.bf16.gmra.mxu0 %v180
    %v322 = vpop.f32.mrf.mxu0
    %v323 = vadd.f32 0.0, %v322
    %v324 = vpop.f32.mrf.mxu0
    %v325 = vpop.f32.mrf.mxu0
    %v326 = vadd.f32 0.0, %v325
    %v327 = vpop.f32.mrf.mxu0
    %328 = vmatprep.mubr.bf16.mxu0 0
    %329 = vmatmul.mubr.bf16.gmra.mxu0 %v181
    %v330 = vpop.f32.mrf.mxu0
    %v331 = vadd.f32 0.0, %v330
    %v332 = vpop.f32.mrf.mxu0
    %v333 = vpop.f32.mrf.mxu0
    %v334 = vadd.f32 0.0, %v333
    %v335 = vpop.f32.mrf.mxu0
    %336 = vmatprep.mubr.bf16.mxu0 0
    %337 = vmatmul.mubr.bf16.gmra.mxu0 %v182
    %v338 = vpop.f32.mrf.mxu0
    %v339 = vadd.f32 0.0, %v338
    %v340 = vpop.f32.mrf.mxu0
    %v341 = vpop.f32.mrf.mxu0
    %v342 = vadd.f32 0.0, %v341
    %v343 = vpop.f32.mrf.mxu0
    %344 = vmatprep.mubr.bf16.mxu0 0
    %345 = vmatmul.mubr.bf16.gmra.mxu0 %v183
    %v346 = vpop.f32.mrf.mxu0
    %v347 = vadd.f32 0.0, %v346
    %v348 = vpop.f32.mrf.mxu0
    %v349 = vpop.f32.mrf.mxu0
    %v350 = vadd.f32 0.0, %v349
    %v351 = vpop.f32.mrf.mxu0
    %352 = vmatprep.mubr.bf16.mxu0 0
    %353 = vmatmul.mubr.bf16.gmra.mxu0 %v184
    %v354 = vpop.f32.mrf.mxu0
    %v355 = vadd.f32 0.0, %v354
    %v356 = vpop.f32.mrf.mxu0
    %v357 = vpop.f32.mrf.mxu0
    %v358 = vadd.f32 0.0, %v357
    %v359 = vpop.f32.mrf.mxu0
    %360 = vmatprep.mubr.bf16.mxu0 0
    %361 = vmatmul.mubr.bf16.gmra.mxu0 %v185
    %v362 = vpop.f32.mrf.mxu0
    %v363 = vadd.f32 0.0, %v362
    %v364 = vpop.f32.mrf.mxu0
    %v365 = vpop.f32.mrf.mxu0
    %v366 = vadd.f32 0.0, %v365
    %v367 = vpop.f32.mrf.mxu0
    %368 = vmatprep.mubr.bf16.mxu0 0
    %369 = vmatmul.mubr.bf16.gmra.mxu0 %v186
    %v370 = vpop.f32.mrf.mxu0
    %v371 = vadd.f32 0.0, %v370
    %v372 = vpop.f32.mrf.mxu0
    %v373 = vpop.f32.mrf.mxu0
    %v374 = vadd.f32 0.0, %v373
    %v375 = vpop.f32.mrf.mxu0
    %376 = vmatprep.mubr.bf16.mxu0 0
    %377 = vmatmul.mubr.bf16.gmra.mxu0 %v187
    %v378 = vpop.f32.mrf.mxu0
    %v379 = vadd.f32 0.0, %v378
    %v380 = vpop.f32.mrf.mxu0
    %v381 = vpop.f32.mrf.mxu0
    %v382 = vadd.f32 0.0, %v381
    %v383 = vpop.f32.mrf.mxu0
    %384 = vmatprep.mubr.bf16.mxu0 0
    %385 = vmatmul.mubr.bf16.gmra.mxu0 %v188
    %v386 = vpop.f32.mrf.mxu0
    %v387 = vadd.f32 0.0, %v386
    %v388 = vpop.f32.mrf.mxu0
    %v389 = vpop.f32.mrf.mxu0
    %v390 = vadd.f32 0.0, %v389
    %v391 = vpop.f32.mrf.mxu0
    %392 = vmatprep.mubr.bf16.mxu0 0
    %393 = vmatmul.mubr.bf16.gmra.mxu0 %v189
    %v394 = vpop.f32.mrf.mxu0
    %v395 = vadd.f32 0.0, %v394
    %v396 = vpop.f32.mrf.mxu0
    %v397 = vpop.f32.mrf.mxu0
    %v398 = vadd.f32 0.0, %v397
    %v399 = vpop.f32.mrf.mxu0
    %400 = vmatprep.mubr.bf16.mxu0 0
    %401 = vmatmul.mubr.bf16.gmra.mxu0 %v190
    %v402 = vpop.f32.mrf.mxu0
    %v403 = vadd.f32 0.0, %v402
    %v404 = vpop.f32.mrf.mxu0
    %v405 = vpop.f32.mrf.mxu0
    %v406 = vadd.f32 0.0, %v405
    %v407 = vpop.f32.mrf.mxu0
    %408 = vmatprep.mubr.bf16.mxu0 0
    %409 = vmatmul.mubr.bf16.gmra.mxu0 %v191
    %v410 = vpop.f32.mrf.mxu0
    %v411 = vadd.f32 0.0, %v410
    %v412 = vpop.f32.mrf.mxu0
    %v413 = vpop.f32.mrf.mxu0
    %v414 = vadd.f32 0.0, %v413
    %v415 = vpop.f32.mrf.mxu0
    %416 = vdwg.mxu0
    %417 = vst [vmem:[#allocation2] sm:$0xff] %v291
    %418 = vst [vmem:[#allocation2 + $0x8] sm:$0xff] %v294
    %419 = vst [vmem:[#allocation2 + $0x10] sm:$0xff] %v299
    %420 = vst [vmem:[#allocation2 + $0x18] sm:$0xff] %v302
    %421 = vst [vmem:[#allocation2 + $0x20] sm:$0xff] %v307
    %422 = vst [vmem:[#allocation2 + $0x28] sm:$0xff] %v310
    %423 = vst [vmem:[#allocation2 + $0x30] sm:$0xff] %v315
    %424 = vst [vmem:[#allocation2 + $0x38] sm:$0xff] %v318
    %425 = vst [vmem:[#allocation2 + $0x40] sm:$0xff] %v323
    %426 = vst [vmem:[#allocation2 + $0x48] sm:$0xff] %v326
    %427 = vst [vmem:[#allocation2 + $0x50] sm:$0xff] %v331
    %428 = vst [vmem:[#allocation2 + $0x58] sm:$0xff] %v334
    %429 = vst [vmem:[#allocation2 + $0x60] sm:$0xff] %v339
    %430 = vst [vmem:[#allocation2 + $0x68] sm:$0xff] %v342
    %431 = vst [vmem:[#allocation2 + $0x70] sm:$0xff] %v347
    %432 = vst [vmem:[#allocation2 + $0x78] sm:$0xff] %v350
    %433 = vst [vmem:[#allocation2 + $0x80] sm:$0xff] %v355
    %434 = vst [vmem:[#allocation2 + $0x88] sm:$0xff] %v358
    %435 = vst [vmem:[#allocation2 + $0x90] sm:$0xff] %v363
    %436 = vst [vmem:[#allocation2 + $0x98] sm:$0xff] %v366
    %437 = vst [vmem:[#allocation2 + $0xa0] sm:$0xff] %v371
    %438 = vst [vmem:[#allocation2 + $0xa8] sm:$0xff] %v374
    %439 = vst [vmem:[#allocation2 + $0xb0] sm:$0xff] %v379
    %440 = vst [vmem:[#allocation2 + $0xb8] sm:$0xff] %v382
    %441 = vst [vmem:[#allocation2 + $0xc0] sm:$0xff] %v387
    %442 = vst [vmem:[#allocation2 + $0xc8] sm:$0xff] %v390
    %443 = vst [vmem:[#allocation2 + $0xd0] sm:$0xff] %v395
    %444 = vst [vmem:[#allocation2 + $0xd8] sm:$0xff] %v398
    %445 = vst [vmem:[#allocation2 + $0xe0] sm:$0xff] %v403
    %446 = vst [vmem:[#allocation2 + $0xe8] sm:$0xff] %v406
    %447 = vst [vmem:[#allocation2 + $0xf0] sm:$0xff] %v411
    %448 = vst [vmem:[#allocation2 + $0xf8] sm:$0xff] %v414
    %v449 = vld [vmem:[#allocation6] sm:$0xf]
    %v450 = vld [vmem:[#allocation6 + $0x4] sm:$0xf]
    %v451 = vld [vmem:[#allocation6 + $0x8] sm:$0xf]
    %v452 = vld [vmem:[#allocation6 + $0xc] sm:$0xf]
    %v453 = vld [vmem:[#allocation6 + $0x10] sm:$0xf]
    %v454 = vld [vmem:[#allocation6 + $0x14] sm:$0xf]
    %v455 = vld [vmem:[#allocation6 + $0x18] sm:$0xf]
    %v456 = vld [vmem:[#allocation6 + $0x1c] sm:$0xf]
    %v457 = vld [vmem:[#allocation6 + $0x20] sm:$0xf]
    %v458 = vld [vmem:[#allocation6 + $0x24] sm:$0xf]
    %v459 = vld [vmem:[#allocation6 + $0x28] sm:$0xf]
    %v460 = vld [vmem:[#allocation6 + $0x2c] sm:$0xf]
    %v461 = vld [vmem:[#allocation6 + $0x30] sm:$0xf]
    %v462 = vld [vmem:[#allocation6 + $0x34] sm:$0xf]
    %v463 = vld [vmem:[#allocation6 + $0x38] sm:$0xf]
    %v464 = vld [vmem:[#allocation6 + $0x3c] sm:$0xf]
    %v481 = vunpack.c.l.b16 %v449
    %v482 = vunpack.c.l.b16 %v450
    %v483 = vunpack.c.l.b16 %v451
    %v484 = vunpack.c.l.b16 %v452
    %v485 = vunpack.c.l.b16 %v453
    %v486 = vunpack.c.l.b16 %v454
    %v487 = vunpack.c.l.b16 %v455
    %v488 = vunpack.c.l.b16 %v456
    %v489 = vunpack.c.l.b16 %v457
    %v490 = vunpack.c.l.b16 %v458
    %v491 = vunpack.c.l.b16 %v459
    %v492 = vunpack.c.l.b16 %v460
    %v493 = vunpack.c.l.b16 %v461
    %v494 = vunpack.c.l.b16 %v462
    %v495 = vunpack.c.l.b16 %v463
    %v496 = vunpack.c.l.b16 %v464
    %v497 = vpack.c.b16 %v482, %v481
    %v498 = vpack.c.b16 %v484, %v483
    %v499 = vpack.c.b16 %v486, %v485
    %v500 = vpack.c.b16 %v488, %v487
    %v501 = vpack.c.b16 %v490, %v489
    %v502 = vpack.c.b16 %v492, %v491
    %v503 = vpack.c.b16 %v494, %v493
    %v504 = vpack.c.b16 %v496, %v495
    %513 = vmatprep.subr.bf16.mxu0 0
    %514 = vmatpush1.bf16.msra.mxu0 %v504
    %515 = vmatprep.subr.bf16.mxu0 0
    %516 = vmatpush1.bf16.msra.mxu0 %v503
    %517 = vmatprep.subr.bf16.mxu0 0
    %518 = vmatpush1.bf16.msra.mxu0 %v502
    %519 = vmatprep.subr.bf16.mxu0 0
    %520 = vmatpush1.bf16.msra.mxu0 %v501
    %521 = vmatprep.subr.bf16.mxu0 0
    %522 = vmatpush1.bf16.msra.mxu0 %v500
    %523 = vmatprep.subr.bf16.mxu0 0
    %524 = vmatpush1.bf16.msra.mxu0 %v499
    %525 = vmatprep.subr.bf16.mxu0 0
    %526 = vmatpush1.bf16.msra.mxu0 %v498
    %527 = vmatprep.subr.bf16.mxu0 0
    %528 = vmatpush1.bf16.msra.mxu0 %v497
    %529 = vmatprep.subr.bf16.mxu0 0
    %530 = vmatpush2.bf16.msra.mxu0 0
    %531 = vmatprep.subr.bf16.mxu0 0
    %532 = vmatpush2.bf16.msra.mxu0 0
    %533 = vmatprep.subr.bf16.mxu0 0
    %534 = vmatpush2.bf16.msra.mxu0 0
    %535 = vmatprep.subr.bf16.mxu0 0
    %536 = vmatpush2.bf16.msra.mxu0 0
    %537 = vmatprep.subr.bf16.mxu0 0
    %538 = vmatpush2.bf16.msra.mxu0 0
    %539 = vmatprep.subr.bf16.mxu0 0
    %540 = vmatpush2.bf16.msra.mxu0 0
    %541 = vmatprep.subr.bf16.mxu0 0
    %542 = vmatpush2.bf16.msra.mxu0 0
    %543 = vmatprep.subr.bf16.mxu0 0
    %544 = vmatpush2.bf16.msra.mxu0 0
    %545 = vmatprep.mubr.bf16.mxu0 0
    %546 = vmatmul.mubr.bf16.gmra.mxu0 %v176
    %v547 = vpop.f32.mrf.mxu0
    %v548 = vadd.f32 0.0, %v547
    %v549 = vpop.f32.mrf.mxu0
    %v550 = vpop.f32.mrf.mxu0
    %v551 = vadd.f32 0.0, %v550
    %v552 = vpop.f32.mrf.mxu0
    %553 = vmatprep.mubr.bf16.mxu0 0
    %554 = vmatmul.mubr.bf16.gmra.mxu0 %v177
    %v555 = vpop.f32.mrf.mxu0
    %v556 = vadd.f32 0.0, %v555
    %v557 = vpop.f32.mrf.mxu0
    %v558 = vpop.f32.mrf.mxu0
    %v559 = vadd.f32 0.0, %v558
    %v560 = vpop.f32.mrf.mxu0
    %561 = vmatprep.mubr.bf16.mxu0 0
    %562 = vmatmul.mubr.bf16.gmra.mxu0 %v178
    %v563 = vpop.f32.mrf.mxu0
    %v564 = vadd.f32 0.0, %v563
    %v565 = vpop.f32.mrf.mxu0
    %v566 = vpop.f32.mrf.mxu0
    %v567 = vadd.f32 0.0, %v566
    %v568 = vpop.f32.mrf.mxu0
    %569 = vmatprep.mubr.bf16.mxu0 0
    %570 = vmatmul.mubr.bf16.gmra.mxu0 %v179
    %v571 = vpop.f32.mrf.mxu0
    %v572 = vadd.f32 0.0, %v571
    %v573 = vpop.f32.mrf.mxu0
    %v574 = vpop.f32.mrf.mxu0
    %v575 = vadd.f32 0.0, %v574
    %v576 = vpop.f32.mrf.mxu0
    %577 = vmatprep.mubr.bf16.mxu0 0
    %578 = vmatmul.mubr.bf16.gmra.mxu0 %v180
    %v579 = vpop.f32.mrf.mxu0
    %v580 = vadd.f32 0.0, %v579
    %v581 = vpop.f32.mrf.mxu0
    %v582 = vpop.f32.mrf.mxu0
    %v583 = vadd.f32 0.0, %v582
    %v584 = vpop.f32.mrf.mxu0
    %585 = vmatprep.mubr.bf16.mxu0 0
    %586 = vmatmul.mubr.bf16.gmra.mxu0 %v181
    %v587 = vpop.f32.mrf.mxu0
    %v588 = vadd.f32 0.0, %v587
    %v589 = vpop.f32.mrf.mxu0
    %v590 = vpop.f32.mrf.mxu0
    %v591 = vadd.f32 0.0, %v590
    %v592 = vpop.f32.mrf.mxu0
    %593 = vmatprep.mubr.bf16.mxu0 0
    %594 = vmatmul.mubr.bf16.gmra.mxu0 %v182
    %v595 = vpop.f32.mrf.mxu0
    %v596 = vadd.f32 0.0, %v595
    %v597 = vpop.f32.mrf.mxu0
    %v598 = vpop.f32.mrf.mxu0
    %v599 = vadd.f32 0.0, %v598
    %v600 = vpop.f32.mrf.mxu0
    %601 = vmatprep.mubr.bf16.mxu0 0
    %602 = vmatmul.mubr.bf16.gmra.mxu0 %v183
    %v603 = vpop.f32.mrf.mxu0
    %v604 = vadd.f32 0.0, %v603
    %v605 = vpop.f32.mrf.mxu0
    %v606 = vpop.f32.mrf.mxu0
    %v607 = vadd.f32 0.0, %v606
    %v608 = vpop.f32.mrf.mxu0
    %609 = vmatprep.mubr.bf16.mxu0 0
    %610 = vmatmul.mubr.bf16.gmra.mxu0 %v184
    %v611 = vpop.f32.mrf.mxu0
    %v612 = vadd.f32 0.0, %v611
    %v613 = vpop.f32.mrf.mxu0
    %v614 = vpop.f32.mrf.mxu0
    %v615 = vadd.f32 0.0, %v614
    %v616 = vpop.f32.mrf.mxu0
    %617 = vmatprep.mubr.bf16.mxu0 0
    %618 = vmatmul.mubr.bf16.gmra.mxu0 %v185
    %v619 = vpop.f32.mrf.mxu0
    %v620 = vadd.f32 0.0, %v619
    %v621 = vpop.f32.mrf.mxu0
    %v622 = vpop.f32.mrf.mxu0
    %v623 = vadd.f32 0.0, %v622
    %v624 = vpop.f32.mrf.mxu0
    %625 = vmatprep.mubr.bf16.mxu0 0
    %626 = vmatmul.mubr.bf16.gmra.mxu0 %v186
    %v627 = vpop.f32.mrf.mxu0
    %v628 = vadd.f32 0.0, %v627
    %v629 = vpop.f32.mrf.mxu0
    %v630 = vpop.f32.mrf.mxu0
    %v631 = vadd.f32 0.0, %v630
    %v632 = vpop.f32.mrf.mxu0
    %633 = vmatprep.mubr.bf16.mxu0 0
    %634 = vmatmul.mubr.bf16.gmra.mxu0 %v187
    %v635 = vpop.f32.mrf.mxu0
    %v636 = vadd.f32 0.0, %v635
    %v637 = vpop.f32.mrf.mxu0
    %v638 = vpop.f32.mrf.mxu0
    %v639 = vadd.f32 0.0, %v638
    %v640 = vpop.f32.mrf.mxu0
    %641 = vmatprep.mubr.bf16.mxu0 0
    %642 = vmatmul.mubr.bf16.gmra.mxu0 %v188
    %v643 = vpop.f32.mrf.mxu0
    %v644 = vadd.f32 0.0, %v643
    %v645 = vpop.f32.mrf.mxu0
    %v646 = vpop.f32.mrf.mxu0
    %v647 = vadd.f32 0.0, %v646
    %v648 = vpop.f32.mrf.mxu0
    %649 = vmatprep.mubr.bf16.mxu0 0
    %650 = vmatmul.mubr.bf16.gmra.mxu0 %v189
    %v651 = vpop.f32.mrf.mxu0
    %v652 = vadd.f32 0.0, %v651
    %v653 = vpop.f32.mrf.mxu0
    %v654 = vpop.f32.mrf.mxu0
    %v655 = vadd.f32 0.0, %v654
    %v656 = vpop.f32.mrf.mxu0
    %657 = vmatprep.mubr.bf16.mxu0 0
    %658 = vmatmul.mubr.bf16.gmra.mxu0 %v190
    %v659 = vpop.f32.mrf.mxu0
    %v660 = vadd.f32 0.0, %v659
    %v661 = vpop.f32.mrf.mxu0
    %v662 = vpop.f32.mrf.mxu0
    %v663 = vadd.f32 0.0, %v662
    %v664 = vpop.f32.mrf.mxu0
    %665 = vmatprep.mubr.bf16.mxu0 0
    %666 = vmatmul.mubr.bf16.gmra.mxu0 %v191
    %v667 = vpop.f32.mrf.mxu0
    %v668 = vpop.f32.mrf.mxu0
    %v669 = vpop.f32.mrf.mxu0
    %v670 = vpop.f32.mrf.mxu0
    %671 = vdwg.mxu0
    %v672 = vld [vmem:[#allocation2 + $0x10] sm:$0xff]
    %v673 = vld [vmem:[#allocation2 + $0x18] sm:$0xff]
    %v674 = vld [vmem:[#allocation2 + $0x20] sm:$0xff]
    %v675 = vld [vmem:[#allocation2 + $0x28] sm:$0xff]
    %v676 = vld [vmem:[#allocation2 + $0x30] sm:$0xff]
    %v677 = vld [vmem:[#allocation2 + $0x38] sm:$0xff]
    %v678 = vld [vmem:[#allocation2 + $0x40] sm:$0xff]
    %v679 = vld [vmem:[#allocation2 + $0x48] sm:$0xff]
    %v680 = vld [vmem:[#allocation2 + $0x50] sm:$0xff]
    %v681 = vld [vmem:[#allocation2 + $0x58] sm:$0xff]
    %v682 = vld [vmem:[#allocation2 + $0x60] sm:$0xff]
    %v683 = vld [vmem:[#allocation2 + $0x68] sm:$0xff]
    %v684 = vld [vmem:[#allocation2 + $0x70] sm:$0xff]
    %v685 = vld [vmem:[#allocation2 + $0x78] sm:$0xff]
    %v686 = vld [vmem:[#allocation2 + $0x80] sm:$0xff]
    %v687 = vld [vmem:[#allocation2 + $0x88] sm:$0xff]
    %v688 = vld [vmem:[#allocation2 + $0x90] sm:$0xff]
    %v689 = vld [vmem:[#allocation2 + $0x98] sm:$0xff]
    %v690 = vld [vmem:[#allocation2 + $0xa0] sm:$0xff]
    %v691 = vld [vmem:[#allocation2 + $0xa8] sm:$0xff]
    %v692 = vld [vmem:[#allocation2 + $0xb0] sm:$0xff]
    %v693 = vld [vmem:[#allocation2 + $0xb8] sm:$0xff]
    %v694 = vld [vmem:[#allocation2 + $0xc0] sm:$0xff]
    %v695 = vld [vmem:[#allocation2 + $0xc8] sm:$0xff]
    %v696 = vld [vmem:[#allocation2 + $0xd0] sm:$0xff]
    %v697 = vld [vmem:[#allocation2 + $0xd8] sm:$0xff]
    %v698 = vld [vmem:[#allocation2 + $0xe0] sm:$0xff]
    %v699 = vld [vmem:[#allocation2 + $0xe8] sm:$0xff]
    %v700 = vld [vmem:[#allocation2 + $0xf0] sm:$0xff]
    %v701 = vld [vmem:[#allocation2 + $0xf8] sm:$0xff]
    %v702 = vadd.f32 %v672, %v548
    %v703 = vadd.f32 %v673, %v551
    %v704 = vadd.f32 %v674, %v556
    %v705 = vadd.f32 %v675, %v559
    %v706 = vadd.f32 %v676, %v564
    %v707 = vadd.f32 %v677, %v567
    %v708 = vadd.f32 %v678, %v572
    %v709 = vadd.f32 %v679, %v575
    %v710 = vadd.f32 %v680, %v580
    %v711 = vadd.f32 %v681, %v583
    %v712 = vadd.f32 %v682, %v588
    %v713 = vadd.f32 %v683, %v591
    %v714 = vadd.f32 %v684, %v596
    %v715 = vadd.f32 %v685, %v599
    %v716 = vadd.f32 %v686, %v604
    %v717 = vadd.f32 %v687, %v607
    %v718 = vadd.f32 %v688, %v612
    %v719 = vadd.f32 %v689, %v615
    %v720 = vadd.f32 %v690, %v620
    %v721 = vadd.f32 %v691, %v623
    %v722 = vadd.f32 %v692, %v628
    %v723 = vadd.f32 %v693, %v631
    %v724 = vadd.f32 %v694, %v636
    %v725 = vadd.f32 %v695, %v639
    %v726 = vadd.f32 %v696, %v644
    %v727 = vadd.f32 %v697, %v647
    %v728 = vadd.f32 %v698, %v652
    %v729 = vadd.f32 %v699, %v655
    %v730 = vadd.f32 %v700, %v660
    %v731 = vadd.f32 %v701, %v663
    %732 = vst [vmem:[#allocation2 + $0x10] sm:$0xff] %v702
    %733 = vst [vmem:[#allocation2 + $0x18] sm:$0xff] %v703
    %734 = vst [vmem:[#allocation2 + $0x20] sm:$0xff] %v704
    %735 = vst [vmem:[#allocation2 + $0x28] sm:$0xff] %v705
    %736 = vst [vmem:[#allocation2 + $0x30] sm:$0xff] %v706
    %737 = vst [vmem:[#allocation2 + $0x38] sm:$0xff] %v707
    %738 = vst [vmem:[#allocation2 + $0x40] sm:$0xff] %v708
    %739 = vst [vmem:[#allocation2 + $0x48] sm:$0xff] %v709
    %740 = vst [vmem:[#allocation2 + $0x50] sm:$0xff] %v710
    %741 = vst [vmem:[#allocation2 + $0x58] sm:$0xff] %v711
    %742 = vst [vmem:[#allocation2 + $0x60] sm:$0xff] %v712
    %743 = vst [vmem:[#allocation2 + $0x68] sm:$0xff] %v713
    %744 = vst [vmem:[#allocation2 + $0x70] sm:$0xff] %v714
    %745 = vst [vmem:[#allocation2 + $0x78] sm:$0xff] %v715
    %746 = vst [vmem:[#allocation2 + $0x80] sm:$0xff] %v716
    %747 = vst [vmem:[#allocation2 + $0x88] sm:$0xff] %v717
    %748 = vst [vmem:[#allocation2 + $0x90] sm:$0xff] %v718
    %749 = vst [vmem:[#allocation2 + $0x98] sm:$0xff] %v719
    %750 = vst [vmem:[#allocation2 + $0xa0] sm:$0xff] %v720
    %751 = vst [vmem:[#allocation2 + $0xa8] sm:$0xff] %v721
    %752 = vst [vmem:[#allocation2 + $0xb0] sm:$0xff] %v722
    %753 = vst [vmem:[#allocation2 + $0xb8] sm:$0xff] %v723
    %754 = vst [vmem:[#allocation2 + $0xc0] sm:$0xff] %v724
    %755 = vst [vmem:[#allocation2 + $0xc8] sm:$0xff] %v725
    %756 = vst [vmem:[#allocation2 + $0xd0] sm:$0xff] %v726
    %757 = vst [vmem:[#allocation2 + $0xd8] sm:$0xff] %v727
    %758 = vst [vmem:[#allocation2 + $0xe0] sm:$0xff] %v728
    %759 = vst [vmem:[#allocation2 + $0xe8] sm:$0xff] %v729
    %760 = vst [vmem:[#allocation2 + $0xf0] sm:$0xff] %v730
    %761 = vst [vmem:[#allocation2 + $0xf8] sm:$0xff] %v731
    %s762 = scalar_lea.vmem [#allocation6], 128
    %v763 = vld [vmem:[%s762] sm:$0xf]
    %v764 = vld [vmem:[%s762 + $0x4] sm:$0xf]
    %v765 = vld [vmem:[%s762 + $0x8] sm:$0xf]
    %v766 = vld [vmem:[%s762 + $0xc] sm:$0xf]
    %v767 = vld [vmem:[%s762 + $0x10] sm:$0xf]
    %v768 = vld [vmem:[%s762 + $0x14] sm:$0xf]
    %v769 = vld [vmem:[%s762 + $0x18] sm:$0xf]
    %v770 = vld [vmem:[%s762 + $0x1c] sm:$0xf]
    %v771 = vld [vmem:[%s762 + $0x20] sm:$0xf]
    %v772 = vld [vmem:[%s762 + $0x24] sm:$0xf]
    %v773 = vld [vmem:[%s762 + $0x28] sm:$0xf]
    %v774 = vld [vmem:[%s762 + $0x2c] sm:$0xf]
    %v775 = vld [vmem:[%s762 + $0x30] sm:$0xf]
    %v776 = vld [vmem:[%s762 + $0x34] sm:$0xf]
    %v777 = vld [vmem:[%s762 + $0x38] sm:$0xf]
    %v778 = vld [vmem:[%s762 + $0x3c] sm:$0xf]
    %v795 = vunpack.c.l.b16 %v763
    %v796 = vunpack.c.l.b16 %v764
    %v797 = vunpack.c.l.b16 %v765
    %v798 = vunpack.c.l.b16 %v766
    %v799 = vunpack.c.l.b16 %v767
    %v800 = vunpack.c.l.b16 %v768
    %v801 = vunpack.c.l.b16 %v769
    %v802 = vunpack.c.l.b16 %v770
    %v803 = vunpack.c.l.b16 %v771
    %v804 = vunpack.c.l.b16 %v772
    %v805 = vunpack.c.l.b16 %v773
    %v806 = vunpack.c.l.b16 %v774
    %v807 = vunpack.c.l.b16 %v775
    %v808 = vunpack.c.l.b16 %v776
    %v809 = vunpack.c.l.b16 %v777
    %v810 = vunpack.c.l.b16 %v778
    %v811 = vpack.c.b16 %v796, %v795
    %v812 = vpack.c.b16 %v798, %v797
    %v813 = vpack.c.b16 %v800, %v799
    %v814 = vpack.c.b16 %v802, %v801
    %v815 = vpack.c.b16 %v804, %v803
    %v816 = vpack.c.b16 %v806, %v805
    %v817 = vpack.c.b16 %v808, %v807
    %v818 = vpack.c.b16 %v810, %v809
    %827 = vmatprep.subr.bf16.mxu0 0
    %828 = vmatpush1.bf16.msra.mxu0 %v818
    %829 = vmatprep.subr.bf16.mxu0 0
    %830 = vmatpush1.bf16.msra.mxu0 %v817
    %831 = vmatprep.subr.bf16.mxu0 0
    %832 = vmatpush1.bf16.msra.mxu0 %v816
    %833 = vmatprep.subr.bf16.mxu0 0
    %834 = vmatpush1.bf16.msra.mxu0 %v815
    %835 = vmatprep.subr.bf16.mxu0 0
    %836 = vmatpush1.bf16.msra.mxu0 %v814
    %837 = vmatprep.subr.bf16.mxu0 0
    %838 = vmatpush1.bf16.msra.mxu0 %v813
    %839 = vmatprep.subr.bf16.mxu0 0
    %840 = vmatpush1.bf16.msra.mxu0 %v812
    %841 = vmatprep.subr.bf16.mxu0 0
    %842 = vmatpush1.bf16.msra.mxu0 %v811
    %843 = vmatprep.subr.bf16.mxu0 0
    %844 = vmatpush2.bf16.msra.mxu0 0
    %845 = vmatprep.subr.bf16.mxu0 0
    %846 = vmatpush2.bf16.msra.mxu0 0
    %847 = vmatprep.subr.bf16.mxu0 0
    %848 = vmatpush2.bf16.msra.mxu0 0
    %849 = vmatprep.subr.bf16.mxu0 0
    %850 = vmatpush2.bf16.msra.mxu0 0
    %851 = vmatprep.subr.bf16.mxu0 0
    %852 = vmatpush2.bf16.msra.mxu0 0
    %853 = vmatprep.subr.bf16.mxu0 0
    %854 = vmatpush2.bf16.msra.mxu0 0
    %855 = vmatprep.subr.bf16.mxu0 0
    %856 = vmatpush2.bf16.msra.mxu0 0
    %857 = vmatprep.subr.bf16.mxu0 0
    %858 = vmatpush2.bf16.msra.mxu0 0
    %859 = vmatprep.mubr.bf16.mxu0 0
    %860 = vmatmul.mubr.bf16.gmra.mxu0 %v176
    %v861 = vpop.f32.mrf.mxu0
    %v862 = vpop.f32.mrf.mxu0
    %v863 = vpop.f32.mrf.mxu0
    %v864 = vpop.f32.mrf.mxu0
    %865 = vmatprep.mubr.bf16.mxu0 0
    %866 = vmatmul.mubr.bf16.gmra.mxu0 %v177
    %v867 = vpop.f32.mrf.mxu0
    %v868 = vadd.f32 0.0, %v867
    %v869 = vpop.f32.mrf.mxu0
    %v870 = vpop.f32.mrf.mxu0
    %v871 = vadd.f32 0.0, %v870
    %v872 = vpop.f32.mrf.mxu0
    %873 = vmatprep.mubr.bf16.mxu0 0
    %874 = vmatmul.mubr.bf16.gmra.mxu0 %v178
    %v875 = vpop.f32.mrf.mxu0
    %v876 = vadd.f32 0.0, %v875
    %v877 = vpop.f32.mrf.mxu0
    %v878 = vpop.f32.mrf.mxu0
    %v879 = vadd.f32 0.0, %v878
    %v880 = vpop.f32.mrf.mxu0
    %881 = vmatprep.mubr.bf16.mxu0 0
    %882 = vmatmul.mubr.bf16.gmra.mxu0 %v179
    %v883 = vpop.f32.mrf.mxu0
    %v884 = vadd.f32 0.0, %v883
    %v885 = vpop.f32.mrf.mxu0
    %v886 = vpop.f32.mrf.mxu0
    %v887 = vadd.f32 0.0, %v886
    %v888 = vpop.f32.mrf.mxu0
    %889 = vmatprep.mubr.bf16.mxu0 0
    %890 = vmatmul.mubr.bf16.gmra.mxu0 %v180
    %v891 = vpop.f32.mrf.mxu0
    %v892 = vadd.f32 0.0, %v891
    %v893 = vpop.f32.mrf.mxu0
    %v894 = vpop.f32.mrf.mxu0
    %v895 = vadd.f32 0.0, %v894
    %v896 = vpop.f32.mrf.mxu0
    %897 = vmatprep.mubr.bf16.mxu0 0
    %898 = vmatmul.mubr.bf16.gmra.mxu0 %v181
    %v899 = vpop.f32.mrf.mxu0
    %v900 = vadd.f32 0.0, %v899
    %v901 = vpop.f32.mrf.mxu0
    %v902 = vpop.f32.mrf.mxu0
    %v903 = vadd.f32 0.0, %v902
    %v904 = vpop.f32.mrf.mxu0
    %905 = vmatprep.mubr.bf16.mxu0 0
    %906 = vmatmul.mubr.bf16.gmra.mxu0 %v182
    %v907 = vpop.f32.mrf.mxu0
    %v908 = vadd.f32 0.0, %v907
    %v909 = vpop.f32.mrf.mxu0
    %v910 = vpop.f32.mrf.mxu0
    %v911 = vadd.f32 0.0, %v910
    %v912 = vpop.f32.mrf.mxu0
    %913 = vmatprep.mubr.bf16.mxu0 0
    %914 = vmatmul.mubr.bf16.gmra.mxu0 %v183
    %v915 = vpop.f32.mrf.mxu0
    %v916 = vadd.f32 0.0, %v915
    %v917 = vpop.f32.mrf.mxu0
    %v918 = vpop.f32.mrf.mxu0
    %v919 = vadd.f32 0.0, %v918
    %v920 = vpop.f32.mrf.mxu0
    %921 = vmatprep.mubr.bf16.mxu0 0
    %922 = vmatmul.mubr.bf16.gmra.mxu0 %v184
    %v923 = vpop.f32.mrf.mxu0
    %v924 = vadd.f32 0.0, %v923
    %v925 = vpop.f32.mrf.mxu0
    %v926 = vpop.f32.mrf.mxu0
    %v927 = vadd.f32 0.0, %v926
    %v928 = vpop.f32.mrf.mxu0
    %929 = vmatprep.mubr.bf16.mxu0 0
    %930 = vmatmul.mubr.bf16.gmra.mxu0 %v185
    %v931 = vpop.f32.mrf.mxu0
    %v932 = vadd.f32 0.0, %v931
    %v933 = vpop.f32.mrf.mxu0
    %v934 = vpop.f32.mrf.mxu0
    %v935 = vadd.f32 0.0, %v934
    %v936 = vpop.f32.mrf.mxu0
    %937 = vmatprep.mubr.bf16.mxu0 0
    %938 = vmatmul.mubr.bf16.gmra.mxu0 %v186
    %v939 = vpop.f32.mrf.mxu0
    %v940 = vadd.f32 0.0, %v939
    %v941 = vpop.f32.mrf.mxu0
    %v942 = vpop.f32.mrf.mxu0
    %v943 = vadd.f32 0.0, %v942
    %v944 = vpop.f32.mrf.mxu0
    %945 = vmatprep.mubr.bf16.mxu0 0
    %946 = vmatmul.mubr.bf16.gmra.mxu0 %v187
    %v947 = vpop.f32.mrf.mxu0
    %v948 = vadd.f32 0.0, %v947
    %v949 = vpop.f32.mrf.mxu0
    %v950 = vpop.f32.mrf.mxu0
    %v951 = vadd.f32 0.0, %v950
    %v952 = vpop.f32.mrf.mxu0
    %953 = vmatprep.mubr.bf16.mxu0 0
    %954 = vmatmul.mubr.bf16.gmra.mxu0 %v188
    %v955 = vpop.f32.mrf.mxu0
    %v956 = vadd.f32 0.0, %v955
    %v957 = vpop.f32.mrf.mxu0
    %v958 = vpop.f32.mrf.mxu0
    %v959 = vadd.f32 0.0, %v958
    %v960 = vpop.f32.mrf.mxu0
    %961 = vmatprep.mubr.bf16.mxu0 0
    %962 = vmatmul.mubr.bf16.gmra.mxu0 %v189
    %v963 = vpop.f32.mrf.mxu0
    %v964 = vadd.f32 0.0, %v963
    %v965 = vpop.f32.mrf.mxu0
    %v966 = vpop.f32.mrf.mxu0
    %v967 = vadd.f32 0.0, %v966
    %v968 = vpop.f32.mrf.mxu0
    %969 = vmatprep.mubr.bf16.mxu0 0
    %970 = vmatmul.mubr.bf16.gmra.mxu0 %v190
    %v971 = vpop.f32.mrf.mxu0
    %v972 = vadd.f32 0.0, %v971
    %v973 = vpop.f32.mrf.mxu0
    %v974 = vpop.f32.mrf.mxu0
    %v975 = vadd.f32 0.0, %v974
    %v976 = vpop.f32.mrf.mxu0
    %977 = vmatprep.mubr.bf16.mxu0 0
    %978 = vmatmul.mubr.bf16.gmra.mxu0 %v191
    %v979 = vpop.f32.mrf.mxu0
    %v980 = vadd.f32 0.0, %v979
    %v981 = vpop.f32.mrf.mxu0
    %v982 = vpop.f32.mrf.mxu0
    %v983 = vadd.f32 0.0, %v982
    %v984 = vpop.f32.mrf.mxu0
    %985 = vdwg.mxu0
    %v986 = vld [vmem:[#allocation2] sm:$0xff]
    %v987 = vld [vmem:[#allocation2 + $0x8] sm:$0xff]
    %v988 = vld [vmem:[#allocation2 + $0x10] sm:$0xff]
    %v989 = vld [vmem:[#allocation2 + $0x18] sm:$0xff]
    %v990 = vld [vmem:[#allocation2 + $0x20] sm:$0xff]
    %v991 = vld [vmem:[#allocation2 + $0x28] sm:$0xff]
    %v992 = vld [vmem:[#allocation2 + $0x30] sm:$0xff]
    %v993 = vld [vmem:[#allocation2 + $0x38] sm:$0xff]
    %v994 = vld [vmem:[#allocation2 + $0x40] sm:$0xff]
    %v995 = vld [vmem:[#allocation2 + $0x48] sm:$0xff]
    %v996 = vld [vmem:[#allocation2 + $0x50] sm:$0xff]
    %v997 = vld [vmem:[#allocation2 + $0x58] sm:$0xff]
    %v998 = vld [vmem:[#allocation2 + $0x60] sm:$0xff]
    %v999 = vld [vmem:[#allocation2 + $0x68] sm:$0xff]
    %v1000 = vld [vmem:[#allocation2 + $0x70] sm:$0xff]
    %v1001 = vld [vmem:[#allocation2 + $0x78] sm:$0xff]
    %v1002 = vld [vmem:[#allocation2 + $0x80] sm:$0xff]
    %v1003 = vld [vmem:[#allocation2 + $0x88] sm:$0xff]
    %v1004 = vld [vmem:[#allocation2 + $0x90] sm:$0xff]
    %v1005 = vld [vmem:[#allocation2 + $0x98] sm:$0xff]
    %v1006 = vld [vmem:[#allocation2 + $0xa0] sm:$0xff]
    %v1007 = vld [vmem:[#allocation2 + $0xa8] sm:$0xff]
    %v1008 = vld [vmem:[#allocation2 + $0xb0] sm:$0xff]
    %v1009 = vld [vmem:[#allocation2 + $0xb8] sm:$0xff]
    %v1010 = vld [vmem:[#allocation2 + $0xc0] sm:$0xff]
    %v1011 = vld [vmem:[#allocation2 + $0xc8] sm:$0xff]
    %v1012 = vld [vmem:[#allocation2 + $0xd0] sm:$0xff]
    %v1013 = vld [vmem:[#allocation2 + $0xd8] sm:$0xff]
    %v1014 = vld [vmem:[#allocation2 + $0xe0] sm:$0xff]
    %v1015 = vld [vmem:[#allocation2 + $0xe8] sm:$0xff]
    %v1016 = vadd.f32 %v986, %v868
    %v1017 = vadd.f32 %v987, %v871
    %v1018 = vadd.f32 %v988, %v876
    %v1019 = vadd.f32 %v989, %v879
    %v1020 = vadd.f32 %v990, %v884
    %v1021 = vadd.f32 %v991, %v887
    %v1022 = vadd.f32 %v992, %v892
    %v1023 = vadd.f32 %v993, %v895
    %v1024 = vadd.f32 %v994, %v900
    %v1025 = vadd.f32 %v995, %v903
    %v1026 = vadd.f32 %v996, %v908
    %v1027 = vadd.f32 %v997, %v911
    %v1028 = vadd.f32 %v998, %v916
    %v1029 = vadd.f32 %v999, %v919
    %v1030 = vadd.f32 %v1000, %v924
    %v1031 = vadd.f32 %v1001, %v927
    %v1032 = vadd.f32 %v1002, %v932
    %v1033 = vadd.f32 %v1003, %v935
    %v1034 = vadd.f32 %v1004, %v940
    %v1035 = vadd.f32 %v1005, %v943
    %v1036 = vadd.f32 %v1006, %v948
    %v1037 = vadd.f32 %v1007, %v951
    %v1038 = vadd.f32 %v1008, %v956
    %v1039 = vadd.f32 %v1009, %v959
    %v1040 = vadd.f32 %v1010, %v964
    %v1041 = vadd.f32 %v1011, %v967
    %v1042 = vadd.f32 %v1012, %v972
    %v1043 = vadd.f32 %v1013, %v975
    %v1044 = vadd.f32 %v1014, %v980
    %v1045 = vadd.f32 %v1015, %v983
    %1046 = vst [vmem:[#allocation2] sm:$0xff] %v1016
    %1047 = vst [vmem:[#allocation2 + $0x8] sm:$0xff] %v1017
    %1048 = vst [vmem:[#allocation2 + $0x10] sm:$0xff] %v1018
    %1049 = vst [vmem:[#allocation2 + $0x18] sm:$0xff] %v1019
    %1050 = vst [vmem:[#allocation2 + $0x20] sm:$0xff] %v1020
    %1051 = vst [vmem:[#allocation2 + $0x28] sm:$0xff] %v1021
    %1052 = vst [vmem:[#allocation2 + $0x30] sm:$0xff] %v1022
    %1053 = vst [vmem:[#allocation2 + $0x38] sm:$0xff] %v1023
    %1054 = vst [vmem:[#allocation2 + $0x40] sm:$0xff] %v1024
    %1055 = vst [vmem:[#allocation2 + $0x48] sm:$0xff] %v1025
    %1056 = vst [vmem:[#allocation2 + $0x50] sm:$0xff] %v1026
    %1057 = vst [vmem:[#allocation2 + $0x58] sm:$0xff] %v1027
    %1058 = vst [vmem:[#allocation2 + $0x60] sm:$0xff] %v1028
    %1059 = vst [vmem:[#allocation2 + $0x68] sm:$0xff] %v1029
    %1060 = vst [vmem:[#allocation2 + $0x70] sm:$0xff] %v1030
    %1061 = vst [vmem:[#allocation2 + $0x78] sm:$0xff] %v1031
    %1062 = vst [vmem:[#allocation2 + $0x80] sm:$0xff] %v1032
    %1063 = vst [vmem:[#allocation2 + $0x88] sm:$0xff] %v1033
    %1064 = vst [vmem:[#allocation2 + $0x90] sm:$0xff] %v1034
    %1065 = vst [vmem:[#allocation2 + $0x98] sm:$0xff] %v1035
    %1066 = vst [vmem:[#allocation2 + $0xa0] sm:$0xff] %v1036
    %1067 = vst [vmem:[#allocation2 + $0xa8] sm:$0xff] %v1037
    %1068 = vst [vmem:[#allocation2 + $0xb0] sm:$0xff] %v1038
    %1069 = vst [vmem:[#allocation2 + $0xb8] sm:$0xff] %v1039
    %1070 = vst [vmem:[#allocation2 + $0xc0] sm:$0xff] %v1040
    %1071 = vst [vmem:[#allocation2 + $0xc8] sm:$0xff] %v1041
    %1072 = vst [vmem:[#allocation2 + $0xd0] sm:$0xff] %v1042
    %1073 = vst [vmem:[#allocation2 + $0xd8] sm:$0xff] %v1043
    %1074 = vst [vmem:[#allocation2 + $0xe0] sm:$0xff] %v1044
    %1075 = vst [vmem:[#allocation2 + $0xe8] sm:$0xff] %v1045
    %v1076 = vld [vmem:[#allocation2] sm:$0xff]
    %v1077 = vld [vmem:[#allocation2 + $0x8] sm:$0xff]
    %v1078 = vld [vmem:[#allocation2 + $0x10] sm:$0xff]
    %v1079 = vld [vmem:[#allocation2 + $0x18] sm:$0xff]
    %v1080 = vld [vmem:[#allocation2 + $0x20] sm:$0xff]
    %v1081 = vld [vmem:[#allocation2 + $0x28] sm:$0xff]
    %v1082 = vld [vmem:[#allocation2 + $0x30] sm:$0xff]
    %v1083 = vld [vmem:[#allocation2 + $0x38] sm:$0xff]
    %v1084 = vld [vmem:[#allocation2 + $0x40] sm:$0xff]
    %v1085 = vld [vmem:[#allocation2 + $0x48] sm:$0xff]
    %v1086 = vld [vmem:[#allocation2 + $0x50] sm:$0xff]
    %v1087 = vld [vmem:[#allocation2 + $0x58] sm:$0xff]
    %v1088 = vld [vmem:[#allocation2 + $0x60] sm:$0xff]
    %v1089 = vld [vmem:[#allocation2 + $0x68] sm:$0xff]
    %v1090 = vld [vmem:[#allocation2 + $0x70] sm:$0xff]
    %v1091 = vld [vmem:[#allocation2 + $0x78] sm:$0xff]
    %v1092 = vld [vmem:[#allocation2 + $0x80] sm:$0xff]
    %v1093 = vld [vmem:[#allocation2 + $0x88] sm:$0xff]
    %v1094 = vld [vmem:[#allocation2 + $0x90] sm:$0xff]
    %v1095 = vld [vmem:[#allocation2 + $0x98] sm:$0xff]
    %v1096 = vld [vmem:[#allocation2 + $0xa0] sm:$0xff]
    %v1097 = vld [vmem:[#allocation2 + $0xa8] sm:$0xff]
    %v1098 = vld [vmem:[#allocation2 + $0xb0] sm:$0xff]
    %v1099 = vld [vmem:[#allocation2 + $0xb8] sm:$0xff]
    %v1100 = vld [vmem:[#allocation2 + $0xc0] sm:$0xff]
    %v1101 = vld [vmem:[#allocation2 + $0xc8] sm:$0xff]
    %v1102 = vld [vmem:[#allocation2 + $0xd0] sm:$0xff]
    %v1103 = vld [vmem:[#allocation2 + $0xd8] sm:$0xff]
    %v1104 = vld [vmem:[#allocation2 + $0xe0] sm:$0xff]
    %v1105 = vld [vmem:[#allocation2 + $0xe8] sm:$0xff]
    %v1106 = vld [vmem:[#allocation2 + $0xf0] sm:$0xff]
    %v1107 = vld [vmem:[#allocation2 + $0xf8] sm:$0xff]
    %v1108 = vld [vmem:[%s3] sm:$0x1]
    %v1110 = vlaneseq
    %v1111 = vshrl.u32 %v1110, 7
    %v1112 = vsub.s32 0, %v1111
    %v1113 = vrot.slane %v1108, %v1112
    %v1115 = vadd.f32 %v1076, %v1113
    %v1116 = vadd.f32 %v1077, %v1113
    %v1117 = vadd.f32 %v1078, %v1113
    %v1118 = vadd.f32 %v1079, %v1113
    %v1119 = vadd.f32 %v1080, %v1113
    %v1120 = vadd.f32 %v1081, %v1113
    %v1121 = vadd.f32 %v1082, %v1113
    %v1122 = vadd.f32 %v1083, %v1113
    %v1123 = vadd.f32 %v1084, %v1113
    %v1124 = vadd.f32 %v1085, %v1113
    %v1125 = vadd.f32 %v1086, %v1113
    %v1126 = vadd.f32 %v1087, %v1113
    %v1127 = vadd.f32 %v1088, %v1113
    %v1128 = vadd.f32 %v1089, %v1113
    %v1129 = vadd.f32 %v1090, %v1113
    %v1130 = vadd.f32 %v1091, %v1113
    %v1131 = vadd.f32 %v1092, %v1113
    %v1132 = vadd.f32 %v1093, %v1113
    %v1133 = vadd.f32 %v1094, %v1113
    %v1134 = vadd.f32 %v1095, %v1113
    %v1135 = vadd.f32 %v1096, %v1113
    %v1136 = vadd.f32 %v1097, %v1113
    %v1137 = vadd.f32 %v1098, %v1113
    %v1138 = vadd.f32 %v1099, %v1113
    %v1139 = vadd.f32 %v1100, %v1113
    %v1140 = vadd.f32 %v1101, %v1113
    %v1141 = vadd.f32 %v1102, %v1113
    %v1142 = vadd.f32 %v1103, %v1113
    %v1143 = vadd.f32 %v1104, %v1113
    %v1144 = vadd.f32 %v1105, %v1113
    %v1145 = vadd.f32 %v1106, %v1113
    %v1146 = vadd.f32 %v1107, %v1113
    %v1147 = vmax.f32 %v1115, 0.0
    %v1148 = vmax.f32 %v1116, 0.0
    %v1149 = vmax.f32 %v1117, 0.0
    %v1150 = vmax.f32 %v1118, 0.0
    %v1151 = vmax.f32 %v1119, 0.0
    %v1152 = vmax.f32 %v1120, 0.0
    %v1153 = vmax.f32 %v1121, 0.0
    %v1154 = vmax.f32 %v1122, 0.0
    %v1155 = vmax.f32 %v1123, 0.0
    %v1156 = vmax.f32 %v1124, 0.0
    %v1157 = vmax.f32 %v1125, 0.0
    %v1158 = vmax.f32 %v1126, 0.0
    %v1159 = vmax.f32 %v1127, 0.0
    %v1160 = vmax.f32 %v1128, 0.0
    %v1161 = vmax.f32 %v1129, 0.0
    %v1162 = vmax.f32 %v1130, 0.0
    %v1163 = vmax.f32 %v1131, 0.0
    %v1164 = vmax.f32 %v1132, 0.0
    %v1165 = vmax.f32 %v1133, 0.0
    %v1166 = vmax.f32 %v1134, 0.0
    %v1167 = vmax.f32 %v1135, 0.0
    %v1168 = vmax.f32 %v1136, 0.0
    %v1169 = vmax.f32 %v1137, 0.0
    %v1170 = vmax.f32 %v1138, 0.0
    %v1171 = vmax.f32 %v1139, 0.0
    %v1172 = vmax.f32 %v1140, 0.0
    %v1173 = vmax.f32 %v1141, 0.0
    %v1174 = vmax.f32 %v1142, 0.0
    %v1175 = vmax.f32 %v1143, 0.0
    %v1176 = vmax.f32 %v1144, 0.0
    %v1177 = vmax.f32 %v1145, 0.0
    %v1178 = vmax.f32 %v1146, 0.0
    %v1179 = vpack.c.bf16 %v1148, %v1147
    %v1180 = vpack.c.bf16 %v1150, %v1149
    %v1181 = vpack.c.bf16 %v1152, %v1151
    %v1182 = vpack.c.bf16 %v1154, %v1153
    %v1183 = vpack.c.bf16 %v1156, %v1155
    %v1184 = vpack.c.bf16 %v1158, %v1157
    %v1185 = vpack.c.bf16 %v1160, %v1159
    %v1186 = vpack.c.bf16 %v1162, %v1161
    %v1187 = vpack.c.bf16 %v1164, %v1163
    %v1188 = vpack.c.bf16 %v1166, %v1165
    %v1189 = vpack.c.bf16 %v1168, %v1167
    %v1190 = vpack.c.bf16 %v1170, %v1169
    %v1191 = vpack.c.bf16 %v1172, %v1171
    %v1192 = vpack.c.bf16 %v1174, %v1173
    %v1193 = vpack.c.bf16 %v1176, %v1175
    %v1194 = vpack.c.bf16 %v1178, %v1177
    %s1195 = scalar_lea.vmem [#allocation8], 64
    %v1196 = vld [vmem:[%s1195] sm:$0xf]
    %v1197 = vld [vmem:[%s1195 + $0x4] sm:$0xf]
    %v1198 = vld [vmem:[%s1195 + $0x8] sm:$0xf]
    %v1199 = vld [vmem:[%s1195 + $0xc] sm:$0xf]
    %v1200 = vld [vmem:[%s1195 + $0x10] sm:$0xf]
    %v1201 = vld [vmem:[%s1195 + $0x14] sm:$0xf]
    %v1202 = vld [vmem:[%s1195 + $0x18] sm:$0xf]
    %v1203 = vld [vmem:[%s1195 + $0x1c] sm:$0xf]
    %v1204 = vld [vmem:[%s1195 + $0x20] sm:$0xf]
    %v1205 = vld [vmem:[%s1195 + $0x24] sm:$0xf]
    %v1206 = vld [vmem:[%s1195 + $0x28] sm:$0xf]
    %v1207 = vld [vmem:[%s1195 + $0x2c] sm:$0xf]
    %v1208 = vld [vmem:[%s1195 + $0x30] sm:$0xf]
    %v1209 = vld [vmem:[%s1195 + $0x34] sm:$0xf]
    %v1210 = vld [vmem:[%s1195 + $0x38] sm:$0xf]
    %v1211 = vld [vmem:[%s1195 + $0x3c] sm:$0xf]
    %v1228 = vunpack.c.l.b16 %v1196
    %v1229 = vunpack.c.l.b16 %v1197
    %v1230 = vunpack.c.l.b16 %v1198
    %v1231 = vunpack.c.l.b16 %v1199
    %v1232 = vunpack.c.l.b16 %v1200
    %v1233 = vunpack.c.l.b16 %v1201
    %v1234 = vunpack.c.l.b16 %v1202
    %v1235 = vunpack.c.l.b16 %v1203
    %v1236 = vunpack.c.l.b16 %v1204
    %v1237 = vunpack.c.l.b16 %v1205
    %v1238 = vunpack.c.l.b16 %v1206
    %v1239 = vunpack.c.l.b16 %v1207
    %v1240 = vunpack.c.l.b16 %v1208
    %v1241 = vunpack.c.l.b16 %v1209
    %v1242 = vunpack.c.l.b16 %v1210
    %v1243 = vunpack.c.l.b16 %v1211
    %v1244 = vpack.c.b16 %v1229, %v1228
    %v1245 = vpack.c.b16 %v1231, %v1230
    %v1246 = vpack.c.b16 %v1233, %v1232
    %v1247 = vpack.c.b16 %v1235, %v1234
    %v1248 = vpack.c.b16 %v1237, %v1236
    %v1249 = vpack.c.b16 %v1239, %v1238
    %v1250 = vpack.c.b16 %v1241, %v1240
    %v1251 = vpack.c.b16 %v1243, %v1242
    %1260 = vmatprep.subr.bf16.mxu0 0
    %1261 = vmatpush1.bf16.msra.mxu0 %v1251
    %1262 = vmatprep.subr.bf16.mxu0 0
    %1263 = vmatpush1.bf16.msra.mxu0 %v1250
    %1264 = vmatprep.subr.bf16.mxu0 0
    %1265 = vmatpush1.bf16.msra.mxu0 %v1249
    %1266 = vmatprep.subr.bf16.mxu0 0
    %1267 = vmatpush1.bf16.msra.mxu0 %v1248
    %1268 = vmatprep.subr.bf16.mxu0 0
    %1269 = vmatpush1.bf16.msra.mxu0 %v1247
    %1270 = vmatprep.subr.bf16.mxu0 0
    %1271 = vmatpush1.bf16.msra.mxu0 %v1246
    %1272 = vmatprep.subr.bf16.mxu0 0
    %1273 = vmatpush1.bf16.msra.mxu0 %v1245
    %1274 = vmatprep.subr.bf16.mxu0 0
    %1275 = vmatpush1.bf16.msra.mxu0 %v1244
    %1276 = vmatprep.subr.bf16.mxu0 0
    %1277 = vmatpush2.bf16.msra.mxu0 0
    %1278 = vmatprep.subr.bf16.mxu0 0
    %1279 = vmatpush2.bf16.msra.mxu0 0
    %1280 = vmatprep.subr.bf16.mxu0 0
    %1281 = vmatpush2.bf16.msra.mxu0 0
    %1282 = vmatprep.subr.bf16.mxu0 0
    %1283 = vmatpush2.bf16.msra.mxu0 0
    %1284 = vmatprep.subr.bf16.mxu0 0
    %1285 = vmatpush2.bf16.msra.mxu0 0
    %1286 = vmatprep.subr.bf16.mxu0 0
    %1287 = vmatpush2.bf16.msra.mxu0 0
    %1288 = vmatprep.subr.bf16.mxu0 0
    %1289 = vmatpush2.bf16.msra.mxu0 0
    %1290 = vmatprep.subr.bf16.mxu0 0
    %1291 = vmatpush2.bf16.msra.mxu0 0
    %1292 = vmatprep.mubr.bf16.mxu0 0
    %1293 = vmatmul.mubr.bf16.gmra.mxu0 %v1179
    %v1294 = vpop.f32.mrf.mxu0
    %v1295 = vadd.f32 0.0, %v1294
    %v1296 = vpop.f32.mrf.mxu0
    %v1297 = vpop.f32.mrf.mxu0
    %v1298 = vadd.f32 0.0, %v1297
    %v1299 = vpop.f32.mrf.mxu0
    %1300 = vmatprep.mubr.bf16.mxu0 0
    %1301 = vmatmul.mubr.bf16.gmra.mxu0 %v1180
    %v1302 = vpop.f32.mrf.mxu0
    %v1303 = vadd.f32 0.0, %v1302
    %v1304 = vpop.f32.mrf.mxu0
    %v1305 = vpop.f32.mrf.mxu0
    %v1306 = vadd.f32 0.0, %v1305
    %v1307 = vpop.f32.mrf.mxu0
    %1308 = vmatprep.mubr.bf16.mxu0 0
    %1309 = vmatmul.mubr.bf16.gmra.mxu0 %v1181
    %v1310 = vpop.f32.mrf.mxu0
    %v1311 = vadd.f32 0.0, %v1310
    %v1312 = vpop.f32.mrf.mxu0
    %v1313 = vpop.f32.mrf.mxu0
    %v1314 = vadd.f32 0.0, %v1313
    %v1315 = vpop.f32.mrf.mxu0
    %1316 = vmatprep.mubr.bf16.mxu0 0
    %1317 = vmatmul.mubr.bf16.gmra.mxu0 %v1182
    %v1318 = vpop.f32.mrf.mxu0
    %v1319 = vadd.f32 0.0, %v1318
    %v1320 = vpop.f32.mrf.mxu0
    %v1321 = vpop.f32.mrf.mxu0
    %v1322 = vadd.f32 0.0, %v1321
    %v1323 = vpop.f32.mrf.mxu0
    %1324 = vmatprep.mubr.bf16.mxu0 0
    %1325 = vmatmul.mubr.bf16.gmra.mxu0 %v1183
    %v1326 = vpop.f32.mrf.mxu0
    %v1327 = vadd.f32 0.0, %v1326
    %v1328 = vpop.f32.mrf.mxu0
    %v1329 = vpop.f32.mrf.mxu0
    %v1330 = vadd.f32 0.0, %v1329
    %v1331 = vpop.f32.mrf.mxu0
    %1332 = vmatprep.mubr.bf16.mxu0 0
    %1333 = vmatmul.mubr.bf16.gmra.mxu0 %v1184
    %v1334 = vpop.f32.mrf.mxu0
    %v1335 = vadd.f32 0.0, %v1334
    %v1336 = vpop.f32.mrf.mxu0
    %v1337 = vpop.f32.mrf.mxu0
    %v1338 = vadd.f32 0.0, %v1337
    %v1339 = vpop.f32.mrf.mxu0
    %1340 = vmatprep.mubr.bf16.mxu0 0
    %1341 = vmatmul.mubr.bf16.gmra.mxu0 %v1185
    %v1342 = vpop.f32.mrf.mxu0
    %v1343 = vadd.f32 0.0, %v1342
    %v1344 = vpop.f32.mrf.mxu0
    %v1345 = vpop.f32.mrf.mxu0
    %v1346 = vadd.f32 0.0, %v1345
    %v1347 = vpop.f32.mrf.mxu0
    %1348 = vmatprep.mubr.bf16.mxu0 0
    %1349 = vmatmul.mubr.bf16.gmra.mxu0 %v1186
    %v1350 = vpop.f32.mrf.mxu0
    %v1351 = vadd.f32 0.0, %v1350
    %v1352 = vpop.f32.mrf.mxu0
    %v1353 = vpop.f32.mrf.mxu0
    %v1354 = vadd.f32 0.0, %v1353
    %v1355 = vpop.f32.mrf.mxu0
    %1356 = vmatprep.mubr.bf16.mxu0 0
    %1357 = vmatmul.mubr.bf16.gmra.mxu0 %v1187
    %v1358 = vpop.f32.mrf.mxu0
    %v1359 = vadd.f32 0.0, %v1358
    %v1360 = vpop.f32.mrf.mxu0
    %v1361 = vpop.f32.mrf.mxu0
    %v1362 = vadd.f32 0.0, %v1361
    %v1363 = vpop.f32.mrf.mxu0
    %1364 = vmatprep.mubr.bf16.mxu0 0
    %1365 = vmatmul.mubr.bf16.gmra.mxu0 %v1188
    %v1366 = vpop.f32.mrf.mxu0
    %v1367 = vadd.f32 0.0, %v1366
    %v1368 = vpop.f32.mrf.mxu0
    %v1369 = vpop.f32.mrf.mxu0
    %v1370 = vadd.f32 0.0, %v1369
    %v1371 = vpop.f32.mrf.mxu0
    %1372 = vmatprep.mubr.bf16.mxu0 0
    %1373 = vmatmul.mubr.bf16.gmra.mxu0 %v1189
    %v1374 = vpop.f32.mrf.mxu0
    %v1375 = vadd.f32 0.0, %v1374
    %v1376 = vpop.f32.mrf.mxu0
    %v1377 = vpop.f32.mrf.mxu0
    %v1378 = vadd.f32 0.0, %v1377
    %v1379 = vpop.f32.mrf.mxu0
    %1380 = vmatprep.mubr.bf16.mxu0 0
    %1381 = vmatmul.mubr.bf16.gmra.mxu0 %v1190
    %v1382 = vpop.f32.mrf.mxu0
    %v1383 = vadd.f32 0.0, %v1382
    %v1384 = vpop.f32.mrf.mxu0
    %v1385 = vpop.f32.mrf.mxu0
    %v1386 = vadd.f32 0.0, %v1385
    %v1387 = vpop.f32.mrf.mxu0
    %1388 = vmatprep.mubr.bf16.mxu0 0
    %1389 = vmatmul.mubr.bf16.gmra.mxu0 %v1191
    %v1390 = vpop.f32.mrf.mxu0
    %v1391 = vadd.f32 0.0, %v1390
    %v1392 = vpop.f32.mrf.mxu0
    %v1393 = vpop.f32.mrf.mxu0
    %v1394 = vadd.f32 0.0, %v1393
    %v1395 = vpop.f32.mrf.mxu0
    %1396 = vmatprep.mubr.bf16.mxu0 0
    %1397 = vmatmul.mubr.bf16.gmra.mxu0 %v1192
    %v1398 = vpop.f32.mrf.mxu0
    %v1399 = vadd.f32 0.0, %v1398
    %v1400 = vpop.f32.mrf.mxu0
    %v1401 = vpop.f32.mrf.mxu0
    %v1402 = vadd.f32 0.0, %v1401
    %v1403 = vpop.f32.mrf.mxu0
    %1404 = vmatprep.mubr.bf16.mxu0 0
    %1405 = vmatmul.mubr.bf16.gmra.mxu0 %v1193
    %v1406 = vpop.f32.mrf.mxu0
    %v1407 = vadd.f32 0.0, %v1406
    %v1408 = vpop.f32.mrf.mxu0
    %v1409 = vpop.f32.mrf.mxu0
    %v1410 = vadd.f32 0.0, %v1409
    %v1411 = vpop.f32.mrf.mxu0
    %1412 = vmatprep.mubr.bf16.mxu0 0
    %1413 = vmatmul.mubr.bf16.gmra.mxu0 %v1194
    %v1414 = vpop.f32.mrf.mxu0
    %v1415 = vadd.f32 0.0, %v1414
    %v1416 = vpop.f32.mrf.mxu0
    %v1417 = vpop.f32.mrf.mxu0
    %v1418 = vadd.f32 0.0, %v1417
    %v1419 = vpop.f32.mrf.mxu0
    %1420 = vdwg.mxu0
    %1421 = vst [vmem:[#allocation2] sm:$0xff] %v1295
    %1422 = vst [vmem:[#allocation2 + $0x8] sm:$0xff] %v1298
    %1423 = vst [vmem:[#allocation2 + $0x10] sm:$0xff] %v1303
    %1424 = vst [vmem:[#allocation2 + $0x18] sm:$0xff] %v1306
    %1425 = vst [vmem:[#allocation2 + $0x20] sm:$0xff] %v1311
    %1426 = vst [vmem:[#allocation2 + $0x28] sm:$0xff] %v1314
    %1427 = vst [vmem:[#allocation2 + $0x30] sm:$0xff] %v1319
    %1428 = vst [vmem:[#allocation2 + $0x38] sm:$0xff] %v1322
    %1429 = vst [vmem:[#allocation2 + $0x40] sm:$0xff] %v1327
    %1430 = vst [vmem:[#allocation2 + $0x48] sm:$0xff] %v1330
    %1431 = vst [vmem:[#allocation2 + $0x50] sm:$0xff] %v1335
    %1432 = vst [vmem:[#allocation2 + $0x58] sm:$0xff] %v1338
    %1433 = vst [vmem:[#allocation2 + $0x60] sm:$0xff] %v1343
    %1434 = vst [vmem:[#allocation2 + $0x68] sm:$0xff] %v1346
    %1435 = vst [vmem:[#allocation2 + $0x70] sm:$0xff] %v1351
    %1436 = vst [vmem:[#allocation2 + $0x78] sm:$0xff] %v1354
    %1437 = vst [vmem:[#allocation2 + $0x80] sm:$0xff] %v1359
    %1438 = vst [vmem:[#allocation2 + $0x88] sm:$0xff] %v1362
    %1439 = vst [vmem:[#allocation2 + $0x90] sm:$0xff] %v1367
    %1440 = vst [vmem:[#allocation2 + $0x98] sm:$0xff] %v1370
    %1441 = vst [vmem:[#allocation2 + $0xa0] sm:$0xff] %v1375
    %1442 = vst [vmem:[#allocation2 + $0xa8] sm:$0xff] %v1378
    %1443 = vst [vmem:[#allocation2 + $0xb0] sm:$0xff] %v1383
    %1444 = vst [vmem:[#allocation2 + $0xb8] sm:$0xff] %v1386
    %1445 = vst [vmem:[#allocation2 + $0xc0] sm:$0xff] %v1391
    %1446 = vst [vmem:[#allocation2 + $0xc8] sm:$0xff] %v1394
    %1447 = vst [vmem:[#allocation2 + $0xd0] sm:$0xff] %v1399
    %1448 = vst [vmem:[#allocation2 + $0xd8] sm:$0xff] %v1402
    %1449 = vst [vmem:[#allocation2 + $0xe0] sm:$0xff] %v1407
    %1450 = vst [vmem:[#allocation2 + $0xe8] sm:$0xff] %v1410
    %1451 = vst [vmem:[#allocation2 + $0xf0] sm:$0xff] %v1415
    %1452 = vst [vmem:[#allocation2 + $0xf8] sm:$0xff] %v1418
    %v1453 = vld [vmem:[#allocation8] sm:$0xf]
    %v1454 = vld [vmem:[#allocation8 + $0x4] sm:$0xf]
    %v1455 = vld [vmem:[#allocation8 + $0x8] sm:$0xf]
    %v1456 = vld [vmem:[#allocation8 + $0xc] sm:$0xf]
    %v1457 = vld [vmem:[#allocation8 + $0x10] sm:$0xf]
    %v1458 = vld [vmem:[#allocation8 + $0x14] sm:$0xf]
    %v1459 = vld [vmem:[#allocation8 + $0x18] sm:$0xf]
    %v1460 = vld [vmem:[#allocation8 + $0x1c] sm:$0xf]
    %v1461 = vld [vmem:[#allocation8 + $0x20] sm:$0xf]
    %v1462 = vld [vmem:[#allocation8 + $0x24] sm:$0xf]
    %v1463 = vld [vmem:[#allocation8 + $0x28] sm:$0xf]
    %v1464 = vld [vmem:[#allocation8 + $0x2c] sm:$0xf]
    %v1465 = vld [vmem:[#allocation8 + $0x30] sm:$0xf]
    %v1466 = vld [vmem:[#allocation8 + $0x34] sm:$0xf]
    %v1467 = vld [vmem:[#allocation8 + $0x38] sm:$0xf]
    %v1468 = vld [vmem:[#allocation8 + $0x3c] sm:$0xf]
    %v1485 = vunpack.c.l.b16 %v1453
    %v1486 = vunpack.c.l.b16 %v1454
    %v1487 = vunpack.c.l.b16 %v1455
    %v1488 = vunpack.c.l.b16 %v1456
    %v1489 = vunpack.c.l.b16 %v1457
    %v1490 = vunpack.c.l.b16 %v1458
    %v1491 = vunpack.c.l.b16 %v1459
    %v1492 = vunpack.c.l.b16 %v1460
    %v1493 = vunpack.c.l.b16 %v1461
    %v1494 = vunpack.c.l.b16 %v1462
    %v1495 = vunpack.c.l.b16 %v1463
    %v1496 = vunpack.c.l.b16 %v1464
    %v1497 = vunpack.c.l.b16 %v1465
    %v1498 = vunpack.c.l.b16 %v1466
    %v1499 = vunpack.c.l.b16 %v1467
    %v1500 = vunpack.c.l.b16 %v1468
    %v1501 = vpack.c.b16 %v1486, %v1485
    %v1502 = vpack.c.b16 %v1488, %v1487
    %v1503 = vpack.c.b16 %v1490, %v1489
    %v1504 = vpack.c.b16 %v1492, %v1491
    %v1505 = vpack.c.b16 %v1494, %v1493
    %v1506 = vpack.c.b16 %v1496, %v1495
    %v1507 = vpack.c.b16 %v1498, %v1497
    %v1508 = vpack.c.b16 %v1500, %v1499
    %1517 = vmatprep.subr.bf16.mxu0 0
    %1518 = vmatpush1.bf16.msra.mxu0 %v1508
    %1519 = vmatprep.subr.bf16.mxu0 0
    %1520 = vmatpush1.bf16.msra.mxu0 %v1507
    %1521 = vmatprep.subr.bf16.mxu0 0
    %1522 = vmatpush1.bf16.msra.mxu0 %v1506
    %1523 = vmatprep.subr.bf16.mxu0 0
    %1524 = vmatpush1.bf16.msra.mxu0 %v1505
    %1525 = vmatprep.subr.bf16.mxu0 0
    %1526 = vmatpush1.bf16.msra.mxu0 %v1504
    %1527 = vmatprep.subr.bf16.mxu0 0
    %1528 = vmatpush1.bf16.msra.mxu0 %v1503
    %1529 = vmatprep.subr.bf16.mxu0 0
    %1530 = vmatpush1.bf16.msra.mxu0 %v1502
    %1531 = vmatprep.subr.bf16.mxu0 0
    %1532 = vmatpush1.bf16.msra.mxu0 %v1501
    %1533 = vmatprep.subr.bf16.mxu0 0
    %1534 = vmatpush2.bf16.msra.mxu0 0
    %1535 = vmatprep.subr.bf16.mxu0 0
    %1536 = vmatpush2.bf16.msra.mxu0 0
    %1537 = vmatprep.subr.bf16.mxu0 0
    %1538 = vmatpush2.bf16.msra.mxu0 0
    %1539 = vmatprep.subr.bf16.mxu0 0
    %1540 = vmatpush2.bf16.msra.mxu0 0
    %1541 = vmatprep.subr.bf16.mxu0 0
    %1542 = vmatpush2.bf16.msra.mxu0 0
    %1543 = vmatprep.subr.bf16.mxu0 0
    %1544 = vmatpush2.bf16.msra.mxu0 0
    %1545 = vmatprep.subr.bf16.mxu0 0
    %1546 = vmatpush2.bf16.msra.mxu0 0
    %1547 = vmatprep.subr.bf16.mxu0 0
    %1548 = vmatpush2.bf16.msra.mxu0 0
    %1549 = vmatprep.mubr.bf16.mxu0 0
    %1550 = vmatmul.mubr.bf16.gmra.mxu0 %v1179
    %v1551 = vpop.f32.mrf.mxu0
    %v1552 = vadd.f32 0.0, %v1551
    %v1553 = vpop.f32.mrf.mxu0
    %v1554 = vpop.f32.mrf.mxu0
    %v1555 = vadd.f32 0.0, %v1554
    %v1556 = vpop.f32.mrf.mxu0
    %1557 = vmatprep.mubr.bf16.mxu0 0
    %1558 = vmatmul.mubr.bf16.gmra.mxu0 %v1180
    %v1559 = vpop.f32.mrf.mxu0
    %v1560 = vadd.f32 0.0, %v1559
    %v1561 = vpop.f32.mrf.mxu0
    %v1562 = vpop.f32.mrf.mxu0
    %v1563 = vadd.f32 0.0, %v1562
    %v1564 = vpop.f32.mrf.mxu0
    %1565 = vmatprep.mubr.bf16.mxu0 0
    %1566 = vmatmul.mubr.bf16.gmra.mxu0 %v1181
    %v1567 = vpop.f32.mrf.mxu0
    %v1568 = vadd.f32 0.0, %v1567
    %v1569 = vpop.f32.mrf.mxu0
    %v1570 = vpop.f32.mrf.mxu0
    %v1571 = vadd.f32 0.0, %v1570
    %v1572 = vpop.f32.mrf.mxu0
    %1573 = vmatprep.mubr.bf16.mxu0 0
    %1574 = vmatmul.mubr.bf16.gmra.mxu0 %v1182
    %v1575 = vpop.f32.mrf.mxu0
    %v1576 = vadd.f32 0.0, %v1575
    %v1577 = vpop.f32.mrf.mxu0
    %v1578 = vpop.f32.mrf.mxu0
    %v1579 = vadd.f32 0.0, %v1578
    %v1580 = vpop.f32.mrf.mxu0
    %1581 = vmatprep.mubr.bf16.mxu0 0
    %1582 = vmatmul.mubr.bf16.gmra.mxu0 %v1183
    %v1583 = vpop.f32.mrf.mxu0
    %v1584 = vadd.f32 0.0, %v1583
    %v1585 = vpop.f32.mrf.mxu0
    %v1586 = vpop.f32.mrf.mxu0
    %v1587 = vadd.f32 0.0, %v1586
    %v1588 = vpop.f32.mrf.mxu0
    %1589 = vmatprep.mubr.bf16.mxu0 0
    %1590 = vmatmul.mubr.bf16.gmra.mxu0 %v1184
    %v1591 = vpop.f32.mrf.mxu0
    %v1592 = vadd.f32 0.0, %v1591
    %v1593 = vpop.f32.mrf.mxu0
    %v1594 = vpop.f32.mrf.mxu0
    %v1595 = vadd.f32 0.0, %v1594
    %v1596 = vpop.f32.mrf.mxu0
    %1597 = vmatprep.mubr.bf16.mxu0 0
    %1598 = vmatmul.mubr.bf16.gmra.mxu0 %v1185
    %v1599 = vpop.f32.mrf.mxu0
    %v1600 = vadd.f32 0.0, %v1599
    %v1601 = vpop.f32.mrf.mxu0
    %v1602 = vpop.f32.mrf.mxu0
    %v1603 = vadd.f32 0.0, %v1602
    %v1604 = vpop.f32.mrf.mxu0
    %1605 = vmatprep.mubr.bf16.mxu0 0
    %1606 = vmatmul.mubr.bf16.gmra.mxu0 %v1186
    %v1607 = vpop.f32.mrf.mxu0
    %v1608 = vadd.f32 0.0, %v1607
    %v1609 = vpop.f32.mrf.mxu0
    %v1610 = vpop.f32.mrf.mxu0
    %v1611 = vadd.f32 0.0, %v1610
    %v1612 = vpop.f32.mrf.mxu0
    %1613 = vmatprep.mubr.bf16.mxu0 0
    %1614 = vmatmul.mubr.bf16.gmra.mxu0 %v1187
    %v1615 = vpop.f32.mrf.mxu0
    %v1616 = vadd.f32 0.0, %v1615
    %v1617 = vpop.f32.mrf.mxu0
    %v1618 = vpop.f32.mrf.mxu0
    %v1619 = vadd.f32 0.0, %v1618
    %v1620 = vpop.f32.mrf.mxu0
    %1621 = vmatprep.mubr.bf16.mxu0 0
    %1622 = vmatmul.mubr.bf16.gmra.mxu0 %v1188
    %v1623 = vpop.f32.mrf.mxu0
    %v1624 = vadd.f32 0.0, %v1623
    %v1625 = vpop.f32.mrf.mxu0
    %v1626 = vpop.f32.mrf.mxu0
    %v1627 = vadd.f32 0.0, %v1626
    %v1628 = vpop.f32.mrf.mxu0
    %1629 = vmatprep.mubr.bf16.mxu0 0
    %1630 = vmatmul.mubr.bf16.gmra.mxu0 %v1189
    %v1631 = vpop.f32.mrf.mxu0
    %v1632 = vadd.f32 0.0, %v1631
    %v1633 = vpop.f32.mrf.mxu0
    %v1634 = vpop.f32.mrf.mxu0
    %v1635 = vadd.f32 0.0, %v1634
    %v1636 = vpop.f32.mrf.mxu0
    %1637 = vmatprep.mubr.bf16.mxu0 0
    %1638 = vmatmul.mubr.bf16.gmra.mxu0 %v1190
    %v1639 = vpop.f32.mrf.mxu0
    %v1640 = vadd.f32 0.0, %v1639
    %v1641 = vpop.f32.mrf.mxu0
    %v1642 = vpop.f32.mrf.mxu0
    %v1643 = vadd.f32 0.0, %v1642
    %v1644 = vpop.f32.mrf.mxu0
    %1645 = vmatprep.mubr.bf16.mxu0 0
    %1646 = vmatmul.mubr.bf16.gmra.mxu0 %v1191
    %v1647 = vpop.f32.mrf.mxu0
    %v1648 = vadd.f32 0.0, %v1647
    %v1649 = vpop.f32.mrf.mxu0
    %v1650 = vpop.f32.mrf.mxu0
    %v1651 = vadd.f32 0.0, %v1650
    %v1652 = vpop.f32.mrf.mxu0
    %1653 = vmatprep.mubr.bf16.mxu0 0
    %1654 = vmatmul.mubr.bf16.gmra.mxu0 %v1192
    %v1655 = vpop.f32.mrf.mxu0
    %v1656 = vadd.f32 0.0, %v1655
    %v1657 = vpop.f32.mrf.mxu0
    %v1658 = vpop.f32.mrf.mxu0
    %v1659 = vadd.f32 0.0, %v1658
    %v1660 = vpop.f32.mrf.mxu0
    %1661 = vmatprep.mubr.bf16.mxu0 0
    %1662 = vmatmul.mubr.bf16.gmra.mxu0 %v1193
    %v1663 = vpop.f32.mrf.mxu0
    %v1664 = vadd.f32 0.0, %v1663
    %v1665 = vpop.f32.mrf.mxu0
    %v1666 = vpop.f32.mrf.mxu0
    %v1667 = vadd.f32 0.0, %v1666
    %v1668 = vpop.f32.mrf.mxu0
    %1669 = vmatprep.mubr.bf16.mxu0 0
    %1670 = vmatmul.mubr.bf16.gmra.mxu0 %v1194
    %v1671 = vpop.f32.mrf.mxu0
    %v1672 = vpop.f32.mrf.mxu0
    %v1673 = vpop.f32.mrf.mxu0
    %v1674 = vpop.f32.mrf.mxu0
    %1675 = vdwg.mxu0
    %v1676 = vld [vmem:[#allocation2 + $0x10] sm:$0xff]
    %v1677 = vld [vmem:[#allocation2 + $0x18] sm:$0xff]
    %v1678 = vld [vmem:[#allocation2 + $0x20] sm:$0xff]
    %v1679 = vld [vmem:[#allocation2 + $0x28] sm:$0xff]
    %v1680 = vld [vmem:[#allocation2 + $0x30] sm:$0xff]
    %v1681 = vld [vmem:[#allocation2 + $0x38] sm:$0xff]
    %v1682 = vld [vmem:[#allocation2 + $0x40] sm:$0xff]
    %v1683 = vld [vmem:[#allocation2 + $0x48] sm:$0xff]
    %v1684 = vld [vmem:[#allocation2 + $0x50] sm:$0xff]
    %v1685 = vld [vmem:[#allocation2 + $0x58] sm:$0xff]
    %v1686 = vld [vmem:[#allocation2 + $0x60] sm:$0xff]
    %v1687 = vld [vmem:[#allocation2 + $0x68] sm:$0xff]
    %v1688 = vld [vmem:[#allocation2 + $0x70] sm:$0xff]
    %v1689 = vld [vmem:[#allocation2 + $0x78] sm:$0xff]
    %v1690 = vld [vmem:[#allocation2 + $0x80] sm:$0xff]
    %v1691 = vld [vmem:[#allocation2 + $0x88] sm:$0xff]
    %v1692 = vld [vmem:[#allocation2 + $0x90] sm:$0xff]
    %v1693 = vld [vmem:[#allocation2 + $0x98] sm:$0xff]
    %v1694 = vld [vmem:[#allocation2 + $0xa0] sm:$0xff]
    %v1695 = vld [vmem:[#allocation2 + $0xa8] sm:$0xff]
    %v1696 = vld [vmem:[#allocation2 + $0xb0] sm:$0xff]
    %v1697 = vld [vmem:[#allocation2 + $0xb8] sm:$0xff]
    %v1698 = vld [vmem:[#allocation2 + $0xc0] sm:$0xff]
    %v1699 = vld [vmem:[#allocation2 + $0xc8] sm:$0xff]
    %v1700 = vld [vmem:[#allocation2 + $0xd0] sm:$0xff]
    %v1701 = vld [vmem:[#allocation2 + $0xd8] sm:$0xff]
    %v1702 = vld [vmem:[#allocation2 + $0xe0] sm:$0xff]
    %v1703 = vld [vmem:[#allocation2 + $0xe8] sm:$0xff]
    %v1704 = vld [vmem:[#allocation2 + $0xf0] sm:$0xff]
    %v1705 = vld [vmem:[#allocation2 + $0xf8] sm:$0xff]
    %v1706 = vadd.f32 %v1676, %v1552
    %v1707 = vadd.f32 %v1677, %v1555
    %v1708 = vadd.f32 %v1678, %v1560
    %v1709 = vadd.f32 %v1679, %v1563
    %v1710 = vadd.f32 %v1680, %v1568
    %v1711 = vadd.f32 %v1681, %v1571
    %v1712 = vadd.f32 %v1682, %v1576
    %v1713 = vadd.f32 %v1683, %v1579
    %v1714 = vadd.f32 %v1684, %v1584
    %v1715 = vadd.f32 %v1685, %v1587
    %v1716 = vadd.f32 %v1686, %v1592
    %v1717 = vadd.f32 %v1687, %v1595
    %v1718 = vadd.f32 %v1688, %v1600
    %v1719 = vadd.f32 %v1689, %v1603
    %v1720 = vadd.f32 %v1690, %v1608
    %v1721 = vadd.f32 %v1691, %v1611
    %v1722 = vadd.f32 %v1692, %v1616
    %v1723 = vadd.f32 %v1693, %v1619
    %v1724 = vadd.f32 %v1694, %v1624
    %v1725 = vadd.f32 %v1695, %v1627
    %v1726 = vadd.f32 %v1696, %v1632
    %v1727 = vadd.f32 %v1697, %v1635
    %v1728 = vadd.f32 %v1698, %v1640
    %v1729 = vadd.f32 %v1699, %v1643
    %v1730 = vadd.f32 %v1700, %v1648
    %v1731 = vadd.f32 %v1701, %v1651
    %v1732 = vadd.f32 %v1702, %v1656
    %v1733 = vadd.f32 %v1703, %v1659
    %v1734 = vadd.f32 %v1704, %v1664
    %v1735 = vadd.f32 %v1705, %v1667
    %1736 = vst [vmem:[#allocation2 + $0x10] sm:$0xff] %v1706
    %1737 = vst [vmem:[#allocation2 + $0x18] sm:$0xff] %v1707
    %1738 = vst [vmem:[#allocation2 + $0x20] sm:$0xff] %v1708
    %1739 = vst [vmem:[#allocation2 + $0x28] sm:$0xff] %v1709
    %1740 = vst [vmem:[#allocation2 + $0x30] sm:$0xff] %v1710
    %1741 = vst [vmem:[#allocation2 + $0x38] sm:$0xff] %v1711
    %1742 = vst [vmem:[#allocation2 + $0x40] sm:$0xff] %v1712
    %1743 = vst [vmem:[#allocation2 + $0x48] sm:$0xff] %v1713
    %1744 = vst [vmem:[#allocation2 + $0x50] sm:$0xff] %v1714
    %1745 = vst [vmem:[#allocation2 + $0x58] sm:$0xff] %v1715
    %1746 = vst [vmem:[#allocation2 + $0x60] sm:$0xff] %v1716
    %1747 = vst [vmem:[#allocation2 + $0x68] sm:$0xff] %v1717
    %1748 = vst [vmem:[#allocation2 + $0x70] sm:$0xff] %v1718
    %1749 = vst [vmem:[#allocation2 + $0x78] sm:$0xff] %v1719
    %1750 = vst [vmem:[#allocation2 + $0x80] sm:$0xff] %v1720
    %1751 = vst [vmem:[#allocation2 + $0x88] sm:$0xff] %v1721
    %1752 = vst [vmem:[#allocation2 + $0x90] sm:$0xff] %v1722
    %1753 = vst [vmem:[#allocation2 + $0x98] sm:$0xff] %v1723
    %1754 = vst [vmem:[#allocation2 + $0xa0] sm:$0xff] %v1724
    %1755 = vst [vmem:[#allocation2 + $0xa8] sm:$0xff] %v1725
    %1756 = vst [vmem:[#allocation2 + $0xb0] sm:$0xff] %v1726
    %1757 = vst [vmem:[#allocation2 + $0xb8] sm:$0xff] %v1727
    %1758 = vst [vmem:[#allocation2 + $0xc0] sm:$0xff] %v1728
    %1759 = vst [vmem:[#allocation2 + $0xc8] sm:$0xff] %v1729
    %1760 = vst [vmem:[#allocation2 + $0xd0] sm:$0xff] %v1730
    %1761 = vst [vmem:[#allocation2 + $0xd8] sm:$0xff] %v1731
    %1762 = vst [vmem:[#allocation2 + $0xe0] sm:$0xff] %v1732
    %1763 = vst [vmem:[#allocation2 + $0xe8] sm:$0xff] %v1733
    %1764 = vst [vmem:[#allocation2 + $0xf0] sm:$0xff] %v1734
    %1765 = vst [vmem:[#allocation2 + $0xf8] sm:$0xff] %v1735
    %s1766 = scalar_lea.vmem [#allocation8], 128
    %v1767 = vld [vmem:[%s1766] sm:$0xf]
    %v1768 = vld [vmem:[%s1766 + $0x4] sm:$0xf]
    %v1769 = vld [vmem:[%s1766 + $0x8] sm:$0xf]
    %v1770 = vld [vmem:[%s1766 + $0xc] sm:$0xf]
    %v1771 = vld [vmem:[%s1766 + $0x10] sm:$0xf]
    %v1772 = vld [vmem:[%s1766 + $0x14] sm:$0xf]
    %v1773 = vld [vmem:[%s1766 + $0x18] sm:$0xf]
    %v1774 = vld [vmem:[%s1766 + $0x1c] sm:$0xf]
    %v1775 = vld [vmem:[%s1766 + $0x20] sm:$0xf]
    %v1776 = vld [vmem:[%s1766 + $0x24] sm:$0xf]
    %v1777 = vld [vmem:[%s1766 + $0x28] sm:$0xf]
    %v1778 = vld [vmem:[%s1766 + $0x2c] sm:$0xf]
    %v1779 = vld [vmem:[%s1766 + $0x30] sm:$0xf]
    %v1780 = vld [vmem:[%s1766 + $0x34] sm:$0xf]
    %v1781 = vld [vmem:[%s1766 + $0x38] sm:$0xf]
    %v1782 = vld [vmem:[%s1766 + $0x3c] sm:$0xf]
    %v1799 = vunpack.c.l.b16 %v1767
    %v1800 = vunpack.c.l.b16 %v1768
    %v1801 = vunpack.c.l.b16 %v1769
    %v1802 = vunpack.c.l.b16 %v1770
    %v1803 = vunpack.c.l.b16 %v1771
    %v1804 = vunpack.c.l.b16 %v1772
    %v1805 = vunpack.c.l.b16 %v1773
    %v1806 = vunpack.c.l.b16 %v1774
    %v1807 = vunpack.c.l.b16 %v1775
    %v1808 = vunpack.c.l.b16 %v1776
    %v1809 = vunpack.c.l.b16 %v1777
    %v1810 = vunpack.c.l.b16 %v1778
    %v1811 = vunpack.c.l.b16 %v1779
    %v1812 = vunpack.c.l.b16 %v1780
    %v1813 = vunpack.c.l.b16 %v1781
    %v1814 = vunpack.c.l.b16 %v1782
    %v1815 = vpack.c.b16 %v1800, %v1799
    %v1816 = vpack.c.b16 %v1802, %v1801
    %v1817 = vpack.c.b16 %v1804, %v1803
    %v1818 = vpack.c.b16 %v1806, %v1805
    %v1819 = vpack.c.b16 %v1808, %v1807
    %v1820 = vpack.c.b16 %v1810, %v1809
    %v1821 = vpack.c.b16 %v1812, %v1811
    %v1822 = vpack.c.b16 %v1814, %v1813
    %1831 = vmatprep.subr.bf16.mxu0 0
    %1832 = vmatpush1.bf16.msra.mxu0 %v1822
    %1833 = vmatprep.subr.bf16.mxu0 0
    %1834 = vmatpush1.bf16.msra.mxu0 %v1821
    %1835 = vmatprep.subr.bf16.mxu0 0
    %1836 = vmatpush1.bf16.msra.mxu0 %v1820
    %1837 = vmatprep.subr.bf16.mxu0 0
    %1838 = vmatpush1.bf16.msra.mxu0 %v1819
    %1839 = vmatprep.subr.bf16.mxu0 0
    %1840 = vmatpush1.bf16.msra.mxu0 %v1818
    %1841 = vmatprep.subr.bf16.mxu0 0
    %1842 = vmatpush1.bf16.msra.mxu0 %v1817
    %1843 = vmatprep.subr.bf16.mxu0 0
    %1844 = vmatpush1.bf16.msra.mxu0 %v1816
    %1845 = vmatprep.subr.bf16.mxu0 0
    %1846 = vmatpush1.bf16.msra.mxu0 %v1815
    %1847 = vmatprep.subr.bf16.mxu0 0
    %1848 = vmatpush2.bf16.msra.mxu0 0
    %1849 = vmatprep.subr.bf16.mxu0 0
    %1850 = vmatpush2.bf16.msra.mxu0 0
    %1851 = vmatprep.subr.bf16.mxu0 0
    %1852 = vmatpush2.bf16.msra.mxu0 0
    %1853 = vmatprep.subr.bf16.mxu0 0
    %1854 = vmatpush2.bf16.msra.mxu0 0
    %1855 = vmatprep.subr.bf16.mxu0 0
    %1856 = vmatpush2.bf16.msra.mxu0 0
    %1857 = vmatprep.subr.bf16.mxu0 0
    %1858 = vmatpush2.bf16.msra.mxu0 0
    %1859 = vmatprep.subr.bf16.mxu0 0
    %1860 = vmatpush2.bf16.msra.mxu0 0
    %1861 = vmatprep.subr.bf16.mxu0 0
    %1862 = vmatpush2.bf16.msra.mxu0 0
    %1863 = vmatprep.mubr.bf16.mxu0 0
    %1864 = vmatmul.mubr.bf16.gmra.mxu0 %v1179
    %v1865 = vpop.f32.mrf.mxu0
    %v1866 = vpop.f32.mrf.mxu0
    %v1867 = vpop.f32.mrf.mxu0
    %v1868 = vpop.f32.mrf.mxu0
    %1869 = vmatprep.mubr.bf16.mxu0 0
    %1870 = vmatmul.mubr.bf16.gmra.mxu0 %v1180
    %v1871 = vpop.f32.mrf.mxu0
    %v1872 = vadd.f32 0.0, %v1871
    %v1873 = vpop.f32.mrf.mxu0
    %v1874 = vpop.f32.mrf.mxu0
    %v1875 = vadd.f32 0.0, %v1874
    %v1876 = vpop.f32.mrf.mxu0
    %1877 = vmatprep.mubr.bf16.mxu0 0
    %1878 = vmatmul.mubr.bf16.gmra.mxu0 %v1181
    %v1879 = vpop.f32.mrf.mxu0
    %v1880 = vadd.f32 0.0, %v1879
    %v1881 = vpop.f32.mrf.mxu0
    %v1882 = vpop.f32.mrf.mxu0
    %v1883 = vadd.f32 0.0, %v1882
    %v1884 = vpop.f32.mrf.mxu0
    %1885 = vmatprep.mubr.bf16.mxu0 0
    %1886 = vmatmul.mubr.bf16.gmra.mxu0 %v1182
    %v1887 = vpop.f32.mrf.mxu0
    %v1888 = vadd.f32 0.0, %v1887
    %v1889 = vpop.f32.mrf.mxu0
    %v1890 = vpop.f32.mrf.mxu0
    %v1891 = vadd.f32 0.0, %v1890
    %v1892 = vpop.f32.mrf.mxu0
    %1893 = vmatprep.mubr.bf16.mxu0 0
    %1894 = vmatmul.mubr.bf16.gmra.mxu0 %v1183
    %v1895 = vpop.f32.mrf.mxu0
    %v1896 = vadd.f32 0.0, %v1895
    %v1897 = vpop.f32.mrf.mxu0
    %v1898 = vpop.f32.mrf.mxu0
    %v1899 = vadd.f32 0.0, %v1898
    %v1900 = vpop.f32.mrf.mxu0
    %1901 = vmatprep.mubr.bf16.mxu0 0
    %1902 = vmatmul.mubr.bf16.gmra.mxu0 %v1184
    %v1903 = vpop.f32.mrf.mxu0
    %v1904 = vadd.f32 0.0, %v1903
    %v1905 = vpop.f32.mrf.mxu0
    %v1906 = vpop.f32.mrf.mxu0
    %v1907 = vadd.f32 0.0, %v1906
    %v1908 = vpop.f32.mrf.mxu0
    %1909 = vmatprep.mubr.bf16.mxu0 0
    %1910 = vmatmul.mubr.bf16.gmra.mxu0 %v1185
    %v1911 = vpop.f32.mrf.mxu0
    %v1912 = vadd.f32 0.0, %v1911
    %v1913 = vpop.f32.mrf.mxu0
    %v1914 = vpop.f32.mrf.mxu0
    %v1915 = vadd.f32 0.0, %v1914
    %v1916 = vpop.f32.mrf.mxu0
    %1917 = vmatprep.mubr.bf16.mxu0 0
    %1918 = vmatmul.mubr.bf16.gmra.mxu0 %v1186
    %v1919 = vpop.f32.mrf.mxu0
    %v1920 = vadd.f32 0.0, %v1919
    %v1921 = vpop.f32.mrf.mxu0
    %v1922 = vpop.f32.mrf.mxu0
    %v1923 = vadd.f32 0.0, %v1922
    %v1924 = vpop.f32.mrf.mxu0
    %1925 = vmatprep.mubr.bf16.mxu0 0
    %1926 = vmatmul.mubr.bf16.gmra.mxu0 %v1187
    %v1927 = vpop.f32.mrf.mxu0
    %v1928 = vadd.f32 0.0, %v1927
    %v1929 = vpop.f32.mrf.mxu0
    %v1930 = vpop.f32.mrf.mxu0
    %v1931 = vadd.f32 0.0, %v1930
    %v1932 = vpop.f32.mrf.mxu0
    %1933 = vmatprep.mubr.bf16.mxu0 0
    %1934 = vmatmul.mubr.bf16.gmra.mxu0 %v1188
    %v1935 = vpop.f32.mrf.mxu0
    %v1936 = vadd.f32 0.0, %v1935
    %v1937 = vpop.f32.mrf.mxu0
    %v1938 = vpop.f32.mrf.mxu0
    %v1939 = vadd.f32 0.0, %v1938
    %v1940 = vpop.f32.mrf.mxu0
    %1941 = vmatprep.mubr.bf16.mxu0 0
    %1942 = vmatmul.mubr.bf16.gmra.mxu0 %v1189
    %v1943 = vpop.f32.mrf.mxu0
    %v1944 = vadd.f32 0.0, %v1943
    %v1945 = vpop.f32.mrf.mxu0
    %v1946 = vpop.f32.mrf.mxu0
    %v1947 = vadd.f32 0.0, %v1946
    %v1948 = vpop.f32.mrf.mxu0
    %1949 = vmatprep.mubr.bf16.mxu0 0
    %1950 = vmatmul.mubr.bf16.gmra.mxu0 %v1190
    %v1951 = vpop.f32.mrf.mxu0
    %v1952 = vadd.f32 0.0, %v1951
    %v1953 = vpop.f32.mrf.mxu0
    %v1954 = vpop.f32.mrf.mxu0
    %v1955 = vadd.f32 0.0, %v1954
    %v1956 = vpop.f32.mrf.mxu0
    %1957 = vmatprep.mubr.bf16.mxu0 0
    %1958 = vmatmul.mubr.bf16.gmra.mxu0 %v1191
    %v1959 = vpop.f32.mrf.mxu0
    %v1960 = vadd.f32 0.0, %v1959
    %v1961 = vpop.f32.mrf.mxu0
    %v1962 = vpop.f32.mrf.mxu0
    %v1963 = vadd.f32 0.0, %v1962
    %v1964 = vpop.f32.mrf.mxu0
    %1965 = vmatprep.mubr.bf16.mxu0 0
    %1966 = vmatmul.mubr.bf16.gmra.mxu0 %v1192
    %v1967 = vpop.f32.mrf.mxu0
    %v1968 = vadd.f32 0.0, %v1967
    %v1969 = vpop.f32.mrf.mxu0
    %v1970 = vpop.f32.mrf.mxu0
    %v1971 = vadd.f32 0.0, %v1970
    %v1972 = vpop.f32.mrf.mxu0
    %1973 = vmatprep.mubr.bf16.mxu0 0
    %1974 = vmatmul.mubr.bf16.gmra.mxu0 %v1193
    %v1975 = vpop.f32.mrf.mxu0
    %v1976 = vadd.f32 0.0, %v1975
    %v1977 = vpop.f32.mrf.mxu0
    %v1978 = vpop.f32.mrf.mxu0
    %v1979 = vadd.f32 0.0, %v1978
    %v1980 = vpop.f32.mrf.mxu0
    %1981 = vmatprep.mubr.bf16.mxu0 0
    %1982 = vmatmul.mubr.bf16.gmra.mxu0 %v1194
    %v1983 = vpop.f32.mrf.mxu0
    %v1984 = vadd.f32 0.0, %v1983
    %v1985 = vpop.f32.mrf.mxu0
    %v1986 = vpop.f32.mrf.mxu0
    %v1987 = vadd.f32 0.0, %v1986
    %v1988 = vpop.f32.mrf.mxu0
    %1989 = vdwg.mxu0
    %v1990 = vld [vmem:[#allocation2] sm:$0xff]
    %v1991 = vld [vmem:[#allocation2 + $0x8] sm:$0xff]
    %v1992 = vld [vmem:[#allocation2 + $0x10] sm:$0xff]
    %v1993 = vld [vmem:[#allocation2 + $0x18] sm:$0xff]
    %v1994 = vld [vmem:[#allocation2 + $0x20] sm:$0xff]
    %v1995 = vld [vmem:[#allocation2 + $0x28] sm:$0xff]
    %v1996 = vld [vmem:[#allocation2 + $0x30] sm:$0xff]
    %v1997 = vld [vmem:[#allocation2 + $0x38] sm:$0xff]
    %v1998 = vld [vmem:[#allocation2 + $0x40] sm:$0xff]
    %v1999 = vld [vmem:[#allocation2 + $0x48] sm:$0xff]
    %v2000 = vld [vmem:[#allocation2 + $0x50] sm:$0xff]
    %v2001 = vld [vmem:[#allocation2 + $0x58] sm:$0xff]
    %v2002 = vld [vmem:[#allocation2 + $0x60] sm:$0xff]
    %v2003 = vld [vmem:[#allocation2 + $0x68] sm:$0xff]
    %v2004 = vld [vmem:[#allocation2 + $0x70] sm:$0xff]
    %v2005 = vld [vmem:[#allocation2 + $0x78] sm:$0xff]
    %v2006 = vld [vmem:[#allocation2 + $0x80] sm:$0xff]
    %v2007 = vld [vmem:[#allocation2 + $0x88] sm:$0xff]
    %v2008 = vld [vmem:[#allocation2 + $0x90] sm:$0xff]
    %v2009 = vld [vmem:[#allocation2 + $0x98] sm:$0xff]
    %v2010 = vld [vmem:[#allocation2 + $0xa0] sm:$0xff]
    %v2011 = vld [vmem:[#allocation2 + $0xa8] sm:$0xff]
    %v2012 = vld [vmem:[#allocation2 + $0xb0] sm:$0xff]
    %v2013 = vld [vmem:[#allocation2 + $0xb8] sm:$0xff]
    %v2014 = vld [vmem:[#allocation2 + $0xc0] sm:$0xff]
    %v2015 = vld [vmem:[#allocation2 + $0xc8] sm:$0xff]
    %v2016 = vld [vmem:[#allocation2 + $0xd0] sm:$0xff]
    %v2017 = vld [vmem:[#allocation2 + $0xd8] sm:$0xff]
    %v2018 = vld [vmem:[#allocation2 + $0xe0] sm:$0xff]
    %v2019 = vld [vmem:[#allocation2 + $0xe8] sm:$0xff]
    %v2020 = vadd.f32 %v1990, %v1872
    %v2021 = vadd.f32 %v1991, %v1875
    %v2022 = vadd.f32 %v1992, %v1880
    %v2023 = vadd.f32 %v1993, %v1883
    %v2024 = vadd.f32 %v1994, %v1888
    %v2025 = vadd.f32 %v1995, %v1891
    %v2026 = vadd.f32 %v1996, %v1896
    %v2027 = vadd.f32 %v1997, %v1899
    %v2028 = vadd.f32 %v1998, %v1904
    %v2029 = vadd.f32 %v1999, %v1907
    %v2030 = vadd.f32 %v2000, %v1912
    %v2031 = vadd.f32 %v2001, %v1915
    %v2032 = vadd.f32 %v2002, %v1920
    %v2033 = vadd.f32 %v2003, %v1923
    %v2034 = vadd.f32 %v2004, %v1928
    %v2035 = vadd.f32 %v2005, %v1931
    %v2036 = vadd.f32 %v2006, %v1936
    %v2037 = vadd.f32 %v2007, %v1939
    %v2038 = vadd.f32 %v2008, %v1944
    %v2039 = vadd.f32 %v2009, %v1947
    %v2040 = vadd.f32 %v2010, %v1952
    %v2041 = vadd.f32 %v2011, %v1955
    %v2042 = vadd.f32 %v2012, %v1960
    %v2043 = vadd.f32 %v2013, %v1963
    %v2044 = vadd.f32 %v2014, %v1968
    %v2045 = vadd.f32 %v2015, %v1971
    %v2046 = vadd.f32 %v2016, %v1976
    %v2047 = vadd.f32 %v2017, %v1979
    %v2048 = vadd.f32 %v2018, %v1984
    %v2049 = vadd.f32 %v2019, %v1987
    %2050 = vst [vmem:[#allocation2] sm:$0xff] %v2020
    %2051 = vst [vmem:[#allocation2 + $0x8] sm:$0xff] %v2021
    %2052 = vst [vmem:[#allocation2 + $0x10] sm:$0xff] %v2022
    %2053 = vst [vmem:[#allocation2 + $0x18] sm:$0xff] %v2023
    %2054 = vst [vmem:[#allocation2 + $0x20] sm:$0xff] %v2024
    %2055 = vst [vmem:[#allocation2 + $0x28] sm:$0xff] %v2025
    %2056 = vst [vmem:[#allocation2 + $0x30] sm:$0xff] %v2026
    %2057 = vst [vmem:[#allocation2 + $0x38] sm:$0xff] %v2027
    %2058 = vst [vmem:[#allocation2 + $0x40] sm:$0xff] %v2028
    %2059 = vst [vmem:[#allocation2 + $0x48] sm:$0xff] %v2029
    %2060 = vst [vmem:[#allocation2 + $0x50] sm:$0xff] %v2030
    %2061 = vst [vmem:[#allocation2 + $0x58] sm:$0xff] %v2031
    %2062 = vst [vmem:[#allocation2 + $0x60] sm:$0xff] %v2032
    %2063 = vst [vmem:[#allocation2 + $0x68] sm:$0xff] %v2033
    %2064 = vst [vmem:[#allocation2 + $0x70] sm:$0xff] %v2034
    %2065 = vst [vmem:[#allocation2 + $0x78] sm:$0xff] %v2035
    %2066 = vst [vmem:[#allocation2 + $0x80] sm:$0xff] %v2036
    %2067 = vst [vmem:[#allocation2 + $0x88] sm:$0xff] %v2037
    %2068 = vst [vmem:[#allocation2 + $0x90] sm:$0xff] %v2038
    %2069 = vst [vmem:[#allocation2 + $0x98] sm:$0xff] %v2039
    %2070 = vst [vmem:[#allocation2 + $0xa0] sm:$0xff] %v2040
    %2071 = vst [vmem:[#allocation2 + $0xa8] sm:$0xff] %v2041
    %2072 = vst [vmem:[#allocation2 + $0xb0] sm:$0xff] %v2042
    %2073 = vst [vmem:[#allocation2 + $0xb8] sm:$0xff] %v2043
    %2074 = vst [vmem:[#allocation2 + $0xc0] sm:$0xff] %v2044
    %2075 = vst [vmem:[#allocation2 + $0xc8] sm:$0xff] %v2045
    %2076 = vst [vmem:[#allocation2 + $0xd0] sm:$0xff] %v2046
    %2077 = vst [vmem:[#allocation2 + $0xd8] sm:$0xff] %v2047
    %2078 = vst [vmem:[#allocation2 + $0xe0] sm:$0xff] %v2048
    %2079 = vst [vmem:[#allocation2 + $0xe8] sm:$0xff] %v2049
    %v2080 = vld [vmem:[#allocation2] sm:$0xff]
    %v2081 = vld [vmem:[#allocation2 + $0x8] sm:$0xff]
    %v2082 = vld [vmem:[#allocation2 + $0x10] sm:$0xff]
    %v2083 = vld [vmem:[#allocation2 + $0x18] sm:$0xff]
    %v2084 = vld [vmem:[#allocation2 + $0x20] sm:$0xff]
    %v2085 = vld [vmem:[#allocation2 + $0x28] sm:$0xff]
    %v2086 = vld [vmem:[#allocation2 + $0x30] sm:$0xff]
    %v2087 = vld [vmem:[#allocation2 + $0x38] sm:$0xff]
    %v2088 = vld [vmem:[#allocation2 + $0x40] sm:$0xff]
    %v2089 = vld [vmem:[#allocation2 + $0x48] sm:$0xff]
    %v2090 = vld [vmem:[#allocation2 + $0x50] sm:$0xff]
    %v2091 = vld [vmem:[#allocation2 + $0x58] sm:$0xff]
    %v2092 = vld [vmem:[#allocation2 + $0x60] sm:$0xff]
    %v2093 = vld [vmem:[#allocation2 + $0x68] sm:$0xff]
    %v2094 = vld [vmem:[#allocation2 + $0x70] sm:$0xff]
    %v2095 = vld [vmem:[#allocation2 + $0x78] sm:$0xff]
    %v2096 = vld [vmem:[#allocation2 + $0x80] sm:$0xff]
    %v2097 = vld [vmem:[#allocation2 + $0x88] sm:$0xff]
    %v2098 = vld [vmem:[#allocation2 + $0x90] sm:$0xff]
    %v2099 = vld [vmem:[#allocation2 + $0x98] sm:$0xff]
    %v2100 = vld [vmem:[#allocation2 + $0xa0] sm:$0xff]
    %v2101 = vld [vmem:[#allocation2 + $0xa8] sm:$0xff]
    %v2102 = vld [vmem:[#allocation2 + $0xb0] sm:$0xff]
    %v2103 = vld [vmem:[#allocation2 + $0xb8] sm:$0xff]
    %v2104 = vld [vmem:[#allocation2 + $0xc0] sm:$0xff]
    %v2105 = vld [vmem:[#allocation2 + $0xc8] sm:$0xff]
    %v2106 = vld [vmem:[#allocation2 + $0xd0] sm:$0xff]
    %v2107 = vld [vmem:[#allocation2 + $0xd8] sm:$0xff]
    %v2108 = vld [vmem:[#allocation2 + $0xe0] sm:$0xff]
    %v2109 = vld [vmem:[#allocation2 + $0xe8] sm:$0xff]
    %v2110 = vld [vmem:[#allocation2 + $0xf0] sm:$0xff]
    %v2111 = vld [vmem:[#allocation2 + $0xf8] sm:$0xff]
    %v2112 = vld [vmem:[%s4] sm:$0x1]
    %v2114 = vlaneseq
    %v2115 = vshrl.u32 %v2114, 7
    %v2116 = vsub.s32 0, %v2115
    %v2117 = vrot.slane %v2112, %v2116
    %v2119 = vadd.f32 %v2080, %v2117
    %v2120 = vadd.f32 %v2081, %v2117
    %v2121 = vadd.f32 %v2082, %v2117
    %v2122 = vadd.f32 %v2083, %v2117
    %v2123 = vadd.f32 %v2084, %v2117
    %v2124 = vadd.f32 %v2085, %v2117
    %v2125 = vadd.f32 %v2086, %v2117
    %v2126 = vadd.f32 %v2087, %v2117
    %v2127 = vadd.f32 %v2088, %v2117
    %v2128 = vadd.f32 %v2089, %v2117
    %v2129 = vadd.f32 %v2090, %v2117
    %v2130 = vadd.f32 %v2091, %v2117
    %v2131 = vadd.f32 %v2092, %v2117
    %v2132 = vadd.f32 %v2093, %v2117
    %v2133 = vadd.f32 %v2094, %v2117
    %v2134 = vadd.f32 %v2095, %v2117
    %v2135 = vadd.f32 %v2096, %v2117
    %v2136 = vadd.f32 %v2097, %v2117
    %v2137 = vadd.f32 %v2098, %v2117
    %v2138 = vadd.f32 %v2099, %v2117
    %v2139 = vadd.f32 %v2100, %v2117
    %v2140 = vadd.f32 %v2101, %v2117
    %v2141 = vadd.f32 %v2102, %v2117
    %v2142 = vadd.f32 %v2103, %v2117
    %v2143 = vadd.f32 %v2104, %v2117
    %v2144 = vadd.f32 %v2105, %v2117
    %v2145 = vadd.f32 %v2106, %v2117
    %v2146 = vadd.f32 %v2107, %v2117
    %v2147 = vadd.f32 %v2108, %v2117
    %v2148 = vadd.f32 %v2109, %v2117
    %v2149 = vadd.f32 %v2110, %v2117
    %v2150 = vadd.f32 %v2111, %v2117
    %v2151 = vunpack.c.l.bf16 %v63
    %v2152 = vunpack.c.l.bf16 %v64
    %v2153 = vunpack.c.l.bf16 %v65
    %v2154 = vunpack.c.l.bf16 %v66
    %v2155 = vunpack.c.l.bf16 %v67
    %v2156 = vunpack.c.l.bf16 %v68
    %v2157 = vunpack.c.l.bf16 %v69
    %v2158 = vunpack.c.l.bf16 %v70
    %v2159 = vunpack.c.l.bf16 %v71
    %v2160 = vunpack.c.l.bf16 %v72
    %v2161 = vunpack.c.l.bf16 %v73
    %v2162 = vunpack.c.l.bf16 %v74
    %v2163 = vunpack.c.l.bf16 %v75
    %v2164 = vunpack.c.l.bf16 %v76
    %v2165 = vunpack.c.l.bf16 %v77
    %v2166 = vunpack.c.l.bf16 %v78
    %v2167 = vunpack.c.l.bf16 %v79
    %v2168 = vunpack.c.l.bf16 %v80
    %v2169 = vunpack.c.l.bf16 %v81
    %v2170 = vunpack.c.l.bf16 %v82
    %v2171 = vunpack.c.l.bf16 %v83
    %v2172 = vunpack.c.l.bf16 %v84
    %v2173 = vunpack.c.l.bf16 %v85
    %v2174 = vunpack.c.l.bf16 %v86
    %v2175 = vunpack.c.l.bf16 %v87
    %v2176 = vunpack.c.l.bf16 %v88
    %v2177 = vunpack.c.l.bf16 %v89
    %v2178 = vunpack.c.l.bf16 %v90
    %v2179 = vunpack.c.l.bf16 %v91
    %v2180 = vunpack.c.l.bf16 %v92
    %v2181 = vunpack.c.l.bf16 %v93
    %v2182 = vunpack.c.l.bf16 %v94
    %v2183 = vadd.f32 %v2119, %v2151
    %v2184 = vadd.f32 %v2120, %v2152
    %v2185 = vadd.f32 %v2121, %v2153
    %v2186 = vadd.f32 %v2122, %v2154
    %v2187 = vadd.f32 %v2123, %v2155
    %v2188 = vadd.f32 %v2124, %v2156
    %v2189 = vadd.f32 %v2125, %v2157
    %v2190 = vadd.f32 %v2126, %v2158
    %v2191 = vadd.f32 %v2127, %v2159
    %v2192 = vadd.f32 %v2128, %v2160
    %v2193 = vadd.f32 %v2129, %v2161
    %v2194 = vadd.f32 %v2130, %v2162
    %v2195 = vadd.f32 %v2131, %v2163
    %v2196 = vadd.f32 %v2132, %v2164
    %v2197 = vadd.f32 %v2133, %v2165
    %v2198 = vadd.f32 %v2134, %v2166
    %v2199 = vadd.f32 %v2135, %v2167
    %v2200 = vadd.f32 %v2136, %v2168
    %v2201 = vadd.f32 %v2137, %v2169
    %v2202 = vadd.f32 %v2138, %v2170
    %v2203 = vadd.f32 %v2139, %v2171
    %v2204 = vadd.f32 %v2140, %v2172
    %v2205 = vadd.f32 %v2141, %v2173
    %v2206 = vadd.f32 %v2142, %v2174
    %v2207 = vadd.f32 %v2143, %v2175
    %v2208 = vadd.f32 %v2144, %v2176
    %v2209 = vadd.f32 %v2145, %v2177
    %v2210 = vadd.f32 %v2146, %v2178
    %v2211 = vadd.f32 %v2147, %v2179
    %v2212 = vadd.f32 %v2148, %v2180
    %v2213 = vadd.f32 %v2149, %v2181
    %v2214 = vadd.f32 %v2150, %v2182
    %v2215 = vmax.f32 %v2183, 0.0
    %v2216 = vmax.f32 %v2184, 0.0
    %v2217 = vmax.f32 %v2185, 0.0
    %v2218 = vmax.f32 %v2186, 0.0
    %v2219 = vmax.f32 %v2187, 0.0
    %v2220 = vmax.f32 %v2188, 0.0
    %v2221 = vmax.f32 %v2189, 0.0
    %v2222 = vmax.f32 %v2190, 0.0
    %v2223 = vmax.f32 %v2191, 0.0
    %v2224 = vmax.f32 %v2192, 0.0
    %v2225 = vmax.f32 %v2193, 0.0
    %v2226 = vmax.f32 %v2194, 0.0
    %v2227 = vmax.f32 %v2195, 0.0
    %v2228 = vmax.f32 %v2196, 0.0
    %v2229 = vmax.f32 %v2197, 0.0
    %v2230 = vmax.f32 %v2198, 0.0
    %v2231 = vmax.f32 %v2199, 0.0
    %v2232 = vmax.f32 %v2200, 0.0
    %v2233 = vmax.f32 %v2201, 0.0
    %v2234 = vmax.f32 %v2202, 0.0
    %v2235 = vmax.f32 %v2203, 0.0
    %v2236 = vmax.f32 %v2204, 0.0
    %v2237 = vmax.f32 %v2205, 0.0
    %v2238 = vmax.f32 %v2206, 0.0
    %v2239 = vmax.f32 %v2207, 0.0
    %v2240 = vmax.f32 %v2208, 0.0
    %v2241 = vmax.f32 %v2209, 0.0
    %v2242 = vmax.f32 %v2210, 0.0
    %v2243 = vmax.f32 %v2211, 0.0
    %v2244 = vmax.f32 %v2212, 0.0
    %v2245 = vmax.f32 %v2213, 0.0
    %v2246 = vmax.f32 %v2214, 0.0
    %v2247 = vpack.c.bf16 %v2216, %v2215
    %v2248 = vpack.c.bf16 %v2218, %v2217
    %v2249 = vpack.c.bf16 %v2220, %v2219
    %v2250 = vpack.c.bf16 %v2222, %v2221
    %v2251 = vpack.c.bf16 %v2224, %v2223
    %v2252 = vpack.c.bf16 %v2226, %v2225
    %v2253 = vpack.c.bf16 %v2228, %v2227
    %v2254 = vpack.c.bf16 %v2230, %v2229
    %v2255 = vpack.c.bf16 %v2232, %v2231
    %v2256 = vpack.c.bf16 %v2234, %v2233
    %v2257 = vpack.c.bf16 %v2236, %v2235
    %v2258 = vpack.c.bf16 %v2238, %v2237
    %v2259 = vpack.c.bf16 %v2240, %v2239
    %v2260 = vpack.c.bf16 %v2242, %v2241
    %v2261 = vpack.c.bf16 %v2244, %v2243
    %v2262 = vpack.c.bf16 %v2246, %v2245
    %v2279 = vunpack.c.l.b16 %v2247
    %v2280 = vunpack.c.h.b16 %v2247
    %v2281 = vunpack.c.l.b16 %v2248
    %v2282 = vunpack.c.h.b16 %v2248
    %v2283 = vunpack.c.l.b16 %v2249
    %v2284 = vunpack.c.h.b16 %v2249
    %v2285 = vunpack.c.l.b16 %v2250
    %v2286 = vunpack.c.h.b16 %v2250
    %v2287 = vunpack.c.l.b16 %v2251
    %v2288 = vunpack.c.h.b16 %v2251
    %v2289 = vunpack.c.l.b16 %v2252
    %v2290 = vunpack.c.h.b16 %v2252
    %v2291 = vunpack.c.l.b16 %v2253
    %v2292 = vunpack.c.h.b16 %v2253
    %v2293 = vunpack.c.l.b16 %v2254
    %v2294 = vunpack.c.h.b16 %v2254
    %v2295 = vunpack.c.l.b16 %v2255
    %v2296 = vunpack.c.h.b16 %v2255
    %v2297 = vunpack.c.l.b16 %v2256
    %v2298 = vunpack.c.h.b16 %v2256
    %v2299 = vunpack.c.l.b16 %v2257
    %v2300 = vunpack.c.h.b16 %v2257
    %v2301 = vunpack.c.l.b16 %v2258
    %v2302 = vunpack.c.h.b16 %v2258
    %v2303 = vunpack.c.l.b16 %v2259
    %v2304 = vunpack.c.h.b16 %v2259
    %v2305 = vunpack.c.l.b16 %v2260
    %v2306 = vunpack.c.h.b16 %v2260
    %v2307 = vunpack.c.l.b16 %v2261
    %v2308 = vunpack.c.h.b16 %v2261
    %v2309 = vunpack.c.l.b16 %v2262
    %v2310 = vunpack.c.h.b16 %v2262
    %v2311 = vpack.c.b16 %v2279, %v2279
    %v2312 = vpack.c.b16 %v2280, %v2280
    %v2313 = vpack.c.b16 %v2281, %v2281
    %v2314 = vpack.c.b16 %v2282, %v2282
    %v2315 = vpack.c.b16 %v2283, %v2283
    %v2316 = vpack.c.b16 %v2284, %v2284
    %v2317 = vpack.c.b16 %v2285, %v2285
    %v2318 = vpack.c.b16 %v2286, %v2286
    %v2319 = vpack.c.b16 %v2287, %v2287
    %v2320 = vpack.c.b16 %v2288, %v2288
    %v2321 = vpack.c.b16 %v2289, %v2289
    %v2322 = vpack.c.b16 %v2290, %v2290
    %v2323 = vpack.c.b16 %v2291, %v2291
    %v2324 = vpack.c.b16 %v2292, %v2292
    %v2325 = vpack.c.b16 %v2293, %v2293
    %v2326 = vpack.c.b16 %v2294, %v2294
    %v2327 = vpack.c.b16 %v2295, %v2295
    %v2328 = vpack.c.b16 %v2296, %v2296
    %v2329 = vpack.c.b16 %v2297, %v2297
    %v2330 = vpack.c.b16 %v2298, %v2298
    %v2331 = vpack.c.b16 %v2299, %v2299
    %v2332 = vpack.c.b16 %v2300, %v2300
    %v2333 = vpack.c.b16 %v2301, %v2301
    %v2334 = vpack.c.b16 %v2302, %v2302
    %v2335 = vpack.c.b16 %v2303, %v2303
    %v2336 = vpack.c.b16 %v2304, %v2304
    %v2337 = vpack.c.b16 %v2305, %v2305
    %v2338 = vpack.c.b16 %v2306, %v2306
    %v2339 = vpack.c.b16 %v2307, %v2307
    %v2340 = vpack.c.b16 %v2308, %v2308
    %v2341 = vpack.c.b16 %v2309, %v2309
    %v2342 = vpack.c.b16 %v2310, %v2310
    %2375 = vst [vmem:[#allocation9] sm:$0xf] %v2311
    %2376 = vst [vmem:[#allocation9 + $0x4] sm:$0xf] %v2312
    %2377 = vst [vmem:[#allocation9 + $0x8] sm:$0xf] %v2313
    %2378 = vst [vmem:[#allocation9 + $0xc] sm:$0xf] %v2314
    %2379 = vst [vmem:[#allocation9 + $0x10] sm:$0xf] %v2315
    %2380 = vst [vmem:[#allocation9 + $0x14] sm:$0xf] %v2316
    %2381 = vst [vmem:[#allocation9 + $0x18] sm:$0xf] %v2317
    %2382 = vst [vmem:[#allocation9 + $0x1c] sm:$0xf] %v2318
    %2383 = vst [vmem:[#allocation9 + $0x20] sm:$0xf] %v2319
    %2384 = vst [vmem:[#allocation9 + $0x24] sm:$0xf] %v2320
    %2385 = vst [vmem:[#allocation9 + $0x28] sm:$0xf] %v2321
    %2386 = vst [vmem:[#allocation9 + $0x2c] sm:$0xf] %v2322
    %2387 = vst [vmem:[#allocation9 + $0x30] sm:$0xf] %v2323
    %2388 = vst [vmem:[#allocation9 + $0x34] sm:$0xf] %v2324
    %2389 = vst [vmem:[#allocation9 + $0x38] sm:$0xf] %v2325
    %2390 = vst [vmem:[#allocation9 + $0x3c] sm:$0xf] %v2326
    %2391 = vst [vmem:[#allocation9 + $0x40] sm:$0xf] %v2327
    %2392 = vst [vmem:[#allocation9 + $0x44] sm:$0xf] %v2328
    %2393 = vst [vmem:[#allocation9 + $0x48] sm:$0xf] %v2329
    %2394 = vst [vmem:[#allocation9 + $0x4c] sm:$0xf] %v2330
    %2395 = vst [vmem:[#allocation9 + $0x50] sm:$0xf] %v2331
    %2396 = vst [vmem:[#allocation9 + $0x54] sm:$0xf] %v2332
    %2397 = vst [vmem:[#allocation9 + $0x58] sm:$0xf] %v2333
    %2398 = vst [vmem:[#allocation9 + $0x5c] sm:$0xf] %v2334
    %2399 = vst [vmem:[#allocation9 + $0x60] sm:$0xf] %v2335
    %2400 = vst [vmem:[#allocation9 + $0x64] sm:$0xf] %v2336
    %2401 = vst [vmem:[#allocation9 + $0x68] sm:$0xf] %v2337
    %2402 = vst [vmem:[#allocation9 + $0x6c] sm:$0xf] %v2338
    %2403 = vst [vmem:[#allocation9 + $0x70] sm:$0xf] %v2339
    %2404 = vst [vmem:[#allocation9 + $0x74] sm:$0xf] %v2340
    %2405 = vst [vmem:[#allocation9 + $0x78] sm:$0xf] %v2341
    %2406 = vst [vmem:[#allocation9 + $0x7c] sm:$0xf] %v2342
    %s2407 = scalar_lea.vmem [#allocation3], 128
    %v2408 = vld [vmem:[%s2407] sm:$0xf]
    %v2409 = vld [vmem:[%s2407 + $0x4] sm:$0xf]
    %v2410 = vld [vmem:[%s2407 + $0x8] sm:$0xf]
    %v2411 = vld [vmem:[%s2407 + $0xc] sm:$0xf]
    %v2412 = vld [vmem:[%s2407 + $0x10] sm:$0xf]
    %v2413 = vld [vmem:[%s2407 + $0x14] sm:$0xf]
    %v2414 = vld [vmem:[%s2407 + $0x18] sm:$0xf]
    %v2415 = vld [vmem:[%s2407 + $0x1c] sm:$0xf]
    %v2416 = vld [vmem:[%s2407 + $0x20] sm:$0xf]
    %v2417 = vld [vmem:[%s2407 + $0x24] sm:$0xf]
    %v2418 = vld [vmem:[%s2407 + $0x28] sm:$0xf]
    %v2419 = vld [vmem:[%s2407 + $0x2c] sm:$0xf]
    %v2420 = vld [vmem:[%s2407 + $0x30] sm:$0xf]
    %v2421 = vld [vmem:[%s2407 + $0x34] sm:$0xf]
    %v2422 = vld [vmem:[%s2407 + $0x38] sm:$0xf]
    %v2423 = vld [vmem:[%s2407 + $0x3c] sm:$0xf]
    %v2424 = vld [vmem:[%s2407 + $0x40] sm:$0xf]
    %v2425 = vld [vmem:[%s2407 + $0x44] sm:$0xf]
    %v2426 = vld [vmem:[%s2407 + $0x48] sm:$0xf]
    %v2427 = vld [vmem:[%s2407 + $0x4c] sm:$0xf]
    %v2428 = vld [vmem:[%s2407 + $0x50] sm:$0xf]
    %v2429 = vld [vmem:[%s2407 + $0x54] sm:$0xf]
    %v2430 = vld [vmem:[%s2407 + $0x58] sm:$0xf]
    %v2431 = vld [vmem:[%s2407 + $0x5c] sm:$0xf]
    %v2432 = vld [vmem:[%s2407 + $0x60] sm:$0xf]
    %v2433 = vld [vmem:[%s2407 + $0x64] sm:$0xf]
    %v2434 = vld [vmem:[%s2407 + $0x68] sm:$0xf]
    %v2435 = vld [vmem:[%s2407 + $0x6c] sm:$0xf]
    %v2436 = vld [vmem:[%s2407 + $0x70] sm:$0xf]
    %v2437 = vld [vmem:[%s2407 + $0x74] sm:$0xf]
    %v2438 = vld [vmem:[%s2407 + $0x78] sm:$0xf]
    %v2439 = vld [vmem:[%s2407 + $0x7c] sm:$0xf]
    %v2440 = vld [vmem:[%s95] sm:$0xf]
    %v2441 = vld [vmem:[%s95 + $0x4] sm:$0xf]
    %v2442 = vld [vmem:[%s95 + $0x8] sm:$0xf]
    %v2443 = vld [vmem:[%s95 + $0xc] sm:$0xf]
    %v2444 = vld [vmem:[%s95 + $0x10] sm:$0xf]
    %v2445 = vld [vmem:[%s95 + $0x14] sm:$0xf]
    %v2446 = vld [vmem:[%s95 + $0x18] sm:$0xf]
    %v2447 = vld [vmem:[%s95 + $0x1c] sm:$0xf]
    %v2448 = vld [vmem:[%s95 + $0x20] sm:$0xf]
    %v2449 = vld [vmem:[%s95 + $0x24] sm:$0xf]
    %v2450 = vld [vmem:[%s95 + $0x28] sm:$0xf]
    %v2451 = vld [vmem:[%s95 + $0x2c] sm:$0xf]
    %v2452 = vld [vmem:[%s95 + $0x30] sm:$0xf]
    %v2453 = vld [vmem:[%s95 + $0x34] sm:$0xf]
    %v2454 = vld [vmem:[%s95 + $0x38] sm:$0xf]
    %v2455 = vld [vmem:[%s95 + $0x3c] sm:$0xf]
    %v2488 = vunpack.c.l.b16 %v2408
    %v2489 = vunpack.c.l.b16 %v2409
    %v2490 = vunpack.c.l.b16 %v2410
    %v2491 = vunpack.c.l.b16 %v2411
    %v2492 = vunpack.c.l.b16 %v2412
    %v2493 = vunpack.c.l.b16 %v2413
    %v2494 = vunpack.c.l.b16 %v2414
    %v2495 = vunpack.c.l.b16 %v2415
    %v2496 = vunpack.c.l.b16 %v2416
    %v2497 = vunpack.c.l.b16 %v2417
    %v2498 = vunpack.c.l.b16 %v2418
    %v2499 = vunpack.c.l.b16 %v2419
    %v2500 = vunpack.c.l.b16 %v2420
    %v2501 = vunpack.c.l.b16 %v2421
    %v2502 = vunpack.c.l.b16 %v2422
    %v2503 = vunpack.c.l.b16 %v2423
    %v2504 = vunpack.c.l.b16 %v2424
    %v2505 = vunpack.c.l.b16 %v2425
    %v2506 = vunpack.c.l.b16 %v2426
    %v2507 = vunpack.c.l.b16 %v2427
    %v2508 = vunpack.c.l.b16 %v2428
    %v2509 = vunpack.c.l.b16 %v2429
    %v2510 = vunpack.c.l.b16 %v2430
    %v2511 = vunpack.c.l.b16 %v2431
    %v2512 = vunpack.c.l.b16 %v2432
    %v2513 = vunpack.c.l.b16 %v2433
    %v2514 = vunpack.c.l.b16 %v2434
    %v2515 = vunpack.c.l.b16 %v2435
    %v2516 = vunpack.c.l.b16 %v2436
    %v2517 = vunpack.c.l.b16 %v2437
    %v2518 = vunpack.c.l.b16 %v2438
    %v2519 = vunpack.c.l.b16 %v2439
    %v2520 = vpack.c.b16 %v2489, %v2488
    %v2521 = vpack.c.b16 %v2491, %v2490
    %v2522 = vpack.c.b16 %v2493, %v2492
    %v2523 = vpack.c.b16 %v2495, %v2494
    %v2524 = vpack.c.b16 %v2497, %v2496
    %v2525 = vpack.c.b16 %v2499, %v2498
    %v2526 = vpack.c.b16 %v2501, %v2500
    %v2527 = vpack.c.b16 %v2503, %v2502
    %v2528 = vpack.c.b16 %v2505, %v2504
    %v2529 = vpack.c.b16 %v2507, %v2506
    %v2530 = vpack.c.b16 %v2509, %v2508
    %v2531 = vpack.c.b16 %v2511, %v2510
    %v2532 = vpack.c.b16 %v2513, %v2512
    %v2533 = vpack.c.b16 %v2515, %v2514
    %v2534 = vpack.c.b16 %v2517, %v2516
    %v2535 = vpack.c.b16 %v2519, %v2518
    %v2568 = vunpack.c.l.b16 %v2440
    %v2569 = vunpack.c.l.b16 %v2441
    %v2570 = vunpack.c.l.b16 %v2442
    %v2571 = vunpack.c.l.b16 %v2443
    %v2572 = vunpack.c.l.b16 %v2444
    %v2573 = vunpack.c.l.b16 %v2445
    %v2574 = vunpack.c.l.b16 %v2446
    %v2575 = vunpack.c.l.b16 %v2447
    %v2576 = vunpack.c.l.b16 %v2448
    %v2577 = vunpack.c.l.b16 %v2449
    %v2578 = vunpack.c.l.b16 %v2450
    %v2579 = vunpack.c.l.b16 %v2451
    %v2580 = vunpack.c.l.b16 %v2452
    %v2581 = vunpack.c.l.b16 %v2453
    %v2582 = vunpack.c.l.b16 %v2454
    %v2583 = vunpack.c.l.b16 %v2455
    %v2584 = vpack.c.b16 %v2569, %v2568
    %v2585 = vpack.c.b16 %v2571, %v2570
    %v2586 = vpack.c.b16 %v2573, %v2572
    %v2587 = vpack.c.b16 %v2575, %v2574
    %v2588 = vpack.c.b16 %v2577, %v2576
    %v2589 = vpack.c.b16 %v2579, %v2578
    %v2590 = vpack.c.b16 %v2581, %v2580
    %v2591 = vpack.c.b16 %v2583, %v2582
    %2600 = vmatprep.subr.bf16.mxu0 0
    %2601 = vmatpush1.bf16.msra.mxu0 %v2591
    %2602 = vmatprep.subr.bf16.mxu0 0
    %2603 = vmatpush1.bf16.msra.mxu0 %v2590
    %2604 = vmatprep.subr.bf16.mxu0 0
    %2605 = vmatpush1.bf16.msra.mxu0 %v2589
    %2606 = vmatprep.subr.bf16.mxu0 0
    %2607 = vmatpush1.bf16.msra.mxu0 %v2588
    %2608 = vmatprep.subr.bf16.mxu0 0
    %2609 = vmatpush1.bf16.msra.mxu0 %v2587
    %2610 = vmatprep.subr.bf16.mxu0 0
    %2611 = vmatpush1.bf16.msra.mxu0 %v2586
    %2612 = vmatprep.subr.bf16.mxu0 0
    %2613 = vmatpush1.bf16.msra.mxu0 %v2585
    %2614 = vmatprep.subr.bf16.mxu0 0
    %2615 = vmatpush1.bf16.msra.mxu0 %v2584
    %2616 = vmatprep.subr.bf16.mxu0 0
    %2617 = vmatpush2.bf16.msra.mxu0 0
    %2618 = vmatprep.subr.bf16.mxu0 0
    %2619 = vmatpush2.bf16.msra.mxu0 0
    %2620 = vmatprep.subr.bf16.mxu0 0
    %2621 = vmatpush2.bf16.msra.mxu0 0
    %2622 = vmatprep.subr.bf16.mxu0 0
    %2623 = vmatpush2.bf16.msra.mxu0 0
    %2624 = vmatprep.subr.bf16.mxu0 0
    %2625 = vmatpush2.bf16.msra.mxu0 0
    %2626 = vmatprep.subr.bf16.mxu0 0
    %2627 = vmatpush2.bf16.msra.mxu0 0
    %2628 = vmatprep.subr.bf16.mxu0 0
    %2629 = vmatpush2.bf16.msra.mxu0 0
    %2630 = vmatprep.subr.bf16.mxu0 0
    %2631 = vmatpush2.bf16.msra.mxu0 0
    %2632 = vmatprep.mubr.bf16.mxu0 0
    %2633 = vmatmul.mubr.bf16.gmra.mxu0 %v2520
    %v2634 = vpop.f32.mrf.mxu0
    %v2635 = vadd.f32 0.0, %v2634
    %v2636 = vpop.f32.mrf.mxu0
    %v2637 = vpop.f32.mrf.mxu0
    %v2638 = vadd.f32 0.0, %v2637
    %v2639 = vpop.f32.mrf.mxu0
    %2640 = vmatprep.mubr.bf16.mxu0 0
    %2641 = vmatmul.mubr.bf16.gmra.mxu0 %v2521
    %v2642 = vpop.f32.mrf.mxu0
    %v2643 = vadd.f32 0.0, %v2642
    %v2644 = vpop.f32.mrf.mxu0
    %v2645 = vpop.f32.mrf.mxu0
    %v2646 = vadd.f32 0.0, %v2645
    %v2647 = vpop.f32.mrf.mxu0
    %2648 = vmatprep.mubr.bf16.mxu0 0
    %2649 = vmatmul.mubr.bf16.gmra.mxu0 %v2522
    %v2650 = vpop.f32.mrf.mxu0
    %v2651 = vadd.f32 0.0, %v2650
    %v2652 = vpop.f32.mrf.mxu0
    %v2653 = vpop.f32.mrf.mxu0
    %v2654 = vadd.f32 0.0, %v2653
    %v2655 = vpop.f32.mrf.mxu0
    %2656 = vmatprep.mubr.bf16.mxu0 0
    %2657 = vmatmul.mubr.bf16.gmra.mxu0 %v2523
    %v2658 = vpop.f32.mrf.mxu0
    %v2659 = vadd.f32 0.0, %v2658
    %v2660 = vpop.f32.mrf.mxu0
    %v2661 = vpop.f32.mrf.mxu0
    %v2662 = vadd.f32 0.0, %v2661
    %v2663 = vpop.f32.mrf.mxu0
    %2664 = vmatprep.mubr.bf16.mxu0 0
    %2665 = vmatmul.mubr.bf16.gmra.mxu0 %v2524
    %v2666 = vpop.f32.mrf.mxu0
    %v2667 = vadd.f32 0.0, %v2666
    %v2668 = vpop.f32.mrf.mxu0
    %v2669 = vpop.f32.mrf.mxu0
    %v2670 = vadd.f32 0.0, %v2669
    %v2671 = vpop.f32.mrf.mxu0
    %2672 = vmatprep.mubr.bf16.mxu0 0
    %2673 = vmatmul.mubr.bf16.gmra.mxu0 %v2525
    %v2674 = vpop.f32.mrf.mxu0
    %v2675 = vadd.f32 0.0, %v2674
    %v2676 = vpop.f32.mrf.mxu0
    %v2677 = vpop.f32.mrf.mxu0
    %v2678 = vadd.f32 0.0, %v2677
    %v2679 = vpop.f32.mrf.mxu0
    %2680 = vmatprep.mubr.bf16.mxu0 0
    %2681 = vmatmul.mubr.bf16.gmra.mxu0 %v2526
    %v2682 = vpop.f32.mrf.mxu0
    %v2683 = vadd.f32 0.0, %v2682
    %v2684 = vpop.f32.mrf.mxu0
    %v2685 = vpop.f32.mrf.mxu0
    %v2686 = vadd.f32 0.0, %v2685
    %v2687 = vpop.f32.mrf.mxu0
    %2688 = vmatprep.mubr.bf16.mxu0 0
    %2689 = vmatmul.mubr.bf16.gmra.mxu0 %v2527
    %v2690 = vpop.f32.mrf.mxu0
    %v2691 = vadd.f32 0.0, %v2690
    %v2692 = vpop.f32.mrf.mxu0
    %v2693 = vpop.f32.mrf.mxu0
    %v2694 = vadd.f32 0.0, %v2693
    %v2695 = vpop.f32.mrf.mxu0
    %2696 = vmatprep.mubr.bf16.mxu0 0
    %2697 = vmatmul.mubr.bf16.gmra.mxu0 %v2528
    %v2698 = vpop.f32.mrf.mxu0
    %v2699 = vadd.f32 0.0, %v2698
    %v2700 = vpop.f32.mrf.mxu0
    %v2701 = vpop.f32.mrf.mxu0
    %v2702 = vadd.f32 0.0, %v2701
    %v2703 = vpop.f32.mrf.mxu0
    %2704 = vmatprep.mubr.bf16.mxu0 0
    %2705 = vmatmul.mubr.bf16.gmra.mxu0 %v2529
    %v2706 = vpop.f32.mrf.mxu0
    %v2707 = vadd.f32 0.0, %v2706
    %v2708 = vpop.f32.mrf.mxu0
    %v2709 = vpop.f32.mrf.mxu0
    %v2710 = vadd.f32 0.0, %v2709
    %v2711 = vpop.f32.mrf.mxu0
    %2712 = vmatprep.mubr.bf16.mxu0 0
    %2713 = vmatmul.mubr.bf16.gmra.mxu0 %v2530
    %v2714 = vpop.f32.mrf.mxu0
    %v2715 = vadd.f32 0.0, %v2714
    %v2716 = vpop.f32.mrf.mxu0
    %v2717 = vpop.f32.mrf.mxu0
    %v2718 = vadd.f32 0.0, %v2717
    %v2719 = vpop.f32.mrf.mxu0
    %2720 = vmatprep.mubr.bf16.mxu0 0
    %2721 = vmatmul.mubr.bf16.gmra.mxu0 %v2531
    %v2722 = vpop.f32.mrf.mxu0
    %v2723 = vadd.f32 0.0, %v2722
    %v2724 = vpop.f32.mrf.mxu0
    %v2725 = vpop.f32.mrf.mxu0
    %v2726 = vadd.f32 0.0, %v2725
    %v2727 = vpop.f32.mrf.mxu0
    %2728 = vmatprep.mubr.bf16.mxu0 0
    %2729 = vmatmul.mubr.bf16.gmra.mxu0 %v2532
    %v2730 = vpop.f32.mrf.mxu0
    %v2731 = vadd.f32 0.0, %v2730
    %v2732 = vpop.f32.mrf.mxu0
    %v2733 = vpop.f32.mrf.mxu0
    %v2734 = vadd.f32 0.0, %v2733
    %v2735 = vpop.f32.mrf.mxu0
    %2736 = vmatprep.mubr.bf16.mxu0 0
    %2737 = vmatmul.mubr.bf16.gmra.mxu0 %v2533
    %v2738 = vpop.f32.mrf.mxu0
    %v2739 = vadd.f32 0.0, %v2738
    %v2740 = vpop.f32.mrf.mxu0
    %v2741 = vpop.f32.mrf.mxu0
    %v2742 = vadd.f32 0.0, %v2741
    %v2743 = vpop.f32.mrf.mxu0
    %2744 = vmatprep.mubr.bf16.mxu0 0
    %2745 = vmatmul.mubr.bf16.gmra.mxu0 %v2534
    %v2746 = vpop.f32.mrf.mxu0
    %v2747 = vadd.f32 0.0, %v2746
    %v2748 = vpop.f32.mrf.mxu0
    %v2749 = vpop.f32.mrf.mxu0
    %v2750 = vadd.f32 0.0, %v2749
    %v2751 = vpop.f32.mrf.mxu0
    %2752 = vmatprep.mubr.bf16.mxu0 0
    %2753 = vmatmul.mubr.bf16.gmra.mxu0 %v2535
    %v2754 = vpop.f32.mrf.mxu0
    %v2755 = vadd.f32 0.0, %v2754
    %v2756 = vpop.f32.mrf.mxu0
    %v2757 = vpop.f32.mrf.mxu0
    %v2758 = vadd.f32 0.0, %v2757
    %v2759 = vpop.f32.mrf.mxu0
    %2760 = vdwg.mxu0
    %2761 = vst [vmem:[#allocation2] sm:$0xff] %v2635
    %2762 = vst [vmem:[#allocation2 + $0x8] sm:$0xff] %v2638
    %2763 = vst [vmem:[#allocation2 + $0x10] sm:$0xff] %v2643
    %2764 = vst [vmem:[#allocation2 + $0x18] sm:$0xff] %v2646
    %2765 = vst [vmem:[#allocation2 + $0x20] sm:$0xff] %v2651
    %2766 = vst [vmem:[#allocation2 + $0x28] sm:$0xff] %v2654
    %2767 = vst [vmem:[#allocation2 + $0x30] sm:$0xff] %v2659
    %2768 = vst [vmem:[#allocation2 + $0x38] sm:$0xff] %v2662
    %2769 = vst [vmem:[#allocation2 + $0x40] sm:$0xff] %v2667
    %2770 = vst [vmem:[#allocation2 + $0x48] sm:$0xff] %v2670
    %2771 = vst [vmem:[#allocation2 + $0x50] sm:$0xff] %v2675
    %2772 = vst [vmem:[#allocation2 + $0x58] sm:$0xff] %v2678
    %2773 = vst [vmem:[#allocation2 + $0x60] sm:$0xff] %v2683
    %2774 = vst [vmem:[#allocation2 + $0x68] sm:$0xff] %v2686
    %2775 = vst [vmem:[#allocation2 + $0x70] sm:$0xff] %v2691
    %2776 = vst [vmem:[#allocation2 + $0x78] sm:$0xff] %v2694
    %2777 = vst [vmem:[#allocation2 + $0x80] sm:$0xff] %v2699
    %2778 = vst [vmem:[#allocation2 + $0x88] sm:$0xff] %v2702
    %2779 = vst [vmem:[#allocation2 + $0x90] sm:$0xff] %v2707
    %2780 = vst [vmem:[#allocation2 + $0x98] sm:$0xff] %v2710
    %2781 = vst [vmem:[#allocation2 + $0xa0] sm:$0xff] %v2715
    %2782 = vst [vmem:[#allocation2 + $0xa8] sm:$0xff] %v2718
    %2783 = vst [vmem:[#allocation2 + $0xb0] sm:$0xff] %v2723
    %2784 = vst [vmem:[#allocation2 + $0xb8] sm:$0xff] %v2726
    %2785 = vst [vmem:[#allocation2 + $0xc0] sm:$0xff] %v2731
    %2786 = vst [vmem:[#allocation2 + $0xc8] sm:$0xff] %v2734
    %2787 = vst [vmem:[#allocation2 + $0xd0] sm:$0xff] %v2739
    %2788 = vst [vmem:[#allocation2 + $0xd8] sm:$0xff] %v2742
    %2789 = vst [vmem:[#allocation2 + $0xe0] sm:$0xff] %v2747
    %2790 = vst [vmem:[#allocation2 + $0xe8] sm:$0xff] %v2750
    %2791 = vst [vmem:[#allocation2 + $0xf0] sm:$0xff] %v2755
    %2792 = vst [vmem:[#allocation2 + $0xf8] sm:$0xff] %v2758
    %v2793 = vld [vmem:[#allocation6] sm:$0xf]
    %v2794 = vld [vmem:[#allocation6 + $0x4] sm:$0xf]
    %v2795 = vld [vmem:[#allocation6 + $0x8] sm:$0xf]
    %v2796 = vld [vmem:[#allocation6 + $0xc] sm:$0xf]
    %v2797 = vld [vmem:[#allocation6 + $0x10] sm:$0xf]
    %v2798 = vld [vmem:[#allocation6 + $0x14] sm:$0xf]
    %v2799 = vld [vmem:[#allocation6 + $0x18] sm:$0xf]
    %v2800 = vld [vmem:[#allocation6 + $0x1c] sm:$0xf]
    %v2801 = vld [vmem:[#allocation6 + $0x20] sm:$0xf]
    %v2802 = vld [vmem:[#allocation6 + $0x24] sm:$0xf]
    %v2803 = vld [vmem:[#allocation6 + $0x28] sm:$0xf]
    %v2804 = vld [vmem:[#allocation6 + $0x2c] sm:$0xf]
    %v2805 = vld [vmem:[#allocation6 + $0x30] sm:$0xf]
    %v2806 = vld [vmem:[#allocation6 + $0x34] sm:$0xf]
    %v2807 = vld [vmem:[#allocation6 + $0x38] sm:$0xf]
    %v2808 = vld [vmem:[#allocation6 + $0x3c] sm:$0xf]
    %v2825 = vunpack.c.l.b16 %v2793
    %v2826 = vunpack.c.l.b16 %v2794
    %v2827 = vunpack.c.l.b16 %v2795
    %v2828 = vunpack.c.l.b16 %v2796
    %v2829 = vunpack.c.l.b16 %v2797
    %v2830 = vunpack.c.l.b16 %v2798
    %v2831 = vunpack.c.l.b16 %v2799
    %v2832 = vunpack.c.l.b16 %v2800
    %v2833 = vunpack.c.l.b16 %v2801
    %v2834 = vunpack.c.l.b16 %v2802
    %v2835 = vunpack.c.l.b16 %v2803
    %v2836 = vunpack.c.l.b16 %v2804
    %v2837 = vunpack.c.l.b16 %v2805
    %v2838 = vunpack.c.l.b16 %v2806
    %v2839 = vunpack.c.l.b16 %v2807
    %v2840 = vunpack.c.l.b16 %v2808
    %v2841 = vpack.c.b16 %v2826, %v2825
    %v2842 = vpack.c.b16 %v2828, %v2827
    %v2843 = vpack.c.b16 %v2830, %v2829
    %v2844 = vpack.c.b16 %v2832, %v2831
    %v2845 = vpack.c.b16 %v2834, %v2833
    %v2846 = vpack.c.b16 %v2836, %v2835
    %v2847 = vpack.c.b16 %v2838, %v2837
    %v2848 = vpack.c.b16 %v2840, %v2839
    %2857 = vmatprep.subr.bf16.mxu0 0
    %2858 = vmatpush1.bf16.msra.mxu0 %v2848
    %2859 = vmatprep.subr.bf16.mxu0 0
    %2860 = vmatpush1.bf16.msra.mxu0 %v2847
    %2861 = vmatprep.subr.bf16.mxu0 0
    %2862 = vmatpush1.bf16.msra.mxu0 %v2846
    %2863 = vmatprep.subr.bf16.mxu0 0
    %2864 = vmatpush1.bf16.msra.mxu0 %v2845
    %2865 = vmatprep.subr.bf16.mxu0 0
    %2866 = vmatpush1.bf16.msra.mxu0 %v2844
    %2867 = vmatprep.subr.bf16.mxu0 0
    %2868 = vmatpush1.bf16.msra.mxu0 %v2843
    %2869 = vmatprep.subr.bf16.mxu0 0
    %2870 = vmatpush1.bf16.msra.mxu0 %v2842
    %2871 = vmatprep.subr.bf16.mxu0 0
    %2872 = vmatpush1.bf16.msra.mxu0 %v2841
    %2873 = vmatprep.subr.bf16.mxu0 0
    %2874 = vmatpush2.bf16.msra.mxu0 0
    %2875 = vmatprep.subr.bf16.mxu0 0
    %2876 = vmatpush2.bf16.msra.mxu0 0
    %2877 = vmatprep.subr.bf16.mxu0 0
    %2878 = vmatpush2.bf16.msra.mxu0 0
    %2879 = vmatprep.subr.bf16.mxu0 0
    %2880 = vmatpush2.bf16.msra.mxu0 0
    %2881 = vmatprep.subr.bf16.mxu0 0
    %2882 = vmatpush2.bf16.msra.mxu0 0
    %2883 = vmatprep.subr.bf16.mxu0 0
    %2884 = vmatpush2.bf16.msra.mxu0 0
    %2885 = vmatprep.subr.bf16.mxu0 0
    %2886 = vmatpush2.bf16.msra.mxu0 0
    %2887 = vmatprep.subr.bf16.mxu0 0
    %2888 = vmatpush2.bf16.msra.mxu0 0
    %2889 = vmatprep.mubr.bf16.mxu0 0
    %2890 = vmatmul.mubr.bf16.gmra.mxu0 %v2520
    %v2891 = vpop.f32.mrf.mxu0
    %v2892 = vadd.f32 0.0, %v2891
    %v2893 = vpop.f32.mrf.mxu0
    %v2894 = vpop.f32.mrf.mxu0
    %v2895 = vadd.f32 0.0, %v2894
    %v2896 = vpop.f32.mrf.mxu0
    %2897 = vmatprep.mubr.bf16.mxu0 0
    %2898 = vmatmul.mubr.bf16.gmra.mxu0 %v2521
    %v2899 = vpop.f32.mrf.mxu0
    %v2900 = vadd.f32 0.0, %v2899
    %v2901 = vpop.f32.mrf.mxu0
    %v2902 = vpop.f32.mrf.mxu0
    %v2903 = vadd.f32 0.0, %v2902
    %v2904 = vpop.f32.mrf.mxu0
    %2905 = vmatprep.mubr.bf16.mxu0 0
    %2906 = vmatmul.mubr.bf16.gmra.mxu0 %v2522
    %v2907 = vpop.f32.mrf.mxu0
    %v2908 = vadd.f32 0.0, %v2907
    %v2909 = vpop.f32.mrf.mxu0
    %v2910 = vpop.f32.mrf.mxu0
    %v2911 = vadd.f32 0.0, %v2910
    %v2912 = vpop.f32.mrf.mxu0
    %2913 = vmatprep.mubr.bf16.mxu0 0
    %2914 = vmatmul.mubr.bf16.gmra.mxu0 %v2523
    %v2915 = vpop.f32.mrf.mxu0
    %v2916 = vadd.f32 0.0, %v2915
    %v2917 = vpop.f32.mrf.mxu0
    %v2918 = vpop.f32.mrf.mxu0
    %v2919 = vadd.f32 0.0, %v2918
    %v2920 = vpop.f32.mrf.mxu0
    %2921 = vmatprep.mubr.bf16.mxu0 0
    %2922 = vmatmul.mubr.bf16.gmra.mxu0 %v2524
    %v2923 = vpop.f32.mrf.mxu0
    %v2924 = vadd.f32 0.0, %v2923
    %v2925 = vpop.f32.mrf.mxu0
    %v2926 = vpop.f32.mrf.mxu0
    %v2927 = vadd.f32 0.0, %v2926
    %v2928 = vpop.f32.mrf.mxu0
    %2929 = vmatprep.mubr.bf16.mxu0 0
    %2930 = vmatmul.mubr.bf16.gmra.mxu0 %v2525
    %v2931 = vpop.f32.mrf.mxu0
    %v2932 = vadd.f32 0.0, %v2931
    %v2933 = vpop.f32.mrf.mxu0
    %v2934 = vpop.f32.mrf.mxu0
    %v2935 = vadd.f32 0.0, %v2934
    %v2936 = vpop.f32.mrf.mxu0
    %2937 = vmatprep.mubr.bf16.mxu0 0
    %2938 = vmatmul.mubr.bf16.gmra.mxu0 %v2526
    %v2939 = vpop.f32.mrf.mxu0
    %v2940 = vadd.f32 0.0, %v2939
    %v2941 = vpop.f32.mrf.mxu0
    %v2942 = vpop.f32.mrf.mxu0
    %v2943 = vadd.f32 0.0, %v2942
    %v2944 = vpop.f32.mrf.mxu0
    %2945 = vmatprep.mubr.bf16.mxu0 0
    %2946 = vmatmul.mubr.bf16.gmra.mxu0 %v2527
    %v2947 = vpop.f32.mrf.mxu0
    %v2948 = vadd.f32 0.0, %v2947
    %v2949 = vpop.f32.mrf.mxu0
    %v2950 = vpop.f32.mrf.mxu0
    %v2951 = vadd.f32 0.0, %v2950
    %v2952 = vpop.f32.mrf.mxu0
    %2953 = vmatprep.mubr.bf16.mxu0 0
    %2954 = vmatmul.mubr.bf16.gmra.mxu0 %v2528
    %v2955 = vpop.f32.mrf.mxu0
    %v2956 = vadd.f32 0.0, %v2955
    %v2957 = vpop.f32.mrf.mxu0
    %v2958 = vpop.f32.mrf.mxu0
    %v2959 = vadd.f32 0.0, %v2958
    %v2960 = vpop.f32.mrf.mxu0
    %2961 = vmatprep.mubr.bf16.mxu0 0
    %2962 = vmatmul.mubr.bf16.gmra.mxu0 %v2529
    %v2963 = vpop.f32.mrf.mxu0
    %v2964 = vadd.f32 0.0, %v2963
    %v2965 = vpop.f32.mrf.mxu0
    %v2966 = vpop.f32.mrf.mxu0
    %v2967 = vadd.f32 0.0, %v2966
    %v2968 = vpop.f32.mrf.mxu0
    %2969 = vmatprep.mubr.bf16.mxu0 0
    %2970 = vmatmul.mubr.bf16.gmra.mxu0 %v2530
    %v2971 = vpop.f32.mrf.mxu0
    %v2972 = vadd.f32 0.0, %v2971
    %v2973 = vpop.f32.mrf.mxu0
    %v2974 = vpop.f32.mrf.mxu0
    %v2975 = vadd.f32 0.0, %v2974
    %v2976 = vpop.f32.mrf.mxu0
    %2977 = vmatprep.mubr.bf16.mxu0 0
    %2978 = vmatmul.mubr.bf16.gmra.mxu0 %v2531
    %v2979 = vpop.f32.mrf.mxu0
    %v2980 = vadd.f32 0.0, %v2979
    %v2981 = vpop.f32.mrf.mxu0
    %v2982 = vpop.f32.mrf.mxu0
    %v2983 = vadd.f32 0.0, %v2982
    %v2984 = vpop.f32.mrf.mxu0
    %2985 = vmatprep.mubr.bf16.mxu0 0
    %2986 = vmatmul.mubr.bf16.gmra.mxu0 %v2532
    %v2987 = vpop.f32.mrf.mxu0
    %v2988 = vadd.f32 0.0, %v2987
    %v2989 = vpop.f32.mrf.mxu0
    %v2990 = vpop.f32.mrf.mxu0
    %v2991 = vadd.f32 0.0, %v2990
    %v2992 = vpop.f32.mrf.mxu0
    %2993 = vmatprep.mubr.bf16.mxu0 0
    %2994 = vmatmul.mubr.bf16.gmra.mxu0 %v2533
    %v2995 = vpop.f32.mrf.mxu0
    %v2996 = vadd.f32 0.0, %v2995
    %v2997 = vpop.f32.mrf.mxu0
    %v2998 = vpop.f32.mrf.mxu0
    %v2999 = vadd.f32 0.0, %v2998
    %v3000 = vpop.f32.mrf.mxu0
    %3001 = vmatprep.mubr.bf16.mxu0 0
    %3002 = vmatmul.mubr.bf16.gmra.mxu0 %v2534
    %v3003 = vpop.f32.mrf.mxu0
    %v3004 = vadd.f32 0.0, %v3003
    %v3005 = vpop.f32.mrf.mxu0
    %v3006 = vpop.f32.mrf.mxu0
    %v3007 = vadd.f32 0.0, %v3006
    %v3008 = vpop.f32.mrf.mxu0
    %3009 = vmatprep.mubr.bf16.mxu0 0
    %3010 = vmatmul.mubr.bf16.gmra.mxu0 %v2535
    %v3011 = vpop.f32.mrf.mxu0
    %v3012 = vpop.f32.mrf.mxu0
    %v3013 = vpop.f32.mrf.mxu0
    %v3014 = vpop.f32.mrf.mxu0
    %3015 = vdwg.mxu0
    %v3016 = vld [vmem:[#allocation2 + $0x10] sm:$0xff]
    %v3017 = vld [vmem:[#allocation2 + $0x18] sm:$0xff]
    %v3018 = vld [vmem:[#allocation2 + $0x20] sm:$0xff]
    %v3019 = vld [vmem:[#allocation2 + $0x28] sm:$0xff]
    %v3020 = vld [vmem:[#allocation2 + $0x30] sm:$0xff]
    %v3021 = vld [vmem:[#allocation2 + $0x38] sm:$0xff]
    %v3022 = vld [vmem:[#allocation2 + $0x40] sm:$0xff]
    %v3023 = vld [vmem:[#allocation2 + $0x48] sm:$0xff]
    %v3024 = vld [vmem:[#allocation2 + $0x50] sm:$0xff]
    %v3025 = vld [vmem:[#allocation2 + $0x58] sm:$0xff]
    %v3026 = vld [vmem:[#allocation2 + $0x60] sm:$0xff]
    %v3027 = vld [vmem:[#allocation2 + $0x68] sm:$0xff]
    %v3028 = vld [vmem:[#allocation2 + $0x70] sm:$0xff]
    %v3029 = vld [vmem:[#allocation2 + $0x78] sm:$0xff]
    %v3030 = vld [vmem:[#allocation2 + $0x80] sm:$0xff]
    %v3031 = vld [vmem:[#allocation2 + $0x88] sm:$0xff]
    %v3032 = vld [vmem:[#allocation2 + $0x90] sm:$0xff]
    %v3033 = vld [vmem:[#allocation2 + $0x98] sm:$0xff]
    %v3034 = vld [vmem:[#allocation2 + $0xa0] sm:$0xff]
    %v3035 = vld [vmem:[#allocation2 + $0xa8] sm:$0xff]
    %v3036 = vld [vmem:[#allocation2 + $0xb0] sm:$0xff]
    %v3037 = vld [vmem:[#allocation2 + $0xb8] sm:$0xff]
    %v3038 = vld [vmem:[#allocation2 + $0xc0] sm:$0xff]
    %v3039 = vld [vmem:[#allocation2 + $0xc8] sm:$0xff]
    %v3040 = vld [vmem:[#allocation2 + $0xd0] sm:$0xff]
    %v3041 = vld [vmem:[#allocation2 + $0xd8] sm:$0xff]
    %v3042 = vld [vmem:[#allocation2 + $0xe0] sm:$0xff]
    %v3043 = vld [vmem:[#allocation2 + $0xe8] sm:$0xff]
    %v3044 = vld [vmem:[#allocation2 + $0xf0] sm:$0xff]
    %v3045 = vld [vmem:[#allocation2 + $0xf8] sm:$0xff]
    %v3046 = vadd.f32 %v3016, %v2892
    %v3047 = vadd.f32 %v3017, %v2895
    %v3048 = vadd.f32 %v3018, %v2900
    %v3049 = vadd.f32 %v3019, %v2903
    %v3050 = vadd.f32 %v3020, %v2908
    %v3051 = vadd.f32 %v3021, %v2911
    %v3052 = vadd.f32 %v3022, %v2916
    %v3053 = vadd.f32 %v3023, %v2919
    %v3054 = vadd.f32 %v3024, %v2924
    %v3055 = vadd.f32 %v3025, %v2927
    %v3056 = vadd.f32 %v3026, %v2932
    %v3057 = vadd.f32 %v3027, %v2935
    %v3058 = vadd.f32 %v3028, %v2940
    %v3059 = vadd.f32 %v3029, %v2943
    %v3060 = vadd.f32 %v3030, %v2948
    %v3061 = vadd.f32 %v3031, %v2951
    %v3062 = vadd.f32 %v3032, %v2956
    %v3063 = vadd.f32 %v3033, %v2959
    %v3064 = vadd.f32 %v3034, %v2964
    %v3065 = vadd.f32 %v3035, %v2967
    %v3066 = vadd.f32 %v3036, %v2972
    %v3067 = vadd.f32 %v3037, %v2975
    %v3068 = vadd.f32 %v3038, %v2980
    %v3069 = vadd.f32 %v3039, %v2983
    %v3070 = vadd.f32 %v3040, %v2988
    %v3071 = vadd.f32 %v3041, %v2991
    %v3072 = vadd.f32 %v3042, %v2996
    %v3073 = vadd.f32 %v3043, %v2999
    %v3074 = vadd.f32 %v3044, %v3004
    %v3075 = vadd.f32 %v3045, %v3007
    %3076 = vst [vmem:[#allocation2 + $0x10] sm:$0xff] %v3046
    %3077 = vst [vmem:[#allocation2 + $0x18] sm:$0xff] %v3047
    %3078 = vst [vmem:[#allocation2 + $0x20] sm:$0xff] %v3048
    %3079 = vst [vmem:[#allocation2 + $0x28] sm:$0xff] %v3049
    %3080 = vst [vmem:[#allocation2 + $0x30] sm:$0xff] %v3050
    %3081 = vst [vmem:[#allocation2 + $0x38] sm:$0xff] %v3051
    %3082 = vst [vmem:[#allocation2 + $0x40] sm:$0xff] %v3052
    %3083 = vst [vmem:[#allocation2 + $0x48] sm:$0xff] %v3053
    %3084 = vst [vmem:[#allocation2 + $0x50] sm:$0xff] %v3054
    %3085 = vst [vmem:[#allocation2 + $0x58] sm:$0xff] %v3055
    %3086 = vst [vmem:[#allocation2 + $0x60] sm:$0xff] %v3056
    %3087 = vst [vmem:[#allocation2 + $0x68] sm:$0xff] %v3057
    %3088 = vst [vmem:[#allocation2 + $0x70] sm:$0xff] %v3058
    %3089 = vst [vmem:[#allocation2 + $0x78] sm:$0xff] %v3059
    %3090 = vst [vmem:[#allocation2 + $0x80] sm:$0xff] %v3060
    %3091 = vst [vmem:[#allocation2 + $0x88] sm:$0xff] %v3061
    %3092 = vst [vmem:[#allocation2 + $0x90] sm:$0xff] %v3062
    %3093 = vst [vmem:[#allocation2 + $0x98] sm:$0xff] %v3063
    %3094 = vst [vmem:[#allocation2 + $0xa0] sm:$0xff] %v3064
    %3095 = vst [vmem:[#allocation2 + $0xa8] sm:$0xff] %v3065
    %3096 = vst [vmem:[#allocation2 + $0xb0] sm:$0xff] %v3066
    %3097 = vst [vmem:[#allocation2 + $0xb8] sm:$0xff] %v3067
    %3098 = vst [vmem:[#allocation2 + $0xc0] sm:$0xff] %v3068
    %3099 = vst [vmem:[#allocation2 + $0xc8] sm:$0xff] %v3069
    %3100 = vst [vmem:[#allocation2 + $0xd0] sm:$0xff] %v3070
    %3101 = vst [vmem:[#allocation2 + $0xd8] sm:$0xff] %v3071
    %3102 = vst [vmem:[#allocation2 + $0xe0] sm:$0xff] %v3072
    %3103 = vst [vmem:[#allocation2 + $0xe8] sm:$0xff] %v3073
    %3104 = vst [vmem:[#allocation2 + $0xf0] sm:$0xff] %v3074
    %3105 = vst [vmem:[#allocation2 + $0xf8] sm:$0xff] %v3075
    %v3106 = vld [vmem:[%s762] sm:$0xf]
    %v3107 = vld [vmem:[%s762 + $0x4] sm:$0xf]
    %v3108 = vld [vmem:[%s762 + $0x8] sm:$0xf]
    %v3109 = vld [vmem:[%s762 + $0xc] sm:$0xf]
    %v3110 = vld [vmem:[%s762 + $0x10] sm:$0xf]
    %v3111 = vld [vmem:[%s762 + $0x14] sm:$0xf]
    %v3112 = vld [vmem:[%s762 + $0x18] sm:$0xf]
    %v3113 = vld [vmem:[%s762 + $0x1c] sm:$0xf]
    %v3114 = vld [vmem:[%s762 + $0x20] sm:$0xf]
    %v3115 = vld [vmem:[%s762 + $0x24] sm:$0xf]
    %v3116 = vld [vmem:[%s762 + $0x28] sm:$0xf]
    %v3117 = vld [vmem:[%s762 + $0x2c] sm:$0xf]
    %v3118 = vld [vmem:[%s762 + $0x30] sm:$0xf]
    %v3119 = vld [vmem:[%s762 + $0x34] sm:$0xf]
    %v3120 = vld [vmem:[%s762 + $0x38] sm:$0xf]
    %v3121 = vld [vmem:[%s762 + $0x3c] sm:$0xf]
    %v3138 = vunpack.c.l.b16 %v3106
    %v3139 = vunpack.c.l.b16 %v3107
    %v3140 = vunpack.c.l.b16 %v3108
    %v3141 = vunpack.c.l.b16 %v3109
    %v3142 = vunpack.c.l.b16 %v3110
    %v3143 = vunpack.c.l.b16 %v3111
    %v3144 = vunpack.c.l.b16 %v3112
    %v3145 = vunpack.c.l.b16 %v3113
    %v3146 = vunpack.c.l.b16 %v3114
    %v3147 = vunpack.c.l.b16 %v3115
    %v3148 = vunpack.c.l.b16 %v3116
    %v3149 = vunpack.c.l.b16 %v3117
    %v3150 = vunpack.c.l.b16 %v3118
    %v3151 = vunpack.c.l.b16 %v3119
    %v3152 = vunpack.c.l.b16 %v3120
    %v3153 = vunpack.c.l.b16 %v3121
    %v3154 = vpack.c.b16 %v3139, %v3138
    %v3155 = vpack.c.b16 %v3141, %v3140
    %v3156 = vpack.c.b16 %v3143, %v3142
    %v3157 = vpack.c.b16 %v3145, %v3144
    %v3158 = vpack.c.b16 %v3147, %v3146
    %v3159 = vpack.c.b16 %v3149, %v3148
    %v3160 = vpack.c.b16 %v3151, %v3150
    %v3161 = vpack.c.b16 %v3153, %v3152
    %3170 = vmatprep.subr.bf16.mxu0 0
    %3171 = vmatpush1.bf16.msra.mxu0 %v3161
    %3172 = vmatprep.subr.bf16.mxu0 0
    %3173 = vmatpush1.bf16.msra.mxu0 %v3160
    %3174 = vmatprep.subr.bf16.mxu0 0
    %3175 = vmatpush1.bf16.msra.mxu0 %v3159
    %3176 = vmatprep.subr.bf16.mxu0 0
    %3177 = vmatpush1.bf16.msra.mxu0 %v3158
    %3178 = vmatprep.subr.bf16.mxu0 0
    %3179 = vmatpush1.bf16.msra.mxu0 %v3157
    %3180 = vmatprep.subr.bf16.mxu0 0
    %3181 = vmatpush1.bf16.msra.mxu0 %v3156
    %3182 = vmatprep.subr.bf16.mxu0 0
    %3183 = vmatpush1.bf16.msra.mxu0 %v3155
    %3184 = vmatprep.subr.bf16.mxu0 0
    %3185 = vmatpush1.bf16.msra.mxu0 %v3154
    %3186 = vmatprep.subr.bf16.mxu0 0
    %3187 = vmatpush2.bf16.msra.mxu0 0
    %3188 = vmatprep.subr.bf16.mxu0 0
    %3189 = vmatpush2.bf16.msra.mxu0 0
    %3190 = vmatprep.subr.bf16.mxu0 0
    %3191 = vmatpush2.bf16.msra.mxu0 0
    %3192 = vmatprep.subr.bf16.mxu0 0
    %3193 = vmatpush2.bf16.msra.mxu0 0
    %3194 = vmatprep.subr.bf16.mxu0 0
    %3195 = vmatpush2.bf16.msra.mxu0 0
    %3196 = vmatprep.subr.bf16.mxu0 0
    %3197 = vmatpush2.bf16.msra.mxu0 0
    %3198 = vmatprep.subr.bf16.mxu0 0
    %3199 = vmatpush2.bf16.msra.mxu0 0
    %3200 = vmatprep.subr.bf16.mxu0 0
    %3201 = vmatpush2.bf16.msra.mxu0 0
    %3202 = vmatprep.mubr.bf16.mxu0 0
    %3203 = vmatmul.mubr.bf16.gmra.mxu0 %v2520
    %v3204 = vpop.f32.mrf.mxu0
    %v3205 = vpop.f32.mrf.mxu0
    %v3206 = vpop.f32.mrf.mxu0
    %v3207 = vpop.f32.mrf.mxu0
    %3208 = vmatprep.mubr.bf16.mxu0 0
    %3209 = vmatmul.mubr.bf16.gmra.mxu0 %v2521
    %v3210 = vpop.f32.mrf.mxu0
    %v3211 = vadd.f32 0.0, %v3210
    %v3212 = vpop.f32.mrf.mxu0
    %v3213 = vpop.f32.mrf.mxu0
    %v3214 = vadd.f32 0.0, %v3213
    %v3215 = vpop.f32.mrf.mxu0
    %3216 = vmatprep.mubr.bf16.mxu0 0
    %3217 = vmatmul.mubr.bf16.gmra.mxu0 %v2522
    %v3218 = vpop.f32.mrf.mxu0
    %v3219 = vadd.f32 0.0, %v3218
    %v3220 = vpop.f32.mrf.mxu0
    %v3221 = vpop.f32.mrf.mxu0
    %v3222 = vadd.f32 0.0, %v3221
    %v3223 = vpop.f32.mrf.mxu0
    %3224 = vmatprep.mubr.bf16.mxu0 0
    %3225 = vmatmul.mubr.bf16.gmra.mxu0 %v2523
    %v3226 = vpop.f32.mrf.mxu0
    %v3227 = vadd.f32 0.0, %v3226
    %v3228 = vpop.f32.mrf.mxu0
    %v3229 = vpop.f32.mrf.mxu0
    %v3230 = vadd.f32 0.0, %v3229
    %v3231 = vpop.f32.mrf.mxu0
    %3232 = vmatprep.mubr.bf16.mxu0 0
    %3233 = vmatmul.mubr.bf16.gmra.mxu0 %v2524
    %v3234 = vpop.f32.mrf.mxu0
    %v3235 = vadd.f32 0.0, %v3234
    %v3236 = vpop.f32.mrf.mxu0
    %v3237 = vpop.f32.mrf.mxu0
    %v3238 = vadd.f32 0.0, %v3237
    %v3239 = vpop.f32.mrf.mxu0
    %3240 = vmatprep.mubr.bf16.mxu0 0
    %3241 = vmatmul.mubr.bf16.gmra.mxu0 %v2525
    %v3242 = vpop.f32.mrf.mxu0
    %v3243 = vadd.f32 0.0, %v3242
    %v3244 = vpop.f32.mrf.mxu0
    %v3245 = vpop.f32.mrf.mxu0
    %v3246 = vadd.f32 0.0, %v3245
    %v3247 = vpop.f32.mrf.mxu0
    %3248 = vmatprep.mubr.bf16.mxu0 0
    %3249 = vmatmul.mubr.bf16.gmra.mxu0 %v2526
    %v3250 = vpop.f32.mrf.mxu0
    %v3251 = vadd.f32 0.0, %v3250
    %v3252 = vpop.f32.mrf.mxu0
    %v3253 = vpop.f32.mrf.mxu0
    %v3254 = vadd.f32 0.0, %v3253
    %v3255 = vpop.f32.mrf.mxu0
    %3256 = vmatprep.mubr.bf16.mxu0 0
    %3257 = vmatmul.mubr.bf16.gmra.mxu0 %v2527
    %v3258 = vpop.f32.mrf.mxu0
    %v3259 = vadd.f32 0.0, %v3258
    %v3260 = vpop.f32.mrf.mxu0
    %v3261 = vpop.f32.mrf.mxu0
    %v3262 = vadd.f32 0.0, %v3261
    %v3263 = vpop.f32.mrf.mxu0
    %3264 = vmatprep.mubr.bf16.mxu0 0
    %3265 = vmatmul.mubr.bf16.gmra.mxu0 %v2528
    %v3266 = vpop.f32.mrf.mxu0
    %v3267 = vadd.f32 0.0, %v3266
    %v3268 = vpop.f32.mrf.mxu0
    %v3269 = vpop.f32.mrf.mxu0
    %v3270 = vadd.f32 0.0, %v3269
    %v3271 = vpop.f32.mrf.mxu0
    %3272 = vmatprep.mubr.bf16.mxu0 0
    %3273 = vmatmul.mubr.bf16.gmra.mxu0 %v2529
    %v3274 = vpop.f32.mrf.mxu0
    %v3275 = vadd.f32 0.0, %v3274
    %v3276 = vpop.f32.mrf.mxu0
    %v3277 = vpop.f32.mrf.mxu0
    %v3278 = vadd.f32 0.0, %v3277
    %v3279 = vpop.f32.mrf.mxu0
    %3280 = vmatprep.mubr.bf16.mxu0 0
    %3281 = vmatmul.mubr.bf16.gmra.mxu0 %v2530
    %v3282 = vpop.f32.mrf.mxu0
    %v3283 = vadd.f32 0.0, %v3282
    %v3284 = vpop.f32.mrf.mxu0
    %v3285 = vpop.f32.mrf.mxu0
    %v3286 = vadd.f32 0.0, %v3285
    %v3287 = vpop.f32.mrf.mxu0
    %3288 = vmatprep.mubr.bf16.mxu0 0
    %3289 = vmatmul.mubr.bf16.gmra.mxu0 %v2531
    %v3290 = vpop.f32.mrf.mxu0
    %v3291 = vadd.f32 0.0, %v3290
    %v3292 = vpop.f32.mrf.mxu0
    %v3293 = vpop.f32.mrf.mxu0
    %v3294 = vadd.f32 0.0, %v3293
    %v3295 = vpop.f32.mrf.mxu0
    %3296 = vmatprep.mubr.bf16.mxu0 0
    %3297 = vmatmul.mubr.bf16.gmra.mxu0 %v2532
    %v3298 = vpop.f32.mrf.mxu0
    %v3299 = vadd.f32 0.0, %v3298
    %v3300 = vpop.f32.mrf.mxu0
    %v3301 = vpop.f32.mrf.mxu0
    %v3302 = vadd.f32 0.0, %v3301
    %v3303 = vpop.f32.mrf.mxu0
    %3304 = vmatprep.mubr.bf16.mxu0 0
    %3305 = vmatmul.mubr.bf16.gmra.mxu0 %v2533
    %v3306 = vpop.f32.mrf.mxu0
    %v3307 = vadd.f32 0.0, %v3306
    %v3308 = vpop.f32.mrf.mxu0
    %v3309 = vpop.f32.mrf.mxu0
    %v3310 = vadd.f32 0.0, %v3309
    %v3311 = vpop.f32.mrf.mxu0
    %3312 = vmatprep.mubr.bf16.mxu0 0
    %3313 = vmatmul.mubr.bf16.gmra.mxu0 %v2534
    %v3314 = vpop.f32.mrf.mxu0
    %v3315 = vadd.f32 0.0, %v3314
    %v3316 = vpop.f32.mrf.mxu0
    %v3317 = vpop.f32.mrf.mxu0
    %v3318 = vadd.f32 0.0, %v3317
    %v3319 = vpop.f32.mrf.mxu0
    %3320 = vmatprep.mubr.bf16.mxu0 0
    %3321 = vmatmul.mubr.bf16.gmra.mxu0 %v2535
    %v3322 = vpop.f32.mrf.mxu0
    %v3323 = vadd.f32 0.0, %v3322
    %v3324 = vpop.f32.mrf.mxu0
    %v3325 = vpop.f32.mrf.mxu0
    %v3326 = vadd.f32 0.0, %v3325
    %v3327 = vpop.f32.mrf.mxu0
    %3328 = vdwg.mxu0
    %v3329 = vld [vmem:[#allocation2] sm:$0xff]
    %v3330 = vld [vmem:[#allocation2 + $0x8] sm:$0xff]
    %v3331 = vld [vmem:[#allocation2 + $0x10] sm:$0xff]
    %v3332 = vld [vmem:[#allocation2 + $0x18] sm:$0xff]
    %v3333 = vld [vmem:[#allocation2 + $0x20] sm:$0xff]
    %v3334 = vld [vmem:[#allocation2 + $0x28] sm:$0xff]
    %v3335 = vld [vmem:[#allocation2 + $0x30] sm:$0xff]
    %v3336 = vld [vmem:[#allocation2 + $0x38] sm:$0xff]
    %v3337 = vld [vmem:[#allocation2 + $0x40] sm:$0xff]
    %v3338 = vld [vmem:[#allocation2 + $0x48] sm:$0xff]
    %v3339 = vld [vmem:[#allocation2 + $0x50] sm:$0xff]
    %v3340 = vld [vmem:[#allocation2 + $0x58] sm:$0xff]
    %v3341 = vld [vmem:[#allocation2 + $0x60] sm:$0xff]
    %v3342 = vld [vmem:[#allocation2 + $0x68] sm:$0xff]
    %v3343 = vld [vmem:[#allocation2 + $0x70] sm:$0xff]
    %v3344 = vld [vmem:[#allocation2 + $0x78] sm:$0xff]
    %v3345 = vld [vmem:[#allocation2 + $0x80] sm:$0xff]
    %v3346 = vld [vmem:[#allocation2 + $0x88] sm:$0xff]
    %v3347 = vld [vmem:[#allocation2 + $0x90] sm:$0xff]
    %v3348 = vld [vmem:[#allocation2 + $0x98] sm:$0xff]
    %v3349 = vld [vmem:[#allocation2 + $0xa0] sm:$0xff]
    %v3350 = vld [vmem:[#allocation2 + $0xa8] sm:$0xff]
    %v3351 = vld [vmem:[#allocation2 + $0xb0] sm:$0xff]
    %v3352 = vld [vmem:[#allocation2 + $0xb8] sm:$0xff]
    %v3353 = vld [vmem:[#allocation2 + $0xc0] sm:$0xff]
    %v3354 = vld [vmem:[#allocation2 + $0xc8] sm:$0xff]
    %v3355 = vld [vmem:[#allocation2 + $0xd0] sm:$0xff]
    %v3356 = vld [vmem:[#allocation2 + $0xd8] sm:$0xff]
    %v3357 = vld [vmem:[#allocation2 + $0xe0] sm:$0xff]
    %v3358 = vld [vmem:[#allocation2 + $0xe8] sm:$0xff]
    %v3359 = vadd.f32 %v3329, %v3211
    %v3360 = vadd.f32 %v3330, %v3214
    %v3361 = vadd.f32 %v3331, %v3219
    %v3362 = vadd.f32 %v3332, %v3222
    %v3363 = vadd.f32 %v3333, %v3227
    %v3364 = vadd.f32 %v3334, %v3230
    %v3365 = vadd.f32 %v3335, %v3235
    %v3366 = vadd.f32 %v3336, %v3238
    %v3367 = vadd.f32 %v3337, %v3243
    %v3368 = vadd.f32 %v3338, %v3246
    %v3369 = vadd.f32 %v3339, %v3251
    %v3370 = vadd.f32 %v3340, %v3254
    %v3371 = vadd.f32 %v3341, %v3259
    %v3372 = vadd.f32 %v3342, %v3262
    %v3373 = vadd.f32 %v3343, %v3267
    %v3374 = vadd.f32 %v3344, %v3270
    %v3375 = vadd.f32 %v3345, %v3275
    %v3376 = vadd.f32 %v3346, %v3278
    %v3377 = vadd.f32 %v3347, %v3283
    %v3378 = vadd.f32 %v3348, %v3286
    %v3379 = vadd.f32 %v3349, %v3291
    %v3380 = vadd.f32 %v3350, %v3294
    %v3381 = vadd.f32 %v3351, %v3299
    %v3382 = vadd.f32 %v3352, %v3302
    %v3383 = vadd.f32 %v3353, %v3307
    %v3384 = vadd.f32 %v3354, %v3310
    %v3385 = vadd.f32 %v3355, %v3315
    %v3386 = vadd.f32 %v3356, %v3318
    %v3387 = vadd.f32 %v3357, %v3323
    %v3388 = vadd.f32 %v3358, %v3326
    %3389 = vst [vmem:[#allocation2] sm:$0xff] %v3359
    %3390 = vst [vmem:[#allocation2 + $0x8] sm:$0xff] %v3360
    %3391 = vst [vmem:[#allocation2 + $0x10] sm:$0xff] %v3361
    %3392 = vst [vmem:[#allocation2 + $0x18] sm:$0xff] %v3362
    %3393 = vst [vmem:[#allocation2 + $0x20] sm:$0xff] %v3363
    %3394 = vst [vmem:[#allocation2 + $0x28] sm:$0xff] %v3364
    %3395 = vst [vmem:[#allocation2 + $0x30] sm:$0xff] %v3365
    %3396 = vst [vmem:[#allocation2 + $0x38] sm:$0xff] %v3366
    %3397 = vst [vmem:[#allocation2 + $0x40] sm:$0xff] %v3367
    %3398 = vst [vmem:[#allocation2 + $0x48] sm:$0xff] %v3368
    %3399 = vst [vmem:[#allocation2 + $0x50] sm:$0xff] %v3369
    %3400 = vst [vmem:[#allocation2 + $0x58] sm:$0xff] %v3370
    %3401 = vst [vmem:[#allocation2 + $0x60] sm:$0xff] %v3371
    %3402 = vst [vmem:[#allocation2 + $0x68] sm:$0xff] %v3372
    %3403 = vst [vmem:[#allocation2 + $0x70] sm:$0xff] %v3373
    %3404 = vst [vmem:[#allocation2 + $0x78] sm:$0xff] %v3374
    %3405 = vst [vmem:[#allocation2 + $0x80] sm:$0xff] %v3375
    %3406 = vst [vmem:[#allocation2 + $0x88] sm:$0xff] %v3376
    %3407 = vst [vmem:[#allocation2 + $0x90] sm:$0xff] %v3377
    %3408 = vst [vmem:[#allocation2 + $0x98] sm:$0xff] %v3378
    %3409 = vst [vmem:[#allocation2 + $0xa0] sm:$0xff] %v3379
    %3410 = vst [vmem:[#allocation2 + $0xa8] sm:$0xff] %v3380
    %3411 = vst [vmem:[#allocation2 + $0xb0] sm:$0xff] %v3381
    %3412 = vst [vmem:[#allocation2 + $0xb8] sm:$0xff] %v3382
    %3413 = vst [vmem:[#allocation2 + $0xc0] sm:$0xff] %v3383
    %3414 = vst [vmem:[#allocation2 + $0xc8] sm:$0xff] %v3384
    %3415 = vst [vmem:[#allocation2 + $0xd0] sm:$0xff] %v3385
    %3416 = vst [vmem:[#allocation2 + $0xd8] sm:$0xff] %v3386
    %3417 = vst [vmem:[#allocation2 + $0xe0] sm:$0xff] %v3387
    %3418 = vst [vmem:[#allocation2 + $0xe8] sm:$0xff] %v3388
    %v3419 = vld [vmem:[#allocation2] sm:$0xff]
    %v3420 = vld [vmem:[#allocation2 + $0x8] sm:$0xff]
    %v3421 = vld [vmem:[#allocation2 + $0x10] sm:$0xff]
    %v3422 = vld [vmem:[#allocation2 + $0x18] sm:$0xff]
    %v3423 = vld [vmem:[#allocation2 + $0x20] sm:$0xff]
    %v3424 = vld [vmem:[#allocation2 + $0x28] sm:$0xff]
    %v3425 = vld [vmem:[#allocation2 + $0x30] sm:$0xff]
    %v3426 = vld [vmem:[#allocation2 + $0x38] sm:$0xff]
    %v3427 = vld [vmem:[#allocation2 + $0x40] sm:$0xff]
    %v3428 = vld [vmem:[#allocation2 + $0x48] sm:$0xff]
    %v3429 = vld [vmem:[#allocation2 + $0x50] sm:$0xff]
    %v3430 = vld [vmem:[#allocation2 + $0x58] sm:$0xff]
    %v3431 = vld [vmem:[#allocation2 + $0x60] sm:$0xff]
    %v3432 = vld [vmem:[#allocation2 + $0x68] sm:$0xff]
    %v3433 = vld [vmem:[#allocation2 + $0x70] sm:$0xff]
    %v3434 = vld [vmem:[#allocation2 + $0x78] sm:$0xff]
    %v3435 = vld [vmem:[#allocation2 + $0x80] sm:$0xff]
    %v3436 = vld [vmem:[#allocation2 + $0x88] sm:$0xff]
    %v3437 = vld [vmem:[#allocation2 + $0x90] sm:$0xff]
    %v3438 = vld [vmem:[#allocation2 + $0x98] sm:$0xff]
    %v3439 = vld [vmem:[#allocation2 + $0xa0] sm:$0xff]
    %v3440 = vld [vmem:[#allocation2 + $0xa8] sm:$0xff]
    %v3441 = vld [vmem:[#allocation2 + $0xb0] sm:$0xff]
    %v3442 = vld [vmem:[#allocation2 + $0xb8] sm:$0xff]
    %v3443 = vld [vmem:[#allocation2 + $0xc0] sm:$0xff]
    %v3444 = vld [vmem:[#allocation2 + $0xc8] sm:$0xff]
    %v3445 = vld [vmem:[#allocation2 + $0xd0] sm:$0xff]
    %v3446 = vld [vmem:[#allocation2 + $0xd8] sm:$0xff]
    %v3447 = vld [vmem:[#allocation2 + $0xe0] sm:$0xff]
    %v3448 = vld [vmem:[#allocation2 + $0xe8] sm:$0xff]
    %v3449 = vld [vmem:[#allocation2 + $0xf0] sm:$0xff]
    %v3450 = vld [vmem:[#allocation2 + $0xf8] sm:$0xff]
    %v3451 = vld [vmem:[%s3] sm:$0x1]
    %v3453 = vlaneseq
    %v3454 = vshrl.u32 %v3453, 7
    %v3455 = vsub.s32 0, %v3454
    %v3456 = vrot.slane %v3451, %v3455
    %v3458 = vadd.f32 %v3419, %v3456
    %v3459 = vadd.f32 %v3420, %v3456
    %v3460 = vadd.f32 %v3421, %v3456
    %v3461 = vadd.f32 %v3422, %v3456
    %v3462 = vadd.f32 %v3423, %v3456
    %v3463 = vadd.f32 %v3424, %v3456
    %v3464 = vadd.f32 %v3425, %v3456
    %v3465 = vadd.f32 %v3426, %v3456
    %v3466 = vadd.f32 %v3427, %v3456
    %v3467 = vadd.f32 %v3428, %v3456
    %v3468 = vadd.f32 %v3429, %v3456
    %v3469 = vadd.f32 %v3430, %v3456
    %v3470 = vadd.f32 %v3431, %v3456
    %v3471 = vadd.f32 %v3432, %v3456
    %v3472 = vadd.f32 %v3433, %v3456
    %v3473 = vadd.f32 %v3434, %v3456
    %v3474 = vadd.f32 %v3435, %v3456
    %v3475 = vadd.f32 %v3436, %v3456
    %v3476 = vadd.f32 %v3437, %v3456
    %v3477 = vadd.f32 %v3438, %v3456
    %v3478 = vadd.f32 %v3439, %v3456
    %v3479 = vadd.f32 %v3440, %v3456
    %v3480 = vadd.f32 %v3441, %v3456
    %v3481 = vadd.f32 %v3442, %v3456
    %v3482 = vadd.f32 %v3443, %v3456
    %v3483 = vadd.f32 %v3444, %v3456
    %v3484 = vadd.f32 %v3445, %v3456
    %v3485 = vadd.f32 %v3446, %v3456
    %v3486 = vadd.f32 %v3447, %v3456
    %v3487 = vadd.f32 %v3448, %v3456
    %v3488 = vadd.f32 %v3449, %v3456
    %v3489 = vadd.f32 %v3450, %v3456
    %v3490 = vmax.f32 %v3458, 0.0
    %v3491 = vmax.f32 %v3459, 0.0
    %v3492 = vmax.f32 %v3460, 0.0
    %v3493 = vmax.f32 %v3461, 0.0
    %v3494 = vmax.f32 %v3462, 0.0
    %v3495 = vmax.f32 %v3463, 0.0
    %v3496 = vmax.f32 %v3464, 0.0
    %v3497 = vmax.f32 %v3465, 0.0
    %v3498 = vmax.f32 %v3466, 0.0
    %v3499 = vmax.f32 %v3467, 0.0
    %v3500 = vmax.f32 %v3468, 0.0
    %v3501 = vmax.f32 %v3469, 0.0
    %v3502 = vmax.f32 %v3470, 0.0
    %v3503 = vmax.f32 %v3471, 0.0
    %v3504 = vmax.f32 %v3472, 0.0
    %v3505 = vmax.f32 %v3473, 0.0
    %v3506 = vmax.f32 %v3474, 0.0
    %v3507 = vmax.f32 %v3475, 0.0
    %v3508 = vmax.f32 %v3476, 0.0
    %v3509 = vmax.f32 %v3477, 0.0
    %v3510 = vmax.f32 %v3478, 0.0
    %v3511 = vmax.f32 %v3479, 0.0
    %v3512 = vmax.f32 %v3480, 0.0
    %v3513 = vmax.f32 %v3481, 0.0
    %v3514 = vmax.f32 %v3482, 0.0
    %v3515 = vmax.f32 %v3483, 0.0
    %v3516 = vmax.f32 %v3484, 0.0
    %v3517 = vmax.f32 %v3485, 0.0
    %v3518 = vmax.f32 %v3486, 0.0
    %v3519 = vmax.f32 %v3487, 0.0
    %v3520 = vmax.f32 %v3488, 0.0
    %v3521 = vmax.f32 %v3489, 0.0
    %v3522 = vpack.c.bf16 %v3491, %v3490
    %v3523 = vpack.c.bf16 %v3493, %v3492
    %v3524 = vpack.c.bf16 %v3495, %v3494
    %v3525 = vpack.c.bf16 %v3497, %v3496
    %v3526 = vpack.c.bf16 %v3499, %v3498
    %v3527 = vpack.c.bf16 %v3501, %v3500
    %v3528 = vpack.c.bf16 %v3503, %v3502
    %v3529 = vpack.c.bf16 %v3505, %v3504
    %v3530 = vpack.c.bf16 %v3507, %v3506
    %v3531 = vpack.c.bf16 %v3509, %v3508
    %v3532 = vpack.c.bf16 %v3511, %v3510
    %v3533 = vpack.c.bf16 %v3513, %v3512
    %v3534 = vpack.c.bf16 %v3515, %v3514
    %v3535 = vpack.c.bf16 %v3517, %v3516
    %v3536 = vpack.c.bf16 %v3519, %v3518
    %v3537 = vpack.c.bf16 %v3521, %v3520
    %v3538 = vld [vmem:[%s1195] sm:$0xf]
    %v3539 = vld [vmem:[%s1195 + $0x4] sm:$0xf]
    %v3540 = vld [vmem:[%s1195 + $0x8] sm:$0xf]
    %v3541 = vld [vmem:[%s1195 + $0xc] sm:$0xf]
    %v3542 = vld [vmem:[%s1195 + $0x10] sm:$0xf]
    %v3543 = vld [vmem:[%s1195 + $0x14] sm:$0xf]
    %v3544 = vld [vmem:[%s1195 + $0x18] sm:$0xf]
    %v3545 = vld [vmem:[%s1195 + $0x1c] sm:$0xf]
    %v3546 = vld [vmem:[%s1195 + $0x20] sm:$0xf]
    %v3547 = vld [vmem:[%s1195 + $0x24] sm:$0xf]
    %v3548 = vld [vmem:[%s1195 + $0x28] sm:$0xf]
    %v3549 = vld [vmem:[%s1195 + $0x2c] sm:$0xf]
    %v3550 = vld [vmem:[%s1195 + $0x30] sm:$0xf]
    %v3551 = vld [vmem:[%s1195 + $0x34] sm:$0xf]
    %v3552 = vld [vmem:[%s1195 + $0x38] sm:$0xf]
    %v3553 = vld [vmem:[%s1195 + $0x3c] sm:$0xf]
    %v3570 = vunpack.c.l.b16 %v3538
    %v3571 = vunpack.c.l.b16 %v3539
    %v3572 = vunpack.c.l.b16 %v3540
    %v3573 = vunpack.c.l.b16 %v3541
    %v3574 = vunpack.c.l.b16 %v3542
    %v3575 = vunpack.c.l.b16 %v3543
    %v3576 = vunpack.c.l.b16 %v3544
    %v3577 = vunpack.c.l.b16 %v3545
    %v3578 = vunpack.c.l.b16 %v3546
    %v3579 = vunpack.c.l.b16 %v3547
    %v3580 = vunpack.c.l.b16 %v3548
    %v3581 = vunpack.c.l.b16 %v3549
    %v3582 = vunpack.c.l.b16 %v3550
    %v3583 = vunpack.c.l.b16 %v3551
    %v3584 = vunpack.c.l.b16 %v3552
    %v3585 = vunpack.c.l.b16 %v3553
    %v3586 = vpack.c.b16 %v3571, %v3570
    %v3587 = vpack.c.b16 %v3573, %v3572
    %v3588 = vpack.c.b16 %v3575, %v3574
    %v3589 = vpack.c.b16 %v3577, %v3576
    %v3590 = vpack.c.b16 %v3579, %v3578
    %v3591 = vpack.c.b16 %v3581, %v3580
    %v3592 = vpack.c.b16 %v3583, %v3582
    %v3593 = vpack.c.b16 %v3585, %v3584
    %3602 = vmatprep.subr.bf16.mxu0 0
    %3603 = vmatpush1.bf16.msra.mxu0 %v3593
    %3604 = vmatprep.subr.bf16.mxu0 0
    %3605 = vmatpush1.bf16.msra.mxu0 %v3592
    %3606 = vmatprep.subr.bf16.mxu0 0
    %3607 = vmatpush1.bf16.msra.mxu0 %v3591
    %3608 = vmatprep.subr.bf16.mxu0 0
    %3609 = vmatpush1.bf16.msra.mxu0 %v3590
    %3610 = vmatprep.subr.bf16.mxu0 0
    %3611 = vmatpush1.bf16.msra.mxu0 %v3589
    %3612 = vmatprep.subr.bf16.mxu0 0
    %3613 = vmatpush1.bf16.msra.mxu0 %v3588
    %3614 = vmatprep.subr.bf16.mxu0 0
    %3615 = vmatpush1.bf16.msra.mxu0 %v3587
    %3616 = vmatprep.subr.bf16.mxu0 0
    %3617 = vmatpush1.bf16.msra.mxu0 %v3586
    %3618 = vmatprep.subr.bf16.mxu0 0
    %3619 = vmatpush2.bf16.msra.mxu0 0
    %3620 = vmatprep.subr.bf16.mxu0 0
    %3621 = vmatpush2.bf16.msra.mxu0 0
    %3622 = vmatprep.subr.bf16.mxu0 0
    %3623 = vmatpush2.bf16.msra.mxu0 0
    %3624 = vmatprep.subr.bf16.mxu0 0
    %3625 = vmatpush2.bf16.msra.mxu0 0
    %3626 = vmatprep.subr.bf16.mxu0 0
    %3627 = vmatpush2.bf16.msra.mxu0 0
    %3628 = vmatprep.subr.bf16.mxu0 0
    %3629 = vmatpush2.bf16.msra.mxu0 0
    %3630 = vmatprep.subr.bf16.mxu0 0
    %3631 = vmatpush2.bf16.msra.mxu0 0
    %3632 = vmatprep.subr.bf16.mxu0 0
    %3633 = vmatpush2.bf16.msra.mxu0 0
    %3634 = vmatprep.mubr.bf16.mxu0 0
    %3635 = vmatmul.mubr.bf16.gmra.mxu0 %v3522
    %v3636 = vpop.f32.mrf.mxu0
    %v3637 = vadd.f32 0.0, %v3636
    %v3638 = vpop.f32.mrf.mxu0
    %v3639 = vpop.f32.mrf.mxu0
    %v3640 = vadd.f32 0.0, %v3639
    %v3641 = vpop.f32.mrf.mxu0
    %3642 = vmatprep.mubr.bf16.mxu0 0
    %3643 = vmatmul.mubr.bf16.gmra.mxu0 %v3523
    %v3644 = vpop.f32.mrf.mxu0
    %v3645 = vadd.f32 0.0, %v3644
    %v3646 = vpop.f32.mrf.mxu0
    %v3647 = vpop.f32.mrf.mxu0
    %v3648 = vadd.f32 0.0, %v3647
    %v3649 = vpop.f32.mrf.mxu0
    %3650 = vmatprep.mubr.bf16.mxu0 0
    %3651 = vmatmul.mubr.bf16.gmra.mxu0 %v3524
    %v3652 = vpop.f32.mrf.mxu0
    %v3653 = vadd.f32 0.0, %v3652
    %v3654 = vpop.f32.mrf.mxu0
    %v3655 = vpop.f32.mrf.mxu0
    %v3656 = vadd.f32 0.0, %v3655
    %v3657 = vpop.f32.mrf.mxu0
    %3658 = vmatprep.mubr.bf16.mxu0 0
    %3659 = vmatmul.mubr.bf16.gmra.mxu0 %v3525
    %v3660 = vpop.f32.mrf.mxu0
    %v3661 = vadd.f32 0.0, %v3660
    %v3662 = vpop.f32.mrf.mxu0
    %v3663 = vpop.f32.mrf.mxu0
    %v3664 = vadd.f32 0.0, %v3663
    %v3665 = vpop.f32.mrf.mxu0
    %3666 = vmatprep.mubr.bf16.mxu0 0
    %3667 = vmatmul.mubr.bf16.gmra.mxu0 %v3526
    %v3668 = vpop.f32.mrf.mxu0
    %v3669 = vadd.f32 0.0, %v3668
    %v3670 = vpop.f32.mrf.mxu0
    %v3671 = vpop.f32.mrf.mxu0
    %v3672 = vadd.f32 0.0, %v3671
    %v3673 = vpop.f32.mrf.mxu0
    %3674 = vmatprep.mubr.bf16.mxu0 0
    %3675 = vmatmul.mubr.bf16.gmra.mxu0 %v3527
    %v3676 = vpop.f32.mrf.mxu0
    %v3677 = vadd.f32 0.0, %v3676
    %v3678 = vpop.f32.mrf.mxu0
    %v3679 = vpop.f32.mrf.mxu0
    %v3680 = vadd.f32 0.0, %v3679
    %v3681 = vpop.f32.mrf.mxu0
    %3682 = vmatprep.mubr.bf16.mxu0 0
    %3683 = vmatmul.mubr.bf16.gmra.mxu0 %v3528
    %v3684 = vpop.f32.mrf.mxu0
    %v3685 = vadd.f32 0.0, %v3684
    %v3686 = vpop.f32.mrf.mxu0
    %v3687 = vpop.f32.mrf.mxu0
    %v3688 = vadd.f32 0.0, %v3687
    %v3689 = vpop.f32.mrf.mxu0
    %3690 = vmatprep.mubr.bf16.mxu0 0
    %3691 = vmatmul.mubr.bf16.gmra.mxu0 %v3529
    %v3692 = vpop.f32.mrf.mxu0
    %v3693 = vadd.f32 0.0, %v3692
    %v3694 = vpop.f32.mrf.mxu0
    %v3695 = vpop.f32.mrf.mxu0
    %v3696 = vadd.f32 0.0, %v3695
    %v3697 = vpop.f32.mrf.mxu0
    %3698 = vmatprep.mubr.bf16.mxu0 0
    %3699 = vmatmul.mubr.bf16.gmra.mxu0 %v3530
    %v3700 = vpop.f32.mrf.mxu0
    %v3701 = vadd.f32 0.0, %v3700
    %v3702 = vpop.f32.mrf.mxu0
    %v3703 = vpop.f32.mrf.mxu0
    %v3704 = vadd.f32 0.0, %v3703
    %v3705 = vpop.f32.mrf.mxu0
    %3706 = vmatprep.mubr.bf16.mxu0 0
    %3707 = vmatmul.mubr.bf16.gmra.mxu0 %v3531
    %v3708 = vpop.f32.mrf.mxu0
    %v3709 = vadd.f32 0.0, %v3708
    %v3710 = vpop.f32.mrf.mxu0
    %v3711 = vpop.f32.mrf.mxu0
    %v3712 = vadd.f32 0.0, %v3711
    %v3713 = vpop.f32.mrf.mxu0
    %3714 = vmatprep.mubr.bf16.mxu0 0
    %3715 = vmatmul.mubr.bf16.gmra.mxu0 %v3532
    %v3716 = vpop.f32.mrf.mxu0
    %v3717 = vadd.f32 0.0, %v3716
    %v3718 = vpop.f32.mrf.mxu0
    %v3719 = vpop.f32.mrf.mxu0
    %v3720 = vadd.f32 0.0, %v3719
    %v3721 = vpop.f32.mrf.mxu0
    %3722 = vmatprep.mubr.bf16.mxu0 0
    %3723 = vmatmul.mubr.bf16.gmra.mxu0 %v3533
    %v3724 = vpop.f32.mrf.mxu0
    %v3725 = vadd.f32 0.0, %v3724
    %v3726 = vpop.f32.mrf.mxu0
    %v3727 = vpop.f32.mrf.mxu0
    %v3728 = vadd.f32 0.0, %v3727
    %v3729 = vpop.f32.mrf.mxu0
    %3730 = vmatprep.mubr.bf16.mxu0 0
    %3731 = vmatmul.mubr.bf16.gmra.mxu0 %v3534
    %v3732 = vpop.f32.mrf.mxu0
    %v3733 = vadd.f32 0.0, %v3732
    %v3734 = vpop.f32.mrf.mxu0
    %v3735 = vpop.f32.mrf.mxu0
    %v3736 = vadd.f32 0.0, %v3735
    %v3737 = vpop.f32.mrf.mxu0
    %3738 = vmatprep.mubr.bf16.mxu0 0
    %3739 = vmatmul.mubr.bf16.gmra.mxu0 %v3535
    %v3740 = vpop.f32.mrf.mxu0
    %v3741 = vadd.f32 0.0, %v3740
    %v3742 = vpop.f32.mrf.mxu0
    %v3743 = vpop.f32.mrf.mxu0
    %v3744 = vadd.f32 0.0, %v3743
    %v3745 = vpop.f32.mrf.mxu0
    %3746 = vmatprep.mubr.bf16.mxu0 0
    %3747 = vmatmul.mubr.bf16.gmra.mxu0 %v3536
    %v3748 = vpop.f32.mrf.mxu0
    %v3749 = vadd.f32 0.0, %v3748
    %v3750 = vpop.f32.mrf.mxu0
    %v3751 = vpop.f32.mrf.mxu0
    %v3752 = vadd.f32 0.0, %v3751
    %v3753 = vpop.f32.mrf.mxu0
    %3754 = vmatprep.mubr.bf16.mxu0 0
    %3755 = vmatmul.mubr.bf16.gmra.mxu0 %v3537
    %v3756 = vpop.f32.mrf.mxu0
    %v3757 = vadd.f32 0.0, %v3756
    %v3758 = vpop.f32.mrf.mxu0
    %v3759 = vpop.f32.mrf.mxu0
    %v3760 = vadd.f32 0.0, %v3759
    %v3761 = vpop.f32.mrf.mxu0
    %3762 = vdwg.mxu0
    %3763 = vst [vmem:[#allocation2] sm:$0xff] %v3637
    %3764 = vst [vmem:[#allocation2 + $0x8] sm:$0xff] %v3640
    %3765 = vst [vmem:[#allocation2 + $0x10] sm:$0xff] %v3645
    %3766 = vst [vmem:[#allocation2 + $0x18] sm:$0xff] %v3648
    %3767 = vst [vmem:[#allocation2 + $0x20] sm:$0xff] %v3653
    %3768 = vst [vmem:[#allocation2 + $0x28] sm:$0xff] %v3656
    %3769 = vst [vmem:[#allocation2 + $0x30] sm:$0xff] %v3661
    %3770 = vst [vmem:[#allocation2 + $0x38] sm:$0xff] %v3664
    %3771 = vst [vmem:[#allocation2 + $0x40] sm:$0xff] %v3669
    %3772 = vst [vmem:[#allocation2 + $0x48] sm:$0xff] %v3672
    %3773 = vst [vmem:[#allocation2 + $0x50] sm:$0xff] %v3677
    %3774 = vst [vmem:[#allocation2 + $0x58] sm:$0xff] %v3680
    %3775 = vst [vmem:[#allocation2 + $0x60] sm:$0xff] %v3685
    %3776 = vst [vmem:[#allocation2 + $0x68] sm:$0xff] %v3688
    %3777 = vst [vmem:[#allocation2 + $0x70] sm:$0xff] %v3693
    %3778 = vst [vmem:[#allocation2 + $0x78] sm:$0xff] %v3696
    %3779 = vst [vmem:[#allocation2 + $0x80] sm:$0xff] %v3701
    %3780 = vst [vmem:[#allocation2 + $0x88] sm:$0xff] %v3704
    %3781 = vst [vmem:[#allocation2 + $0x90] sm:$0xff] %v3709
    %3782 = vst [vmem:[#allocation2 + $0x98] sm:$0xff] %v3712
    %3783 = vst [vmem:[#allocation2 + $0xa0] sm:$0xff] %v3717
    %3784 = vst [vmem:[#allocation2 + $0xa8] sm:$0xff] %v3720
    %3785 = vst [vmem:[#allocation2 + $0xb0] sm:$0xff] %v3725
    %3786 = vst [vmem:[#allocation2 + $0xb8] sm:$0xff] %v3728
    %3787 = vst [vmem:[#allocation2 + $0xc0] sm:$0xff] %v3733
    %3788 = vst [vmem:[#allocation2 + $0xc8] sm:$0xff] %v3736
    %3789 = vst [vmem:[#allocation2 + $0xd0] sm:$0xff] %v3741
    %3790 = vst [vmem:[#allocation2 + $0xd8] sm:$0xff] %v3744
    %3791 = vst [vmem:[#allocation2 + $0xe0] sm:$0xff] %v3749
    %3792 = vst [vmem:[#allocation2 + $0xe8] sm:$0xff] %v3752
    %3793 = vst [vmem:[#allocation2 + $0xf0] sm:$0xff] %v3757
    %3794 = vst [vmem:[#allocation2 + $0xf8] sm:$0xff] %v3760
    %v3795 = vld [vmem:[#allocation8] sm:$0xf]
    %v3796 = vld [vmem:[#allocation8 + $0x4] sm:$0xf]
    %v3797 = vld [vmem:[#allocation8 + $0x8] sm:$0xf]
    %v3798 = vld [vmem:[#allocation8 + $0xc] sm:$0xf]
    %v3799 = vld [vmem:[#allocation8 + $0x10] sm:$0xf]
    %v3800 = vld [vmem:[#allocation8 + $0x14] sm:$0xf]
    %v3801 = vld [vmem:[#allocation8 + $0x18] sm:$0xf]
    %v3802 = vld [vmem:[#allocation8 + $0x1c] sm:$0xf]
    %v3803 = vld [vmem:[#allocation8 + $0x20] sm:$0xf]
    %v3804 = vld [vmem:[#allocation8 + $0x24] sm:$0xf]
    %v3805 = vld [vmem:[#allocation8 + $0x28] sm:$0xf]
    %v3806 = vld [vmem:[#allocation8 + $0x2c] sm:$0xf]
    %v3807 = vld [vmem:[#allocation8 + $0x30] sm:$0xf]
    %v3808 = vld [vmem:[#allocation8 + $0x34] sm:$0xf]
    %v3809 = vld [vmem:[#allocation8 + $0x38] sm:$0xf]
    %v3810 = vld [vmem:[#allocation8 + $0x3c] sm:$0xf]
    %v3827 = vunpack.c.l.b16 %v3795
    %v3828 = vunpack.c.l.b16 %v3796
    %v3829 = vunpack.c.l.b16 %v3797
    %v3830 = vunpack.c.l.b16 %v3798
    %v3831 = vunpack.c.l.b16 %v3799
    %v3832 = vunpack.c.l.b16 %v3800
    %v3833 = vunpack.c.l.b16 %v3801
    %v3834 = vunpack.c.l.b16 %v3802
    %v3835 = vunpack.c.l.b16 %v3803
    %v3836 = vunpack.c.l.b16 %v3804
    %v3837 = vunpack.c.l.b16 %v3805
    %v3838 = vunpack.c.l.b16 %v3806
    %v3839 = vunpack.c.l.b16 %v3807
    %v3840 = vunpack.c.l.b16 %v3808
    %v3841 = vunpack.c.l.b16 %v3809
    %v3842 = vunpack.c.l.b16 %v3810
    %v3843 = vpack.c.b16 %v3828, %v3827
    %v3844 = vpack.c.b16 %v3830, %v3829
    %v3845 = vpack.c.b16 %v3832, %v3831
    %v3846 = vpack.c.b16 %v3834, %v3833
    %v3847 = vpack.c.b16 %v3836, %v3835
    %v3848 = vpack.c.b16 %v3838, %v3837
    %v3849 = vpack.c.b16 %v3840, %v3839
    %v3850 = vpack.c.b16 %v3842, %v3841
    %3859 = vmatprep.subr.bf16.mxu0 0
    %3860 = vmatpush1.bf16.msra.mxu0 %v3850
    %3861 = vmatprep.subr.bf16.mxu0 0
    %3862 = vmatpush1.bf16.msra.mxu0 %v3849
    %3863 = vmatprep.subr.bf16.mxu0 0
    %3864 = vmatpush1.bf16.msra.mxu0 %v3848
    %3865 = vmatprep.subr.bf16.mxu0 0
    %3866 = vmatpush1.bf16.msra.mxu0 %v3847
    %3867 = vmatprep.subr.bf16.mxu0 0
    %3868 = vmatpush1.bf16.msra.mxu0 %v3846
    %3869 = vmatprep.subr.bf16.mxu0 0
    %3870 = vmatpush1.bf16.msra.mxu0 %v3845
    %3871 = vmatprep.subr.bf16.mxu0 0
    %3872 = vmatpush1.bf16.msra.mxu0 %v3844
    %3873 = vmatprep.subr.bf16.mxu0 0
    %3874 = vmatpush1.bf16.msra.mxu0 %v3843
    %3875 = vmatprep.subr.bf16.mxu0 0
    %3876 = vmatpush2.bf16.msra.mxu0 0
    %3877 = vmatprep.subr.bf16.mxu0 0
    %3878 = vmatpush2.bf16.msra.mxu0 0
    %3879 = vmatprep.subr.bf16.mxu0 0
    %3880 = vmatpush2.bf16.msra.mxu0 0
    %3881 = vmatprep.subr.bf16.mxu0 0
    %3882 = vmatpush2.bf16.msra.mxu0 0
    %3883 = vmatprep.subr.bf16.mxu0 0
    %3884 = vmatpush2.bf16.msra.mxu0 0
    %3885 = vmatprep.subr.bf16.mxu0 0
    %3886 = vmatpush2.bf16.msra.mxu0 0
    %3887 = vmatprep.subr.bf16.mxu0 0
    %3888 = vmatpush2.bf16.msra.mxu0 0
    %3889 = vmatprep.subr.bf16.mxu0 0
    %3890 = vmatpush2.bf16.msra.mxu0 0
    %3891 = vmatprep.mubr.bf16.mxu0 0
    %3892 = vmatmul.mubr.bf16.gmra.mxu0 %v3522
    %v3893 = vpop.f32.mrf.mxu0
    %v3894 = vadd.f32 0.0, %v3893
    %v3895 = vpop.f32.mrf.mxu0
    %v3896 = vpop.f32.mrf.mxu0
    %v3897 = vadd.f32 0.0, %v3896
    %v3898 = vpop.f32.mrf.mxu0
    %3899 = vmatprep.mubr.bf16.mxu0 0
    %3900 = vmatmul.mubr.bf16.gmra.mxu0 %v3523
    %v3901 = vpop.f32.mrf.mxu0
    %v3902 = vadd.f32 0.0, %v3901
    %v3903 = vpop.f32.mrf.mxu0
    %v3904 = vpop.f32.mrf.mxu0
    %v3905 = vadd.f32 0.0, %v3904
    %v3906 = vpop.f32.mrf.mxu0
    %3907 = vmatprep.mubr.bf16.mxu0 0
    %3908 = vmatmul.mubr.bf16.gmra.mxu0 %v3524
    %v3909 = vpop.f32.mrf.mxu0
    %v3910 = vadd.f32 0.0, %v3909
    %v3911 = vpop.f32.mrf.mxu0
    %v3912 = vpop.f32.mrf.mxu0
    %v3913 = vadd.f32 0.0, %v3912
    %v3914 = vpop.f32.mrf.mxu0
    %3915 = vmatprep.mubr.bf16.mxu0 0
    %3916 = vmatmul.mubr.bf16.gmra.mxu0 %v3525
    %v3917 = vpop.f32.mrf.mxu0
    %v3918 = vadd.f32 0.0, %v3917
    %v3919 = vpop.f32.mrf.mxu0
    %v3920 = vpop.f32.mrf.mxu0
    %v3921 = vadd.f32 0.0, %v3920
    %v3922 = vpop.f32.mrf.mxu0
    %3923 = vmatprep.mubr.bf16.mxu0 0
    %3924 = vmatmul.mubr.bf16.gmra.mxu0 %v3526
    %v3925 = vpop.f32.mrf.mxu0
    %v3926 = vadd.f32 0.0, %v3925
    %v3927 = vpop.f32.mrf.mxu0
    %v3928 = vpop.f32.mrf.mxu0
    %v3929 = vadd.f32 0.0, %v3928
    %v3930 = vpop.f32.mrf.mxu0
    %3931 = vmatprep.mubr.bf16.mxu0 0
    %3932 = vmatmul.mubr.bf16.gmra.mxu0 %v3527
    %v3933 = vpop.f32.mrf.mxu0
    %v3934 = vadd.f32 0.0, %v3933
    %v3935 = vpop.f32.mrf.mxu0
    %v3936 = vpop.f32.mrf.mxu0
    %v3937 = vadd.f32 0.0, %v3936
    %v3938 = vpop.f32.mrf.mxu0
    %3939 = vmatprep.mubr.bf16.mxu0 0
    %3940 = vmatmul.mubr.bf16.gmra.mxu0 %v3528
    %v3941 = vpop.f32.mrf.mxu0
    %v3942 = vadd.f32 0.0, %v3941
    %v3943 = vpop.f32.mrf.mxu0
    %v3944 = vpop.f32.mrf.mxu0
    %v3945 = vadd.f32 0.0, %v3944
    %v3946 = vpop.f32.mrf.mxu0
    %3947 = vmatprep.mubr.bf16.mxu0 0
    %3948 = vmatmul.mubr.bf16.gmra.mxu0 %v3529
    %v3949 = vpop.f32.mrf.mxu0
    %v3950 = vadd.f32 0.0, %v3949
    %v3951 = vpop.f32.mrf.mxu0
    %v3952 = vpop.f32.mrf.mxu0
    %v3953 = vadd.f32 0.0, %v3952
    %v3954 = vpop.f32.mrf.mxu0
    %3955 = vmatprep.mubr.bf16.mxu0 0
    %3956 = vmatmul.mubr.bf16.gmra.mxu0 %v3530
    %v3957 = vpop.f32.mrf.mxu0
    %v3958 = vadd.f32 0.0, %v3957
    %v3959 = vpop.f32.mrf.mxu0
    %v3960 = vpop.f32.mrf.mxu0
    %v3961 = vadd.f32 0.0, %v3960
    %v3962 = vpop.f32.mrf.mxu0
    %3963 = vmatprep.mubr.bf16.mxu0 0
    %3964 = vmatmul.mubr.bf16.gmra.mxu0 %v3531
    %v3965 = vpop.f32.mrf.mxu0
    %v3966 = vadd.f32 0.0, %v3965
    %v3967 = vpop.f32.mrf.mxu0
    %v3968 = vpop.f32.mrf.mxu0
    %v3969 = vadd.f32 0.0, %v3968
    %v3970 = vpop.f32.mrf.mxu0
    %3971 = vmatprep.mubr.bf16.mxu0 0
    %3972 = vmatmul.mubr.bf16.gmra.mxu0 %v3532
    %v3973 = vpop.f32.mrf.mxu0
    %v3974 = vadd.f32 0.0, %v3973
    %v3975 = vpop.f32.mrf.mxu0
    %v3976 = vpop.f32.mrf.mxu0
    %v3977 = vadd.f32 0.0, %v3976
    %v3978 = vpop.f32.mrf.mxu0
    %3979 = vmatprep.mubr.bf16.mxu0 0
    %3980 = vmatmul.mubr.bf16.gmra.mxu0 %v3533
    %v3981 = vpop.f32.mrf.mxu0
    %v3982 = vadd.f32 0.0, %v3981
    %v3983 = vpop.f32.mrf.mxu0
    %v3984 = vpop.f32.mrf.mxu0
    %v3985 = vadd.f32 0.0, %v3984
    %v3986 = vpop.f32.mrf.mxu0
    %3987 = vmatprep.mubr.bf16.mxu0 0
    %3988 = vmatmul.mubr.bf16.gmra.mxu0 %v3534
    %v3989 = vpop.f32.mrf.mxu0
    %v3990 = vadd.f32 0.0, %v3989
    %v3991 = vpop.f32.mrf.mxu0
    %v3992 = vpop.f32.mrf.mxu0
    %v3993 = vadd.f32 0.0, %v3992
    %v3994 = vpop.f32.mrf.mxu0
    %3995 = vmatprep.mubr.bf16.mxu0 0
    %3996 = vmatmul.mubr.bf16.gmra.mxu0 %v3535
    %v3997 = vpop.f32.mrf.mxu0
    %v3998 = vadd.f32 0.0, %v3997
    %v3999 = vpop.f32.mrf.mxu0
    %v4000 = vpop.f32.mrf.mxu0
    %v4001 = vadd.f32 0.0, %v4000
    %v4002 = vpop.f32.mrf.mxu0
    %4003 = vmatprep.mubr.bf16.mxu0 0
    %4004 = vmatmul.mubr.bf16.gmra.mxu0 %v3536
    %v4005 = vpop.f32.mrf.mxu0
    %v4006 = vadd.f32 0.0, %v4005
    %v4007 = vpop.f32.mrf.mxu0
    %v4008 = vpop.f32.mrf.mxu0
    %v4009 = vadd.f32 0.0, %v4008
    %v4010 = vpop.f32.mrf.mxu0
    %4011 = vmatprep.mubr.bf16.mxu0 0
    %4012 = vmatmul.mubr.bf16.gmra.mxu0 %v3537
    %v4013 = vpop.f32.mrf.mxu0
    %v4014 = vpop.f32.mrf.mxu0
    %v4015 = vpop.f32.mrf.mxu0
    %v4016 = vpop.f32.mrf.mxu0
    %4017 = vdwg.mxu0
    %v4018 = vld [vmem:[#allocation2 + $0x10] sm:$0xff]
    %v4019 = vld [vmem:[#allocation2 + $0x18] sm:$0xff]
    %v4020 = vld [vmem:[#allocation2 + $0x20] sm:$0xff]
    %v4021 = vld [vmem:[#allocation2 + $0x28] sm:$0xff]
    %v4022 = vld [vmem:[#allocation2 + $0x30] sm:$0xff]
    %v4023 = vld [vmem:[#allocation2 + $0x38] sm:$0xff]
    %v4024 = vld [vmem:[#allocation2 + $0x40] sm:$0xff]
    %v4025 = vld [vmem:[#allocation2 + $0x48] sm:$0xff]
    %v4026 = vld [vmem:[#allocation2 + $0x50] sm:$0xff]
    %v4027 = vld [vmem:[#allocation2 + $0x58] sm:$0xff]
    %v4028 = vld [vmem:[#allocation2 + $0x60] sm:$0xff]
    %v4029 = vld [vmem:[#allocation2 + $0x68] sm:$0xff]
    %v4030 = vld [vmem:[#allocation2 + $0x70] sm:$0xff]
    %v4031 = vld [vmem:[#allocation2 + $0x78] sm:$0xff]
    %v4032 = vld [vmem:[#allocation2 + $0x80] sm:$0xff]
    %v4033 = vld [vmem:[#allocation2 + $0x88] sm:$0xff]
    %v4034 = vld [vmem:[#allocation2 + $0x90] sm:$0xff]
    %v4035 = vld [vmem:[#allocation2 + $0x98] sm:$0xff]
    %v4036 = vld [vmem:[#allocation2 + $0xa0] sm:$0xff]
    %v4037 = vld [vmem:[#allocation2 + $0xa8] sm:$0xff]
    %v4038 = vld [vmem:[#allocation2 + $0xb0] sm:$0xff]
    %v4039 = vld [vmem:[#allocation2 + $0xb8] sm:$0xff]
    %v4040 = vld [vmem:[#allocation2 + $0xc0] sm:$0xff]
    %v4041 = vld [vmem:[#allocation2 + $0xc8] sm:$0xff]
    %v4042 = vld [vmem:[#allocation2 + $0xd0] sm:$0xff]
    %v4043 = vld [vmem:[#allocation2 + $0xd8] sm:$0xff]
    %v4044 = vld [vmem:[#allocation2 + $0xe0] sm:$0xff]
    %v4045 = vld [vmem:[#allocation2 + $0xe8] sm:$0xff]
    %v4046 = vld [vmem:[#allocation2 + $0xf0] sm:$0xff]
    %v4047 = vld [vmem:[#allocation2 + $0xf8] sm:$0xff]
    %v4048 = vadd.f32 %v4018, %v3894
    %v4049 = vadd.f32 %v4019, %v3897
    %v4050 = vadd.f32 %v4020, %v3902
    %v4051 = vadd.f32 %v4021, %v3905
    %v4052 = vadd.f32 %v4022, %v3910
    %v4053 = vadd.f32 %v4023, %v3913
    %v4054 = vadd.f32 %v4024, %v3918
    %v4055 = vadd.f32 %v4025, %v3921
    %v4056 = vadd.f32 %v4026, %v3926
    %v4057 = vadd.f32 %v4027, %v3929
    %v4058 = vadd.f32 %v4028, %v3934
    %v4059 = vadd.f32 %v4029, %v3937
    %v4060 = vadd.f32 %v4030, %v3942
    %v4061 = vadd.f32 %v4031, %v3945
    %v4062 = vadd.f32 %v4032, %v3950
    %v4063 = vadd.f32 %v4033, %v3953
    %v4064 = vadd.f32 %v4034, %v3958
    %v4065 = vadd.f32 %v4035, %v3961
    %v4066 = vadd.f32 %v4036, %v3966
    %v4067 = vadd.f32 %v4037, %v3969
    %v4068 = vadd.f32 %v4038, %v3974
    %v4069 = vadd.f32 %v4039, %v3977
    %v4070 = vadd.f32 %v4040, %v3982
    %v4071 = vadd.f32 %v4041, %v3985
    %v4072 = vadd.f32 %v4042, %v3990
    %v4073 = vadd.f32 %v4043, %v3993
    %v4074 = vadd.f32 %v4044, %v3998
    %v4075 = vadd.f32 %v4045, %v4001
    %v4076 = vadd.f32 %v4046, %v4006
    %v4077 = vadd.f32 %v4047, %v4009
    %4078 = vst [vmem:[#allocation2 + $0x10] sm:$0xff] %v4048
    %4079 = vst [vmem:[#allocation2 + $0x18] sm:$0xff] %v4049
    %4080 = vst [vmem:[#allocation2 + $0x20] sm:$0xff] %v4050
    %4081 = vst [vmem:[#allocation2 + $0x28] sm:$0xff] %v4051
    %4082 = vst [vmem:[#allocation2 + $0x30] sm:$0xff] %v4052
    %4083 = vst [vmem:[#allocation2 + $0x38] sm:$0xff] %v4053
    %4084 = vst [vmem:[#allocation2 + $0x40] sm:$0xff] %v4054
    %4085 = vst [vmem:[#allocation2 + $0x48] sm:$0xff] %v4055
    %4086 = vst [vmem:[#allocation2 + $0x50] sm:$0xff] %v4056
    %4087 = vst [vmem:[#allocation2 + $0x58] sm:$0xff] %v4057
    %4088 = vst [vmem:[#allocation2 + $0x60] sm:$0xff] %v4058
    %4089 = vst [vmem:[#allocation2 + $0x68] sm:$0xff] %v4059
    %4090 = vst [vmem:[#allocation2 + $0x70] sm:$0xff] %v4060
    %4091 = vst [vmem:[#allocation2 + $0x78] sm:$0xff] %v4061
    %4092 = vst [vmem:[#allocation2 + $0x80] sm:$0xff] %v4062
    %4093 = vst [vmem:[#allocation2 + $0x88] sm:$0xff] %v4063
    %4094 = vst [vmem:[#allocation2 + $0x90] sm:$0xff] %v4064
    %4095 = vst [vmem:[#allocation2 + $0x98] sm:$0xff] %v4065
    %4096 = vst [vmem:[#allocation2 + $0xa0] sm:$0xff] %v4066
    %4097 = vst [vmem:[#allocation2 + $0xa8] sm:$0xff] %v4067
    %4098 = vst [vmem:[#allocation2 + $0xb0] sm:$0xff] %v4068
    %4099 = vst [vmem:[#allocation2 + $0xb8] sm:$0xff] %v4069
    %4100 = vst [vmem:[#allocation2 + $0xc0] sm:$0xff] %v4070
    %4101 = vst [vmem:[#allocation2 + $0xc8] sm:$0xff] %v4071
    %4102 = vst [vmem:[#allocation2 + $0xd0] sm:$0xff] %v4072
    %4103 = vst [vmem:[#allocation2 + $0xd8] sm:$0xff] %v4073
    %4104 = vst [vmem:[#allocation2 + $0xe0] sm:$0xff] %v4074
    %4105 = vst [vmem:[#allocation2 + $0xe8] sm:$0xff] %v4075
    %4106 = vst [vmem:[#allocation2 + $0xf0] sm:$0xff] %v4076
    %4107 = vst [vmem:[#allocation2 + $0xf8] sm:$0xff] %v4077
    %v4108 = vld [vmem:[%s1766] sm:$0xf]
    %v4109 = vld [vmem:[%s1766 + $0x4] sm:$0xf]
    %v4110 = vld [vmem:[%s1766 + $0x8] sm:$0xf]
    %v4111 = vld [vmem:[%s1766 + $0xc] sm:$0xf]
    %v4112 = vld [vmem:[%s1766 + $0x10] sm:$0xf]
    %v4113 = vld [vmem:[%s1766 + $0x14] sm:$0xf]
    %v4114 = vld [vmem:[%s1766 + $0x18] sm:$0xf]
    %v4115 = vld [vmem:[%s1766 + $0x1c] sm:$0xf]
    %v4116 = vld [vmem:[%s1766 + $0x20] sm:$0xf]
    %v4117 = vld [vmem:[%s1766 + $0x24] sm:$0xf]
    %v4118 = vld [vmem:[%s1766 + $0x28] sm:$0xf]
    %v4119 = vld [vmem:[%s1766 + $0x2c] sm:$0xf]
    %v4120 = vld [vmem:[%s1766 + $0x30] sm:$0xf]
    %v4121 = vld [vmem:[%s1766 + $0x34] sm:$0xf]
    %v4122 = vld [vmem:[%s1766 + $0x38] sm:$0xf]
    %v4123 = vld [vmem:[%s1766 + $0x3c] sm:$0xf]
    %v4140 = vunpack.c.l.b16 %v4108
    %v4141 = vunpack.c.l.b16 %v4109
    %v4142 = vunpack.c.l.b16 %v4110
    %v4143 = vunpack.c.l.b16 %v4111
    %v4144 = vunpack.c.l.b16 %v4112
    %v4145 = vunpack.c.l.b16 %v4113
    %v4146 = vunpack.c.l.b16 %v4114
    %v4147 = vunpack.c.l.b16 %v4115
    %v4148 = vunpack.c.l.b16 %v4116
    %v4149 = vunpack.c.l.b16 %v4117
    %v4150 = vunpack.c.l.b16 %v4118
    %v4151 = vunpack.c.l.b16 %v4119
    %v4152 = vunpack.c.l.b16 %v4120
    %v4153 = vunpack.c.l.b16 %v4121
    %v4154 = vunpack.c.l.b16 %v4122
    %v4155 = vunpack.c.l.b16 %v4123
    %v4156 = vpack.c.b16 %v4141, %v4140
    %v4157 = vpack.c.b16 %v4143, %v4142
    %v4158 = vpack.c.b16 %v4145, %v4144
    %v4159 = vpack.c.b16 %v4147, %v4146
    %v4160 = vpack.c.b16 %v4149, %v4148
    %v4161 = vpack.c.b16 %v4151, %v4150
    %v4162 = vpack.c.b16 %v4153, %v4152
    %v4163 = vpack.c.b16 %v4155, %v4154
    %4172 = vmatprep.subr.bf16.mxu0 0
    %4173 = vmatpush1.bf16.msra.mxu0 %v4163
    %4174 = vmatprep.subr.bf16.mxu0 0
    %4175 = vmatpush1.bf16.msra.mxu0 %v4162
    %4176 = vmatprep.subr.bf16.mxu0 0
    %4177 = vmatpush1.bf16.msra.mxu0 %v4161
    %4178 = vmatprep.subr.bf16.mxu0 0
    %4179 = vmatpush1.bf16.msra.mxu0 %v4160
    %4180 = vmatprep.subr.bf16.mxu0 0
    %4181 = vmatpush1.bf16.msra.mxu0 %v4159
    %4182 = vmatprep.subr.bf16.mxu0 0
    %4183 = vmatpush1.bf16.msra.mxu0 %v4158
    %4184 = vmatprep.subr.bf16.mxu0 0
    %4185 = vmatpush1.bf16.msra.mxu0 %v4157
    %4186 = vmatprep.subr.bf16.mxu0 0
    %4187 = vmatpush1.bf16.msra.mxu0 %v4156
    %4188 = vmatprep.subr.bf16.mxu0 0
    %4189 = vmatpush2.bf16.msra.mxu0 0
    %4190 = vmatprep.subr.bf16.mxu0 0
    %4191 = vmatpush2.bf16.msra.mxu0 0
    %4192 = vmatprep.subr.bf16.mxu0 0
    %4193 = vmatpush2.bf16.msra.mxu0 0
    %4194 = vmatprep.subr.bf16.mxu0 0
    %4195 = vmatpush2.bf16.msra.mxu0 0
    %4196 = vmatprep.subr.bf16.mxu0 0
    %4197 = vmatpush2.bf16.msra.mxu0 0
    %4198 = vmatprep.subr.bf16.mxu0 0
    %4199 = vmatpush2.bf16.msra.mxu0 0
    %4200 = vmatprep.subr.bf16.mxu0 0
    %4201 = vmatpush2.bf16.msra.mxu0 0
    %4202 = vmatprep.subr.bf16.mxu0 0
    %4203 = vmatpush2.bf16.msra.mxu0 0
    %4204 = vmatprep.mubr.bf16.mxu0 0
    %4205 = vmatmul.mubr.bf16.gmra.mxu0 %v3522
    %v4206 = vpop.f32.mrf.mxu0
    %v4207 = vpop.f32.mrf.mxu0
    %v4208 = vpop.f32.mrf.mxu0
    %v4209 = vpop.f32.mrf.mxu0
    %4210 = vmatprep.mubr.bf16.mxu0 0
    %4211 = vmatmul.mubr.bf16.gmra.mxu0 %v3523
    %v4212 = vpop.f32.mrf.mxu0
    %v4213 = vadd.f32 0.0, %v4212
    %v4214 = vpop.f32.mrf.mxu0
    %v4215 = vpop.f32.mrf.mxu0
    %v4216 = vadd.f32 0.0, %v4215
    %v4217 = vpop.f32.mrf.mxu0
    %4218 = vmatprep.mubr.bf16.mxu0 0
    %4219 = vmatmul.mubr.bf16.gmra.mxu0 %v3524
    %v4220 = vpop.f32.mrf.mxu0
    %v4221 = vadd.f32 0.0, %v4220
    %v4222 = vpop.f32.mrf.mxu0
    %v4223 = vpop.f32.mrf.mxu0
    %v4224 = vadd.f32 0.0, %v4223
    %v4225 = vpop.f32.mrf.mxu0
    %4226 = vmatprep.mubr.bf16.mxu0 0
    %4227 = vmatmul.mubr.bf16.gmra.mxu0 %v3525
    %v4228 = vpop.f32.mrf.mxu0
    %v4229 = vadd.f32 0.0, %v4228
    %v4230 = vpop.f32.mrf.mxu0
    %v4231 = vpop.f32.mrf.mxu0
    %v4232 = vadd.f32 0.0, %v4231
    %v4233 = vpop.f32.mrf.mxu0
    %4234 = vmatprep.mubr.bf16.mxu0 0
    %4235 = vmatmul.mubr.bf16.gmra.mxu0 %v3526
    %v4236 = vpop.f32.mrf.mxu0
    %v4237 = vadd.f32 0.0, %v4236
    %v4238 = vpop.f32.mrf.mxu0
    %v4239 = vpop.f32.mrf.mxu0
    %v4240 = vadd.f32 0.0, %v4239
    %v4241 = vpop.f32.mrf.mxu0
    %4242 = vmatprep.mubr.bf16.mxu0 0
    %4243 = vmatmul.mubr.bf16.gmra.mxu0 %v3527
    %v4244 = vpop.f32.mrf.mxu0
    %v4245 = vadd.f32 0.0, %v4244
    %v4246 = vpop.f32.mrf.mxu0
    %v4247 = vpop.f32.mrf.mxu0
    %v4248 = vadd.f32 0.0, %v4247
    %v4249 = vpop.f32.mrf.mxu0
    %4250 = vmatprep.mubr.bf16.mxu0 0
    %4251 = vmatmul.mubr.bf16.gmra.mxu0 %v3528
    %v4252 = vpop.f32.mrf.mxu0
    %v4253 = vadd.f32 0.0, %v4252
    %v4254 = vpop.f32.mrf.mxu0
    %v4255 = vpop.f32.mrf.mxu0
    %v4256 = vadd.f32 0.0, %v4255
    %v4257 = vpop.f32.mrf.mxu0
    %4258 = vmatprep.mubr.bf16.mxu0 0
    %4259 = vmatmul.mubr.bf16.gmra.mxu0 %v3529
    %v4260 = vpop.f32.mrf.mxu0
    %v4261 = vadd.f32 0.0, %v4260
    %v4262 = vpop.f32.mrf.mxu0
    %v4263 = vpop.f32.mrf.mxu0
    %v4264 = vadd.f32 0.0, %v4263
    %v4265 = vpop.f32.mrf.mxu0
    %4266 = vmatprep.mubr.bf16.mxu0 0
    %4267 = vmatmul.mubr.bf16.gmra.mxu0 %v3530
    %v4268 = vpop.f32.mrf.mxu0
    %v4269 = vadd.f32 0.0, %v4268
    %v4270 = vpop.f32.mrf.mxu0
    %v4271 = vpop.f32.mrf.mxu0
    %v4272 = vadd.f32 0.0, %v4271
    %v4273 = vpop.f32.mrf.mxu0
    %4274 = vmatprep.mubr.bf16.mxu0 0
    %4275 = vmatmul.mubr.bf16.gmra.mxu0 %v3531
    %v4276 = vpop.f32.mrf.mxu0
    %v4277 = vadd.f32 0.0, %v4276
    %v4278 = vpop.f32.mrf.mxu0
    %v4279 = vpop.f32.mrf.mxu0
    %v4280 = vadd.f32 0.0, %v4279
    %v4281 = vpop.f32.mrf.mxu0
    %4282 = vmatprep.mubr.bf16.mxu0 0
    %4283 = vmatmul.mubr.bf16.gmra.mxu0 %v3532
    %v4284 = vpop.f32.mrf.mxu0
    %v4285 = vadd.f32 0.0, %v4284
    %v4286 = vpop.f32.mrf.mxu0
    %v4287 = vpop.f32.mrf.mxu0
    %v4288 = vadd.f32 0.0, %v4287
    %v4289 = vpop.f32.mrf.mxu0
    %4290 = vmatprep.mubr.bf16.mxu0 0
    %4291 = vmatmul.mubr.bf16.gmra.mxu0 %v3533
    %v4292 = vpop.f32.mrf.mxu0
    %v4293 = vadd.f32 0.0, %v4292
    %v4294 = vpop.f32.mrf.mxu0
    %v4295 = vpop.f32.mrf.mxu0
    %v4296 = vadd.f32 0.0, %v4295
    %v4297 = vpop.f32.mrf.mxu0
    %4298 = vmatprep.mubr.bf16.mxu0 0
    %4299 = vmatmul.mubr.bf16.gmra.mxu0 %v3534
    %v4300 = vpop.f32.mrf.mxu0
    %v4301 = vadd.f32 0.0, %v4300
    %v4302 = vpop.f32.mrf.mxu0
    %v4303 = vpop.f32.mrf.mxu0
    %v4304 = vadd.f32 0.0, %v4303
    %v4305 = vpop.f32.mrf.mxu0
    %4306 = vmatprep.mubr.bf16.mxu0 0
    %4307 = vmatmul.mubr.bf16.gmra.mxu0 %v3535
    %v4308 = vpop.f32.mrf.mxu0
    %v4309 = vadd.f32 0.0, %v4308
    %v4310 = vpop.f32.mrf.mxu0
    %v4311 = vpop.f32.mrf.mxu0
    %v4312 = vadd.f32 0.0, %v4311
    %v4313 = vpop.f32.mrf.mxu0
    %4314 = vmatprep.mubr.bf16.mxu0 0
    %4315 = vmatmul.mubr.bf16.gmra.mxu0 %v3536
    %v4316 = vpop.f32.mrf.mxu0
    %v4317 = vadd.f32 0.0, %v4316
    %v4318 = vpop.f32.mrf.mxu0
    %v4319 = vpop.f32.mrf.mxu0
    %v4320 = vadd.f32 0.0, %v4319
    %v4321 = vpop.f32.mrf.mxu0
    %4322 = vmatprep.mubr.bf16.mxu0 0
    %4323 = vmatmul.mubr.bf16.gmra.mxu0 %v3537
    %v4324 = vpop.f32.mrf.mxu0
    %v4325 = vadd.f32 0.0, %v4324
    %v4326 = vpop.f32.mrf.mxu0
    %v4327 = vpop.f32.mrf.mxu0
    %v4328 = vadd.f32 0.0, %v4327
    %v4329 = vpop.f32.mrf.mxu0
    %4330 = vdwg.mxu0
    %v4331 = vld [vmem:[#allocation2] sm:$0xff]
    %v4332 = vld [vmem:[#allocation2 + $0x8] sm:$0xff]
    %v4333 = vld [vmem:[#allocation2 + $0x10] sm:$0xff]
    %v4334 = vld [vmem:[#allocation2 + $0x18] sm:$0xff]
    %v4335 = vld [vmem:[#allocation2 + $0x20] sm:$0xff]
    %v4336 = vld [vmem:[#allocation2 + $0x28] sm:$0xff]
    %v4337 = vld [vmem:[#allocation2 + $0x30] sm:$0xff]
    %v4338 = vld [vmem:[#allocation2 + $0x38] sm:$0xff]
    %v4339 = vld [vmem:[#allocation2 + $0x40] sm:$0xff]
    %v4340 = vld [vmem:[#allocation2 + $0x48] sm:$0xff]
    %v4341 = vld [vmem:[#allocation2 + $0x50] sm:$0xff]
    %v4342 = vld [vmem:[#allocation2 + $0x58] sm:$0xff]
    %v4343 = vld [vmem:[#allocation2 + $0x60] sm:$0xff]
    %v4344 = vld [vmem:[#allocation2 + $0x68] sm:$0xff]
    %v4345 = vld [vmem:[#allocation2 + $0x70] sm:$0xff]
    %v4346 = vld [vmem:[#allocation2 + $0x78] sm:$0xff]
    %v4347 = vld [vmem:[#allocation2 + $0x80] sm:$0xff]
    %v4348 = vld [vmem:[#allocation2 + $0x88] sm:$0xff]
    %v4349 = vld [vmem:[#allocation2 + $0x90] sm:$0xff]
    %v4350 = vld [vmem:[#allocation2 + $0x98] sm:$0xff]
    %v4351 = vld [vmem:[#allocation2 + $0xa0] sm:$0xff]
    %v4352 = vld [vmem:[#allocation2 + $0xa8] sm:$0xff]
    %v4353 = vld [vmem:[#allocation2 + $0xb0] sm:$0xff]
    %v4354 = vld [vmem:[#allocation2 + $0xb8] sm:$0xff]
    %v4355 = vld [vmem:[#allocation2 + $0xc0] sm:$0xff]
    %v4356 = vld [vmem:[#allocation2 + $0xc8] sm:$0xff]
    %v4357 = vld [vmem:[#allocation2 + $0xd0] sm:$0xff]
    %v4358 = vld [vmem:[#allocation2 + $0xd8] sm:$0xff]
    %v4359 = vld [vmem:[#allocation2 + $0xe0] sm:$0xff]
    %v4360 = vld [vmem:[#allocation2 + $0xe8] sm:$0xff]
    %v4361 = vadd.f32 %v4331, %v4213
    %v4362 = vadd.f32 %v4332, %v4216
    %v4363 = vadd.f32 %v4333, %v4221
    %v4364 = vadd.f32 %v4334, %v4224
    %v4365 = vadd.f32 %v4335, %v4229
    %v4366 = vadd.f32 %v4336, %v4232
    %v4367 = vadd.f32 %v4337, %v4237
    %v4368 = vadd.f32 %v4338, %v4240
    %v4369 = vadd.f32 %v4339, %v4245
    %v4370 = vadd.f32 %v4340, %v4248
    %v4371 = vadd.f32 %v4341, %v4253
    %v4372 = vadd.f32 %v4342, %v4256
    %v4373 = vadd.f32 %v4343, %v4261
    %v4374 = vadd.f32 %v4344, %v4264
    %v4375 = vadd.f32 %v4345, %v4269
    %v4376 = vadd.f32 %v4346, %v4272
    %v4377 = vadd.f32 %v4347, %v4277
    %v4378 = vadd.f32 %v4348, %v4280
    %v4379 = vadd.f32 %v4349, %v4285
    %v4380 = vadd.f32 %v4350, %v4288
    %v4381 = vadd.f32 %v4351, %v4293
    %v4382 = vadd.f32 %v4352, %v4296
    %v4383 = vadd.f32 %v4353, %v4301
    %v4384 = vadd.f32 %v4354, %v4304
    %v4385 = vadd.f32 %v4355, %v4309
    %v4386 = vadd.f32 %v4356, %v4312
    %v4387 = vadd.f32 %v4357, %v4317
    %v4388 = vadd.f32 %v4358, %v4320
    %v4389 = vadd.f32 %v4359, %v4325
    %v4390 = vadd.f32 %v4360, %v4328
    %4391 = vst [vmem:[#allocation2] sm:$0xff] %v4361
    %4392 = vst [vmem:[#allocation2 + $0x8] sm:$0xff] %v4362
    %4393 = vst [vmem:[#allocation2 + $0x10] sm:$0xff] %v4363
    %4394 = vst [vmem:[#allocation2 + $0x18] sm:$0xff] %v4364
    %4395 = vst [vmem:[#allocation2 + $0x20] sm:$0xff] %v4365
    %4396 = vst [vmem:[#allocation2 + $0x28] sm:$0xff] %v4366
    %4397 = vst [vmem:[#allocation2 + $0x30] sm:$0xff] %v4367
    %4398 = vst [vmem:[#allocation2 + $0x38] sm:$0xff] %v4368
    %4399 = vst [vmem:[#allocation2 + $0x40] sm:$0xff] %v4369
    %4400 = vst [vmem:[#allocation2 + $0x48] sm:$0xff] %v4370
    %4401 = vst [vmem:[#allocation2 + $0x50] sm:$0xff] %v4371
    %4402 = vst [vmem:[#allocation2 + $0x58] sm:$0xff] %v4372
    %4403 = vst [vmem:[#allocation2 + $0x60] sm:$0xff] %v4373
    %4404 = vst [vmem:[#allocation2 + $0x68] sm:$0xff] %v4374
    %4405 = vst [vmem:[#allocation2 + $0x70] sm:$0xff] %v4375
    %4406 = vst [vmem:[#allocation2 + $0x78] sm:$0xff] %v4376
    %4407 = vst [vmem:[#allocation2 + $0x80] sm:$0xff] %v4377
    %4408 = vst [vmem:[#allocation2 + $0x88] sm:$0xff] %v4378
    %4409 = vst [vmem:[#allocation2 + $0x90] sm:$0xff] %v4379
    %4410 = vst [vmem:[#allocation2 + $0x98] sm:$0xff] %v4380
    %4411 = vst [vmem:[#allocation2 + $0xa0] sm:$0xff] %v4381
    %4412 = vst [vmem:[#allocation2 + $0xa8] sm:$0xff] %v4382
    %4413 = vst [vmem:[#allocation2 + $0xb0] sm:$0xff] %v4383
    %4414 = vst [vmem:[#allocation2 + $0xb8] sm:$0xff] %v4384
    %4415 = vst [vmem:[#allocation2 + $0xc0] sm:$0xff] %v4385
    %4416 = vst [vmem:[#allocation2 + $0xc8] sm:$0xff] %v4386
    %4417 = vst [vmem:[#allocation2 + $0xd0] sm:$0xff] %v4387
    %4418 = vst [vmem:[#allocation2 + $0xd8] sm:$0xff] %v4388
    %4419 = vst [vmem:[#allocation2 + $0xe0] sm:$0xff] %v4389
    %4420 = vst [vmem:[#allocation2 + $0xe8] sm:$0xff] %v4390
    %v4421 = vld [vmem:[#allocation2] sm:$0xff]
    %v4422 = vld [vmem:[#allocation2 + $0x8] sm:$0xff]
    %v4423 = vld [vmem:[#allocation2 + $0x10] sm:$0xff]
    %v4424 = vld [vmem:[#allocation2 + $0x18] sm:$0xff]
    %v4425 = vld [vmem:[#allocation2 + $0x20] sm:$0xff]
    %v4426 = vld [vmem:[#allocation2 + $0x28] sm:$0xff]
    %v4427 = vld [vmem:[#allocation2 + $0x30] sm:$0xff]
    %v4428 = vld [vmem:[#allocation2 + $0x38] sm:$0xff]
    %v4429 = vld [vmem:[#allocation2 + $0x40] sm:$0xff]
    %v4430 = vld [vmem:[#allocation2 + $0x48] sm:$0xff]
    %v4431 = vld [vmem:[#allocation2 + $0x50] sm:$0xff]
    %v4432 = vld [vmem:[#allocation2 + $0x58] sm:$0xff]
    %v4433 = vld [vmem:[#allocation2 + $0x60] sm:$0xff]
    %v4434 = vld [vmem:[#allocation2 + $0x68] sm:$0xff]
    %v4435 = vld [vmem:[#allocation2 + $0x70] sm:$0xff]
    %v4436 = vld [vmem:[#allocation2 + $0x78] sm:$0xff]
    %v4437 = vld [vmem:[#allocation2 + $0x80] sm:$0xff]
    %v4438 = vld [vmem:[#allocation2 + $0x88] sm:$0xff]
    %v4439 = vld [vmem:[#allocation2 + $0x90] sm:$0xff]
    %v4440 = vld [vmem:[#allocation2 + $0x98] sm:$0xff]
    %v4441 = vld [vmem:[#allocation2 + $0xa0] sm:$0xff]
    %v4442 = vld [vmem:[#allocation2 + $0xa8] sm:$0xff]
    %v4443 = vld [vmem:[#allocation2 + $0xb0] sm:$0xff]
    %v4444 = vld [vmem:[#allocation2 + $0xb8] sm:$0xff]
    %v4445 = vld [vmem:[#allocation2 + $0xc0] sm:$0xff]
    %v4446 = vld [vmem:[#allocation2 + $0xc8] sm:$0xff]
    %v4447 = vld [vmem:[#allocation2 + $0xd0] sm:$0xff]
    %v4448 = vld [vmem:[#allocation2 + $0xd8] sm:$0xff]
    %v4449 = vld [vmem:[#allocation2 + $0xe0] sm:$0xff]
    %v4450 = vld [vmem:[#allocation2 + $0xe8] sm:$0xff]
    %v4451 = vld [vmem:[#allocation2 + $0xf0] sm:$0xff]
    %v4452 = vld [vmem:[#allocation2 + $0xf8] sm:$0xff]
    %v4453 = vld [vmem:[%s4] sm:$0x1]
    %v4455 = vlaneseq
    %v4456 = vshrl.u32 %v4455, 7
    %v4457 = vsub.s32 0, %v4456
    %v4458 = vrot.slane %v4453, %v4457
    %v4460 = vadd.f32 %v4421, %v4458
    %v4461 = vadd.f32 %v4422, %v4458
    %v4462 = vadd.f32 %v4423, %v4458
    %v4463 = vadd.f32 %v4424, %v4458
    %v4464 = vadd.f32 %v4425, %v4458
    %v4465 = vadd.f32 %v4426, %v4458
    %v4466 = vadd.f32 %v4427, %v4458
    %v4467 = vadd.f32 %v4428, %v4458
    %v4468 = vadd.f32 %v4429, %v4458
    %v4469 = vadd.f32 %v4430, %v4458
    %v4470 = vadd.f32 %v4431, %v4458
    %v4471 = vadd.f32 %v4432, %v4458
    %v4472 = vadd.f32 %v4433, %v4458
    %v4473 = vadd.f32 %v4434, %v4458
    %v4474 = vadd.f32 %v4435, %v4458
    %v4475 = vadd.f32 %v4436, %v4458
    %v4476 = vadd.f32 %v4437, %v4458
    %v4477 = vadd.f32 %v4438, %v4458
    %v4478 = vadd.f32 %v4439, %v4458
    %v4479 = vadd.f32 %v4440, %v4458
    %v4480 = vadd.f32 %v4441, %v4458
    %v4481 = vadd.f32 %v4442, %v4458
    %v4482 = vadd.f32 %v4443, %v4458
    %v4483 = vadd.f32 %v4444, %v4458
    %v4484 = vadd.f32 %v4445, %v4458
    %v4485 = vadd.f32 %v4446, %v4458
    %v4486 = vadd.f32 %v4447, %v4458
    %v4487 = vadd.f32 %v4448, %v4458
    %v4488 = vadd.f32 %v4449, %v4458
    %v4489 = vadd.f32 %v4450, %v4458
    %v4490 = vadd.f32 %v4451, %v4458
    %v4491 = vadd.f32 %v4452, %v4458
    %v4492 = vunpack.c.l.bf16 %v2408
    %v4493 = vunpack.c.l.bf16 %v2409
    %v4494 = vunpack.c.l.bf16 %v2410
    %v4495 = vunpack.c.l.bf16 %v2411
    %v4496 = vunpack.c.l.bf16 %v2412
    %v4497 = vunpack.c.l.bf16 %v2413
    %v4498 = vunpack.c.l.bf16 %v2414
    %v4499 = vunpack.c.l.bf16 %v2415
    %v4500 = vunpack.c.l.bf16 %v2416
    %v4501 = vunpack.c.l.bf16 %v2417
    %v4502 = vunpack.c.l.bf16 %v2418
    %v4503 = vunpack.c.l.bf16 %v2419
    %v4504 = vunpack.c.l.bf16 %v2420
    %v4505 = vunpack.c.l.bf16 %v2421
    %v4506 = vunpack.c.l.bf16 %v2422
    %v4507 = vunpack.c.l.bf16 %v2423
    %v4508 = vunpack.c.l.bf16 %v2424
    %v4509 = vunpack.c.l.bf16 %v2425
    %v4510 = vunpack.c.l.bf16 %v2426
    %v4511 = vunpack.c.l.bf16 %v2427
    %v4512 = vunpack.c.l.bf16 %v2428
    %v4513 = vunpack.c.l.bf16 %v2429
    %v4514 = vunpack.c.l.bf16 %v2430
    %v4515 = vunpack.c.l.bf16 %v2431
    %v4516 = vunpack.c.l.bf16 %v2432
    %v4517 = vunpack.c.l.bf16 %v2433
    %v4518 = vunpack.c.l.bf16 %v2434
    %v4519 = vunpack.c.l.bf16 %v2435
    %v4520 = vunpack.c.l.bf16 %v2436
    %v4521 = vunpack.c.l.bf16 %v2437
    %v4522 = vunpack.c.l.bf16 %v2438
    %v4523 = vunpack.c.l.bf16 %v2439
    %v4524 = vadd.f32 %v4460, %v4492
    %v4525 = vadd.f32 %v4461, %v4493
    %v4526 = vadd.f32 %v4462, %v4494
    %v4527 = vadd.f32 %v4463, %v4495
    %v4528 = vadd.f32 %v4464, %v4496
    %v4529 = vadd.f32 %v4465, %v4497
    %v4530 = vadd.f32 %v4466, %v4498
    %v4531 = vadd.f32 %v4467, %v4499
    %v4532 = vadd.f32 %v4468, %v4500
    %v4533 = vadd.f32 %v4469, %v4501
    %v4534 = vadd.f32 %v4470, %v4502
    %v4535 = vadd.f32 %v4471, %v4503
    %v4536 = vadd.f32 %v4472, %v4504
    %v4537 = vadd.f32 %v4473, %v4505
    %v4538 = vadd.f32 %v4474, %v4506
    %v4539 = vadd.f32 %v4475, %v4507
    %v4540 = vadd.f32 %v4476, %v4508
    %v4541 = vadd.f32 %v4477, %v4509
    %v4542 = vadd.f32 %v4478, %v4510
    %v4543 = vadd.f32 %v4479, %v4511
    %v4544 = vadd.f32 %v4480, %v4512
    %v4545 = vadd.f32 %v4481, %v4513
    %v4546 = vadd.f32 %v4482, %v4514
    %v4547 = vadd.f32 %v4483, %v4515
    %v4548 = vadd.f32 %v4484, %v4516
    %v4549 = vadd.f32 %v4485, %v4517
    %v4550 = vadd.f32 %v4486, %v4518
    %v4551 = vadd.f32 %v4487, %v4519
    %v4552 = vadd.f32 %v4488, %v4520
    %v4553 = vadd.f32 %v4489, %v4521
    %v4554 = vadd.f32 %v4490, %v4522
    %v4555 = vadd.f32 %v4491, %v4523
    %v4556 = vmax.f32 %v4524, 0.0
    %v4557 = vmax.f32 %v4525, 0.0
    %v4558 = vmax.f32 %v4526, 0.0
    %v4559 = vmax.f32 %v4527, 0.0
    %v4560 = vmax.f32 %v4528, 0.0
    %v4561 = vmax.f32 %v4529, 0.0
    %v4562 = vmax.f32 %v4530, 0.0
    %v4563 = vmax.f32 %v4531, 0.0
    %v4564 = vmax.f32 %v4532, 0.0
    %v4565 = vmax.f32 %v4533, 0.0
    %v4566 = vmax.f32 %v4534, 0.0
    %v4567 = vmax.f32 %v4535, 0.0
    %v4568 = vmax.f32 %v4536, 0.0
    %v4569 = vmax.f32 %v4537, 0.0
    %v4570 = vmax.f32 %v4538, 0.0
    %v4571 = vmax.f32 %v4539, 0.0
    %v4572 = vmax.f32 %v4540, 0.0
    %v4573 = vmax.f32 %v4541, 0.0
    %v4574 = vmax.f32 %v4542, 0.0
    %v4575 = vmax.f32 %v4543, 0.0
    %v4576 = vmax.f32 %v4544, 0.0
    %v4577 = vmax.f32 %v4545, 0.0
    %v4578 = vmax.f32 %v4546, 0.0
    %v4579 = vmax.f32 %v4547, 0.0
    %v4580 = vmax.f32 %v4548, 0.0
    %v4581 = vmax.f32 %v4549, 0.0
    %v4582 = vmax.f32 %v4550, 0.0
    %v4583 = vmax.f32 %v4551, 0.0
    %v4584 = vmax.f32 %v4552, 0.0
    %v4585 = vmax.f32 %v4553, 0.0
    %v4586 = vmax.f32 %v4554, 0.0
    %v4587 = vmax.f32 %v4555, 0.0
    %v4588 = vpack.c.bf16 %v4557, %v4556
    %v4589 = vpack.c.bf16 %v4559, %v4558
    %v4590 = vpack.c.bf16 %v4561, %v4560
    %v4591 = vpack.c.bf16 %v4563, %v4562
    %v4592 = vpack.c.bf16 %v4565, %v4564
    %v4593 = vpack.c.bf16 %v4567, %v4566
    %v4594 = vpack.c.bf16 %v4569, %v4568
    %v4595 = vpack.c.bf16 %v4571, %v4570
    %v4596 = vpack.c.bf16 %v4573, %v4572
    %v4597 = vpack.c.bf16 %v4575, %v4574
    %v4598 = vpack.c.bf16 %v4577, %v4576
    %v4599 = vpack.c.bf16 %v4579, %v4578
    %v4600 = vpack.c.bf16 %v4581, %v4580
    %v4601 = vpack.c.bf16 %v4583, %v4582
    %v4602 = vpack.c.bf16 %v4585, %v4584
    %v4603 = vpack.c.bf16 %v4587, %v4586
    %v4620 = vunpack.c.l.b16 %v4588
    %v4621 = vunpack.c.h.b16 %v4588
    %v4622 = vunpack.c.l.b16 %v4589
    %v4623 = vunpack.c.h.b16 %v4589
    %v4624 = vunpack.c.l.b16 %v4590
    %v4625 = vunpack.c.h.b16 %v4590
    %v4626 = vunpack.c.l.b16 %v4591
    %v4627 = vunpack.c.h.b16 %v4591
    %v4628 = vunpack.c.l.b16 %v4592
    %v4629 = vunpack.c.h.b16 %v4592
    %v4630 = vunpack.c.l.b16 %v4593
    %v4631 = vunpack.c.h.b16 %v4593
    %v4632 = vunpack.c.l.b16 %v4594
    %v4633 = vunpack.c.h.b16 %v4594
    %v4634 = vunpack.c.l.b16 %v4595
    %v4635 = vunpack.c.h.b16 %v4595
    %v4636 = vunpack.c.l.b16 %v4596
    %v4637 = vunpack.c.h.b16 %v4596
    %v4638 = vunpack.c.l.b16 %v4597
    %v4639 = vunpack.c.h.b16 %v4597
    %v4640 = vunpack.c.l.b16 %v4598
    %v4641 = vunpack.c.h.b16 %v4598
    %v4642 = vunpack.c.l.b16 %v4599
    %v4643 = vunpack.c.h.b16 %v4599
    %v4644 = vunpack.c.l.b16 %v4600
    %v4645 = vunpack.c.h.b16 %v4600
    %v4646 = vunpack.c.l.b16 %v4601
    %v4647 = vunpack.c.h.b16 %v4601
    %v4648 = vunpack.c.l.b16 %v4602
    %v4649 = vunpack.c.h.b16 %v4602
    %v4650 = vunpack.c.l.b16 %v4603
    %v4651 = vunpack.c.h.b16 %v4603
    %v4652 = vpack.c.b16 %v4620, %v4620
    %v4653 = vpack.c.b16 %v4621, %v4621
    %v4654 = vpack.c.b16 %v4622, %v4622
    %v4655 = vpack.c.b16 %v4623, %v4623
    %v4656 = vpack.c.b16 %v4624, %v4624
    %v4657 = vpack.c.b16 %v4625, %v4625
    %v4658 = vpack.c.b16 %v4626, %v4626
    %v4659 = vpack.c.b16 %v4627, %v4627
    %v4660 = vpack.c.b16 %v4628, %v4628
    %v4661 = vpack.c.b16 %v4629, %v4629
    %v4662 = vpack.c.b16 %v4630, %v4630
    %v4663 = vpack.c.b16 %v4631, %v4631
    %v4664 = vpack.c.b16 %v4632, %v4632
    %v4665 = vpack.c.b16 %v4633, %v4633
    %v4666 = vpack.c.b16 %v4634, %v4634
    %v4667 = vpack.c.b16 %v4635, %v4635
    %v4668 = vpack.c.b16 %v4636, %v4636
    %v4669 = vpack.c.b16 %v4637, %v4637
    %v4670 = vpack.c.b16 %v4638, %v4638
    %v4671 = vpack.c.b16 %v4639, %v4639
    %v4672 = vpack.c.b16 %v4640, %v4640
    %v4673 = vpack.c.b16 %v4641, %v4641
    %v4674 = vpack.c.b16 %v4642, %v4642
    %v4675 = vpack.c.b16 %v4643, %v4643
    %v4676 = vpack.c.b16 %v4644, %v4644
    %v4677 = vpack.c.b16 %v4645, %v4645
    %v4678 = vpack.c.b16 %v4646, %v4646
    %v4679 = vpack.c.b16 %v4647, %v4647
    %v4680 = vpack.c.b16 %v4648, %v4648
    %v4681 = vpack.c.b16 %v4649, %v4649
    %v4682 = vpack.c.b16 %v4650, %v4650
    %v4683 = vpack.c.b16 %v4651, %v4651
    %s4716 = scalar_lea.vmem [#allocation9], 128
    %4717 = vst [vmem:[%s4716] sm:$0xf] %v4652
    %4718 = vst [vmem:[%s4716 + $0x4] sm:$0xf] %v4653
    %4719 = vst [vmem:[%s4716 + $0x8] sm:$0xf] %v4654
    %4720 = vst [vmem:[%s4716 + $0xc] sm:$0xf] %v4655
    %4721 = vst [vmem:[%s4716 + $0x10] sm:$0xf] %v4656
    %4722 = vst [vmem:[%s4716 + $0x14] sm:$0xf] %v4657
    %4723 = vst [vmem:[%s4716 + $0x18] sm:$0xf] %v4658
    %4724 = vst [vmem:[%s4716 + $0x1c] sm:$0xf] %v4659
    %4725 = vst [vmem:[%s4716 + $0x20] sm:$0xf] %v4660
    %4726 = vst [vmem:[%s4716 + $0x24] sm:$0xf] %v4661
    %4727 = vst [vmem:[%s4716 + $0x28] sm:$0xf] %v4662
    %4728 = vst [vmem:[%s4716 + $0x2c] sm:$0xf] %v4663
    %4729 = vst [vmem:[%s4716 + $0x30] sm:$0xf] %v4664
    %4730 = vst [vmem:[%s4716 + $0x34] sm:$0xf] %v4665
    %4731 = vst [vmem:[%s4716 + $0x38] sm:$0xf] %v4666
    %4732 = vst [vmem:[%s4716 + $0x3c] sm:$0xf] %v4667
    %4733 = vst [vmem:[%s4716 + $0x40] sm:$0xf] %v4668
    %4734 = vst [vmem:[%s4716 + $0x44] sm:$0xf] %v4669
    %4735 = vst [vmem:[%s4716 + $0x48] sm:$0xf] %v4670
    %4736 = vst [vmem:[%s4716 + $0x4c] sm:$0xf] %v4671
    %4737 = vst [vmem:[%s4716 + $0x50] sm:$0xf] %v4672
    %4738 = vst [vmem:[%s4716 + $0x54] sm:$0xf] %v4673
    %4739 = vst [vmem:[%s4716 + $0x58] sm:$0xf] %v4674
    %4740 = vst [vmem:[%s4716 + $0x5c] sm:$0xf] %v4675
    %4741 = vst [vmem:[%s4716 + $0x60] sm:$0xf] %v4676
    %4742 = vst [vmem:[%s4716 + $0x64] sm:$0xf] %v4677
    %4743 = vst [vmem:[%s4716 + $0x68] sm:$0xf] %v4678
    %4744 = vst [vmem:[%s4716 + $0x6c] sm:$0xf] %v4679
    %4745 = vst [vmem:[%s4716 + $0x70] sm:$0xf] %v4680
    %4746 = vst [vmem:[%s4716 + $0x74] sm:$0xf] %v4681
    %4747 = vst [vmem:[%s4716 + $0x78] sm:$0xf] %v4682
    %4748 = vst [vmem:[%s4716 + $0x7c] sm:$0xf] %v4683
    // Predicated region
    $region34: #{tpu_custom_call.1} parent=1 // pred_check
      _
    $region35: #{tpu_custom_call.1} parent=1 // pred_check_branch
      %4750 = sbr.rel (0) target = $region37
    $region36: #{tpu_custom_call.1} parent=1 // pred_region
      %s4752 = ssub.s32 4096, 4096
      %4753 = vsyncadd [#allocation5], %s4752
      %s4754 = sshll.u32 [#allocation9], 4
      %s4755 = int_to_ptr.vmem [resolvable:$true] %s4754
      %4760 = dma.vmem_to_hbm [thread:$0]  %s4755, 4096, %s5, [#allocation5], 64, 64, 4
    $region37: #{tpu_custom_call.1} parent=1 // pred_fallthru
      _
    // Predicated region
    $region38: #{tpu_custom_call.1} parent=1 // pred_check
      _
    $region39: #{tpu_custom_call.1} parent=1 // pred_check_branch
      %4762 = sbr.rel (0) target = $region41
    $region40: #{tpu_custom_call.1} parent=1 // pred_region
      %4763 = dma.done [#allocation5], 4096
    $region41: #{tpu_custom_call.1} parent=1 // pred_fallthru
      _
    %4764 = vsyncpa [#allocation4], 1
    %4765 = vsyncpa [#allocation7], 1
    %4766 = vsyncpa [#allocation5], 1

</llo_original>
